<compile_context>
chip_gen: v7x
topology: tpu7x:2x2x1
jax: 0.10.0
libtpu: 0.0.40
codegen_flags: <defaults>
</compile_context>

<pallas_src>
import functools

import jax
import jax.numpy as jnp
from jax.experimental import pallas as pl
from jax.experimental.pallas import tpu as pltpu

# ----------------------------- config (small) -----------------------------
CFG = dict(
    vocab=256,
    hidden=64,
    layers=2,
    heads=4,
    kv_heads=2,
    head_dim=16,
    inter=128,
    eps=1e-6,
)


# ----------------------------- kernel helpers -----------------------------
def _rms(x, w, eps):
    # Gemma RMSNorm in f32: x * rsqrt(mean(x^2)+eps) * (1 + w)
    var = jnp.mean(x * x, axis=-1, keepdims=True)
    return x * jax.lax.rsqrt(var + eps) * (1.0 + w.astype(jnp.float32))


def _dot_nt(a, b):
    # A (m, d) · B (n, d)^T -> (m, n), contraction on the last dim of both
    # (native MXU "NT" matmul, no explicit transpose materialized).
    return jax.lax.dot_general(
        a, b, dimension_numbers=(((1,), (1,)), ((), ())),
        preferred_element_type=jnp.float32)


def _layer_body(x, pmask, cos, sin, w_in, wqkv, qw, kw, wo,
                w_pa, w_pf, wgu, wd, w_pm, *, eps, scale, nH, nKV, Dh):
    """One Gemma3 decoder layer on a single (S, H) f32 sequence."""
    S, H = x.shape
    group = nH // nKV
    qdim = nH * Dh
    kvdim = nKV * Dh
    half = Dh // 2

    # --- input RMSNorm + fused Q|K|V projection (bf16 MXU, f32 acc) ---
    xn = _rms(x, w_in, eps).astype(jnp.bfloat16)
    qkv = jnp.dot(xn, wqkv, preferred_element_type=jnp.float32)  # (S, qkv_dim) f32

    # --- causal + padding mask built in-kernel (pmask is (1, S) over keys) ---
    rows = jax.lax.broadcasted_iota(jnp.int32, (S, S), 0)
    cols = jax.lax.broadcasted_iota(jnp.int32, (S, S), 1)
    mask = (cols <= rows) & (pmask > 0)                          # (S, S)

    cosf = cos.astype(jnp.float32)
    sinf = sin.astype(jnp.float32)

    def head_norm_rope(z, wnorm, extra_scale):
        # Gemma3 per-head RMSNorm, then rotate_half RoPE on the two halves,
        # re-concatenated so the score matmul contracts over the full Dh.
        zn = _rms(z, wnorm, eps) * extra_scale
        z1, z2 = zn[:, :half], zn[:, half:]
        return jnp.concatenate(
            [z1 * cosf - z2 * sinf, z2 * cosf + z1 * sinf], axis=-1)

    # --- GQA attention: per-kv-head static loop, no materialized expansion ---
    # TODO(synk): query_pre_attn_scalar, local/global sliding-window layers and
    # dual RoPE thetas of Gemma3 are collapsed to head_dim**-0.5 and one theta.
    outs = []
    for g in range(nKV):
        k_g = qkv[:, qdim + g * Dh: qdim + (g + 1) * Dh]             # (S, Dh)
        v_g = qkv[:, qdim + kvdim + g * Dh: qdim + kvdim + (g + 1) * Dh]
        k_rot = head_norm_rope(k_g, kw, 1.0).astype(jnp.bfloat16)
        v_b = v_g.astype(jnp.bfloat16)
        for hq in range(group):
            h = g * group + hq
            q_h = qkv[:, h * Dh: (h + 1) * Dh]                       # (S, Dh)
            q_rot = head_norm_rope(q_h, qw, scale).astype(jnp.bfloat16)
            s = _dot_nt(q_rot, k_rot)                                # (S, S) f32
            s = jnp.where(mask, s, jnp.float32(-1e30))
            m = jnp.max(s, axis=-1, keepdims=True)
            p = jnp.exp(s - m)
            p = p * pl.reciprocal(jnp.sum(p, axis=-1, keepdims=True), approx=True)
            outs.append(jnp.dot(p.astype(jnp.bfloat16), v_b,
                                preferred_element_type=jnp.float32))  # (S, Dh)
    a = jnp.concatenate(outs, axis=-1).astype(jnp.bfloat16)           # (S, nH*Dh)

    # --- Wo projection + post-attention norm + residual ---
    h_attn = jnp.dot(a, wo, preferred_element_type=jnp.float32)       # (S, H)
    x = x + _rms(h_attn, w_pa, eps)

    # --- pre-FFN norm + fused GeGLU MLP + post-FFN norm + residual ---
    xn2 = _rms(x, w_pf, eps).astype(jnp.bfloat16)
    gu = jnp.dot(xn2, wgu, preferred_element_type=jnp.float32)        # (S, 2F)
    F = gu.shape[-1] // 2
    hmid = (jax.nn.gelu(gu[:, :F], approximate=True) * gu[:, F:]).astype(jnp.bfloat16)
    d = jnp.dot(hmid, wd, preferred_element_type=jnp.float32)         # (S, H)
    return x + _rms(d, w_pm, eps)


# ----------------------------- Pallas kernels -----------------------------
def _layer_kernel(x_ref, pmask_ref, cos_ref, sin_ref,
                  w_in_ref, wqkv_ref, qw_ref, kw_ref, wo_ref,
                  w_pa_ref, w_pf_ref, wgu_ref, wd_ref, w_pm_ref,
                  o_ref, *, eps, scale, nH, nKV, Dh):
    x = x_ref[0].astype(jnp.float32)                                  # (S, H)
    y = _layer_body(x, pmask_ref[0], cos_ref[...], sin_ref[...],
                    w_in_ref[...], wqkv_ref[...], qw_ref[...], kw_ref[...],
                    wo_ref[...], w_pa_ref[...], w_pf_ref[...], wgu_ref[...],
                    wd_ref[...], w_pm_ref[...],
                    eps=eps, scale=scale, nH=nH, nKV=nKV, Dh=Dh)
    o_ref[0] = y.astype(o_ref.dtype)


def _last_layer_kernel(x_ref, pmask_ref, cos_ref, sin_ref,
                       w_in_ref, wqkv_ref, qw_ref, kw_ref, wo_ref,
                       w_pa_ref, w_pf_ref, wgu_ref, wd_ref, w_pm_ref,
                       w_fn_ref, vh_ref, o_ref, *, eps, scale, nH, nKV, Dh):
    # Last decoder layer fused with the final RMSNorm + scalar value head;
    # output written lane-dense as a (1, S) row of values.
    x = x_ref[0].astype(jnp.float32)
    y = _layer_body(x, pmask_ref[0], cos_ref[...], sin_ref[...],
                    w_in_ref[...], wqkv_ref[...], qw_ref[...], kw_ref[...],
                    wo_ref[...], w_pa_ref[...], w_pf_ref[...], wgu_ref[...],
                    wd_ref[...], w_pm_ref[...],
                    eps=eps, scale=scale, nH=nH, nKV=nKV, Dh=Dh)
    yn = _rms(y, w_fn_ref[...], eps).astype(jnp.bfloat16)             # (S, H)
    vals = _dot_nt(vh_ref[...].astype(jnp.bfloat16), yn)              # (1, S) f32
    o_ref[0] = vals.astype(o_ref.dtype)


# ----------------------------- Pallas wrapper -----------------------------
def decoder_layer(x, pmask, cos, sin, lyr, *, eps, scale, nH, nKV, Dh,
                  last=False, final_norm=None, value_head=None):
    B, S, H = x.shape
    QKVD = lyr["wqkv"].shape[1]
    A = lyr["wo"].shape[0]
    F = lyr["wd"].shape[0]

    data_specs = [
        pl.BlockSpec((1, S, H), lambda b: (b, 0, 0)),        # x slab
        pl.BlockSpec((1, 1, S), lambda b: (b, 0, 0)),        # padding mask
        pl.BlockSpec((S, Dh // 2), lambda b: (0, 0)),        # cos (batch-invariant)
        pl.BlockSpec((S, Dh // 2), lambda b: (0, 0)),        # sin
    ]
    weight_specs = [
        pl.BlockSpec((1, H), lambda b: (0, 0)),              # in_norm
        pl.BlockSpec((H, QKVD), lambda b: (0, 0)),           # wqkv (fused Q|K|V)
        pl.BlockSpec((1, Dh), lambda b: (0, 0)),             # q_norm
        pl.BlockSpec((1, Dh), lambda b: (0, 0)),             # k_norm
        pl.BlockSpec((A, H), lambda b: (0, 0)),              # wo
        pl.BlockSpec((1, H), lambda b: (0, 0)),              # post_attn_norm
        pl.BlockSpec((1, H), lambda b: (0, 0)),              # pre_ffn_norm
        pl.BlockSpec((H, 2 * F), lambda b: (0, 0)),          # wgu (fused gate|up)
        pl.BlockSpec((F, H), lambda b: (0, 0)),              # wd
        pl.BlockSpec((1, H), lambda b: (0, 0)),              # post_ffn_norm
    ]
    args = [x, pmask, cos, sin,
            lyr["in_norm"], lyr["wqkv"], lyr["q_norm"], lyr["k_norm"], lyr["wo"],
            lyr["post_attn_norm"], lyr["pre_ffn_norm"], lyr["wgu"], lyr["wd"],
            lyr["post_ffn_norm"]]

    if last:
        kern = functools.partial(_last_layer_kernel, eps=eps, scale=scale,
                                 nH=nH, nKV=nKV, Dh=Dh)
        in_specs = data_specs + weight_specs + [
            pl.BlockSpec((1, H), lambda b: (0, 0)),          # final_norm
            pl.BlockSpec((1, H), lambda b: (0, 0)),          # value_head
        ]
        args = args + [final_norm, value_head]
        out_shape = jax.ShapeDtypeStruct((B, 1, S), jnp.float32)
        out_spec = pl.BlockSpec((1, 1, S), lambda b: (b, 0, 0))
    else:
        kern = functools.partial(_layer_kernel, eps=eps, scale=scale,
                                 nH=nH, nKV=nKV, Dh=Dh)
        in_specs = data_specs + weight_specs
        out_shape = jax.ShapeDtypeStruct((B, S, H), jnp.bfloat16)
        out_spec = pl.BlockSpec((1, S, H), lambda b: (b, 0, 0))

    return pl.pallas_call(
        kern,
        out_shape=out_shape,
        grid=(B,),
        in_specs=in_specs,
        out_specs=out_spec,
        compiler_params=pltpu.CompilerParams(dimension_semantics=("parallel",)),
    )(*args)


# ----------------------------- params / forward -----------------------------
def init_params(key, cfg):
    H, nH, nKV = cfg["hidden"], cfg["heads"], cfg["kv_heads"]
    Dh, F, V = cfg["head_dim"], cfg["inter"], cfg["vocab"]
    std = 0.02
    keys = iter(jax.random.split(key, 2 + 4 * cfg["layers"]))

    def w(k, shape):
        return (jax.random.normal(k, shape, jnp.float32) * std).astype(jnp.bfloat16)

    params = {"embed": w(next(keys), (V, H))}
    layers = []
    for _ in range(cfg["layers"]):
        layers.append(
            dict(
                in_norm=jnp.zeros((1, H), jnp.float32),
                # fused Q|K|V projection: (H, nH*Dh + 2*nKV*Dh) = (64, 128)
                wqkv=w(next(keys), (H, (nH + 2 * nKV) * Dh)),
                q_norm=jnp.zeros((1, Dh), jnp.float32),
                k_norm=jnp.zeros((1, Dh), jnp.float32),
                wo=w(next(keys), (nH * Dh, H)),
                post_attn_norm=jnp.zeros((1, H), jnp.float32),
                pre_ffn_norm=jnp.zeros((1, H), jnp.float32),
                # fused gate|up projection: (H, 2F) = (64, 256)
                wgu=w(next(keys), (H, 2 * F)),
                wd=w(next(keys), (F, H)),
                post_ffn_norm=jnp.zeros((1, H), jnp.float32),
            )
        )
    params["layers"] = layers
    params["final_norm"] = jnp.zeros((1, H), jnp.float32)
    params["value_head"] = jax.random.normal(next(keys), (1, H), jnp.float32) * std
    return params


def forward(params, input_ids, attention_mask, position_ids=None, cfg=CFG):
    B, S = input_ids.shape
    H, nH, nKV, Dh = cfg["hidden"], cfg["heads"], cfg["kv_heads"], cfg["head_dim"]
    eps = cfg["eps"]
    if position_ids is None:
        position_ids = jnp.arange(S, dtype=jnp.int32)
    # TODO(synk): rm-pad / packed-seq per-token position_ids (and per-batch RoPE
    # tables) are not supported in this padded single-device forward.

    # embedding gather + Gemma sqrt(hidden_size) normalizer (plain XLA gather)
    h = jnp.take(params["embed"].astype(jnp.float32), input_ids, axis=0)
    x = (h * jnp.sqrt(jnp.float32(H))).astype(jnp.bfloat16)           # (B, S, H)

    # batch-invariant half-width RoPE tables, hoisted out of the layer loop
    inv = 1.0 / (10000.0 ** (jnp.arange(0, Dh, 2, dtype=jnp.float32) / Dh))
    ang = position_ids.astype(jnp.float32)[:, None] * inv[None, :]    # (S, Dh//2)
    cos, sin = jnp.cos(ang), jnp.sin(ang)

    # only the (B,1,S) key-padding mask goes to the kernel; causal part is in-kernel
    pmask = attention_mask.astype(jnp.int32).reshape(B, 1, S)

    scale = Dh ** -0.5

    values = None
    nlayers = len(params["layers"])
    for li, lyr in enumerate(params["layers"]):
        if li == nlayers - 1:
            values = decoder_layer(x, pmask, cos, sin, lyr, eps=eps, scale=scale,
                                   nH=nH, nKV=nKV, Dh=Dh, last=True,
                                   final_norm=params["final_norm"],
                                   value_head=params["value_head"])   # (B, 1, S)
        else:
            x = decoder_layer(x, pmask, cos, sin, lyr, eps=eps, scale=scale,
                              nH=nH, nKV=nKV, Dh=Dh)                  # (B, S, H)
    return values.reshape(B, S)


# ----------------------------- driver -----------------------------
if __name__ == "__main__":
    root = jax.random.PRNGKey(0)
    k_params, k_ids = jax.random.split(root)

    params = init_params(k_params, CFG)

    B, S = 2, 8
    input_ids = jax.random.randint(k_ids, (B, S), 0, CFG["vocab"], dtype=jnp.int32)
    attention_mask = jnp.ones((B, S), dtype=jnp.int32)

    fwd = jax.jit(forward)
    values = fwd(params, input_ids, attention_mask)
    jax.block_until_ready(values)
    assert values.shape == (B, S)
    print("KERNEL_OK")
</pallas_src>

<mosaic_0001>
module attributes {stable_mosaic.version = 11 : i64} {
  func.func @_layer_kernel(%arg0: i32, %arg1: memref<1x8x64xbf16, #tpu.memory_space<vmem>>, %arg2: memref<1x1x8xi32, #tpu.memory_space<vmem>>, %arg3: memref<8x8xf32, #tpu.memory_space<vmem>>, %arg4: memref<8x8xf32, #tpu.memory_space<vmem>>, %arg5: memref<1x64xf32, #tpu.memory_space<vmem>>, %arg6: memref<64x128xbf16, #tpu.memory_space<vmem>>, %arg7: memref<1x16xf32, #tpu.memory_space<vmem>>, %arg8: memref<1x16xf32, #tpu.memory_space<vmem>>, %arg9: memref<64x64xbf16, #tpu.memory_space<vmem>>, %arg10: memref<1x64xf32, #tpu.memory_space<vmem>>, %arg11: memref<1x64xf32, #tpu.memory_space<vmem>>, %arg12: memref<64x256xbf16, #tpu.memory_space<vmem>>, %arg13: memref<128x64xbf16, #tpu.memory_space<vmem>>, %arg14: memref<1x64xf32, #tpu.memory_space<vmem>>, %arg15: memref<1x8x64xbf16, #tpu.memory_space<vmem>>) attributes {dimension_semantics = [#tpu.dimension_semantics<parallel>], iteration_bounds = array<i64: 2>, scalar_prefetch = 0 : i64, scratch_operands = 0 : i64, tpu.core_type = #tpu.core_type<tc>, window_params = [{transform_indices = @transform_0, window_bounds = array<i64: 1, 8, 64>}, {transform_indices = @transform_1, window_bounds = array<i64: 1, 1, 8>}, {pipeline_mode = #tpu.pipeline_mode<synchronous>, transform_indices = @transform_2, window_bounds = array<i64: 8, 8>}, {pipeline_mode = #tpu.pipeline_mode<synchronous>, transform_indices = @transform_3, window_bounds = array<i64: 8, 8>}, {pipeline_mode = #tpu.pipeline_mode<synchronous>, transform_indices = @transform_4, window_bounds = array<i64: 1, 64>}, {pipeline_mode = #tpu.pipeline_mode<synchronous>, transform_indices = @transform_5, window_bounds = array<i64: 64, 128>}, {pipeline_mode = #tpu.pipeline_mode<synchronous>, transform_indices = @transform_6, window_bounds = array<i64: 1, 16>}, {pipeline_mode = #tpu.pipeline_mode<synchronous>, transform_indices = @transform_7, window_bounds = array<i64: 1, 16>}, {pipeline_mode = #tpu.pipeline_mode<synchronous>, transform_indices = @transform_8, window_bounds = array<i64: 64, 64>}, {pipeline_mode = #tpu.pipeline_mode<synchronous>, transform_indices = @transform_9, window_bounds = array<i64: 1, 64>}, {pipeline_mode = #tpu.pipeline_mode<synchronous>, transform_indices = @transform_10, window_bounds = array<i64: 1, 64>}, {pipeline_mode = #tpu.pipeline_mode<synchronous>, transform_indices = @transform_11, window_bounds = array<i64: 64, 256>}, {pipeline_mode = #tpu.pipeline_mode<synchronous>, transform_indices = @transform_12, window_bounds = array<i64: 128, 64>}, {pipeline_mode = #tpu.pipeline_mode<synchronous>, transform_indices = @transform_13, window_bounds = array<i64: 1, 64>}, {transform_indices = @transform_14, window_bounds = array<i64: 1, 8, 64>}]} {
    %c0 = arith.constant 0 : index
    %c0_0 = arith.constant 0 : index
    %c0_1 = arith.constant 0 : index
    %0 = vector.load %arg1[%c0, %c0_0, %c0_1] : memref<1x8x64xbf16, #tpu.memory_space<vmem>>, vector<1x8x64xbf16>
    %1 = vector.shape_cast %0 : vector<1x8x64xbf16> to vector<8x64xbf16>
    %2 = arith.extf %1 : vector<8x64xbf16> to vector<8x64xf32>
    %c0_2 = arith.constant 0 : index
    %c0_3 = arith.constant 0 : index
    %c0_4 = arith.constant 0 : index
    %3 = vector.load %arg2[%c0_2, %c0_3, %c0_4] : memref<1x1x8xi32, #tpu.memory_space<vmem>>, vector<1x1x8xi32>
    %4 = vector.shape_cast %3 : vector<1x1x8xi32> to vector<1x8xi32>
    %c0_5 = arith.constant 0 : index
    %c0_6 = arith.constant 0 : index
    %5 = vector.load %arg3[%c0_5, %c0_6] : memref<8x8xf32, #tpu.memory_space<vmem>>, vector<8x8xf32>
    %c0_7 = arith.constant 0 : index
    %c0_8 = arith.constant 0 : index
    %6 = vector.load %arg4[%c0_7, %c0_8] : memref<8x8xf32, #tpu.memory_space<vmem>>, vector<8x8xf32>
    %c0_9 = arith.constant 0 : index
    %c0_10 = arith.constant 0 : index
    %7 = vector.load %arg5[%c0_9, %c0_10] : memref<1x64xf32, #tpu.memory_space<vmem>>, vector<1x64xf32>
    %c0_11 = arith.constant 0 : index
    %c0_12 = arith.constant 0 : index
    %8 = vector.load %arg6[%c0_11, %c0_12] : memref<64x128xbf16, #tpu.memory_space<vmem>>, vector<64x128xbf16>
    %c0_13 = arith.constant 0 : index
    %c0_14 = arith.constant 0 : index
    %9 = vector.load %arg7[%c0_13, %c0_14] : memref<1x16xf32, #tpu.memory_space<vmem>>, vector<1x16xf32>
    %c0_15 = arith.constant 0 : index
    %c0_16 = arith.constant 0 : index
    %10 = vector.load %arg8[%c0_15, %c0_16] : memref<1x16xf32, #tpu.memory_space<vmem>>, vector<1x16xf32>
    %c0_17 = arith.constant 0 : index
    %c0_18 = arith.constant 0 : index
    %11 = vector.load %arg9[%c0_17, %c0_18] : memref<64x64xbf16, #tpu.memory_space<vmem>>, vector<64x64xbf16>
    %c0_19 = arith.constant 0 : index
    %c0_20 = arith.constant 0 : index
    %12 = vector.load %arg10[%c0_19, %c0_20] : memref<1x64xf32, #tpu.memory_space<vmem>>, vector<1x64xf32>
    %c0_21 = arith.constant 0 : index
    %c0_22 = arith.constant 0 : index
    %13 = vector.load %arg11[%c0_21, %c0_22] : memref<1x64xf32, #tpu.memory_space<vmem>>, vector<1x64xf32>
    %c0_23 = arith.constant 0 : index
    %c0_24 = arith.constant 0 : index
    %14 = vector.load %arg12[%c0_23, %c0_24] : memref<64x256xbf16, #tpu.memory_space<vmem>>, vector<64x256xbf16>
    %c0_25 = arith.constant 0 : index
    %c0_26 = arith.constant 0 : index
    %15 = vector.load %arg13[%c0_25, %c0_26] : memref<128x64xbf16, #tpu.memory_space<vmem>>, vector<128x64xbf16>
    %c0_27 = arith.constant 0 : index
    %c0_28 = arith.constant 0 : index
    %16 = vector.load %arg14[%c0_27, %c0_28] : memref<1x64xf32, #tpu.memory_space<vmem>>, vector<1x64xf32>
    %17 = arith.mulf %2, %2 : vector<8x64xf32>
    %cst = arith.constant dense<0.000000e+00> : vector<8xf32>
    %18 = vector.multi_reduction <add>, %17, %cst [1] : vector<8x64xf32> to vector<8xf32>
    %19 = vector.shape_cast %18 : vector<8xf32> to vector<8x1xf32>
    %cst_29 = arith.constant 6.400000e+01 : f32
    %20 = vector.broadcast %cst_29 : f32 to vector<8x1xf32>
    %21 = arith.divf %19, %20 : vector<8x1xf32>
    %cst_30 = arith.constant 9.99999997E-7 : f32
    %22 = vector.broadcast %cst_30 : f32 to vector<8x1xf32>
    %23 = arith.addf %21, %22 : vector<8x1xf32>
    %24 = math.rsqrt %23 : vector<8x1xf32>
    %25 = vector.broadcast %24 : vector<8x1xf32> to vector<8x64xf32>
    %26 = arith.mulf %2, %25 : vector<8x64xf32>
    %cst_31 = arith.constant 1.000000e+00 : f32
    %27 = vector.broadcast %cst_31 : f32 to vector<1x64xf32>
    %28 = arith.addf %27, %7 : vector<1x64xf32>
    %29 = vector.broadcast %28 : vector<1x64xf32> to vector<8x64xf32>
    %30 = arith.mulf %26, %29 : vector<8x64xf32>
    %31 = arith.truncf %30 : vector<8x64xf32> to vector<8x64xbf16>
    %cst_32 = arith.constant dense<0.000000e+00> : vector<8x128xf32>
    %32 = tpu.matmul %31, %8, %cst_32 {dimension_numbers = #tpu.dot_dimension_numbers<[1], [0], [0], [1], [0, 0, 1, 1], [], []>} : vector<8x64xbf16>, vector<64x128xbf16>, vector<8x128xf32> -> vector<8x128xf32>
    %33 = tpu.iota {dimensions = array<i32: 0>} : vector<8x8xi32>
    %34 = tpu.iota {dimensions = array<i32: 1>} : vector<8x8xi32>
    %35 = arith.cmpi sle, %34, %33 : vector<8x8xi32>
    %c0_i32 = arith.constant 0 : i32
    %36 = vector.broadcast %c0_i32 : i32 to vector<1x8xi32>
    %37 = arith.cmpi sgt, %4, %36 : vector<1x8xi32>
    %38 = vector.broadcast %37 : vector<1x8xi1> to vector<8x8xi1>
    %39 = arith.andi %35, %38 : vector<8x8xi1>
    %40 = vector.extract_strided_slice %32 {offsets = [0, 64], sizes = [8, 16], strides = [1, 1]} : vector<8x128xf32> to vector<8x16xf32>
    %41 = vector.extract_strided_slice %32 {offsets = [0, 96], sizes = [8, 16], strides = [1, 1]} : vector<8x128xf32> to vector<8x16xf32>
    %42 = arith.mulf %40, %40 : vector<8x16xf32>
    %cst_33 = arith.constant dense<0.000000e+00> : vector<8xf32>
    %43 = vector.multi_reduction <add>, %42, %cst_33 [1] : vector<8x16xf32> to vector<8xf32>
    %44 = vector.shape_cast %43 : vector<8xf32> to vector<8x1xf32>
    %cst_34 = arith.constant 1.600000e+01 : f32
    %45 = vector.broadcast %cst_34 : f32 to vector<8x1xf32>
    %46 = arith.divf %44, %45 : vector<8x1xf32>
    %cst_35 = arith.constant 9.99999997E-7 : f32
    %47 = vector.broadcast %cst_35 : f32 to vector<8x1xf32>
    %48 = arith.addf %46, %47 : vector<8x1xf32>
    %49 = math.rsqrt %48 : vector<8x1xf32>
    %50 = vector.broadcast %49 : vector<8x1xf32> to vector<8x16xf32>
    %51 = arith.mulf %40, %50 : vector<8x16xf32>
    %cst_36 = arith.constant 1.000000e+00 : f32
    %52 = vector.broadcast %cst_36 : f32 to vector<1x16xf32>
    %53 = arith.addf %52, %10 : vector<1x16xf32>
    %54 = vector.broadcast %53 : vector<1x16xf32> to vector<8x16xf32>
    %55 = arith.mulf %51, %54 : vector<8x16xf32>
    %cst_37 = arith.constant 1.000000e+00 : f32
    %56 = vector.broadcast %cst_37 : f32 to vector<8x16xf32>
    %57 = arith.mulf %55, %56 : vector<8x16xf32>
    %58 = vector.extract_strided_slice %57 {offsets = [0, 0], sizes = [8, 8], strides = [1, 1]} : vector<8x16xf32> to vector<8x8xf32>
    %59 = vector.extract_strided_slice %57 {offsets = [0, 8], sizes = [8, 8], strides = [1, 1]} : vector<8x16xf32> to vector<8x8xf32>
    %60 = arith.mulf %58, %5 : vector<8x8xf32>
    %61 = arith.mulf %59, %6 : vector<8x8xf32>
    %62 = arith.subf %60, %61 : vector<8x8xf32>
    %63 = arith.mulf %59, %5 : vector<8x8xf32>
    %64 = arith.mulf %58, %6 : vector<8x8xf32>
    %65 = arith.addf %63, %64 : vector<8x8xf32>
    %66 = tpu.concatenate %62, %65 in 1 : vector<8x8xf32>, vector<8x8xf32> -> vector<8x16xf32>
    %67 = arith.truncf %66 : vector<8x16xf32> to vector<8x16xbf16>
    %68 = arith.truncf %41 : vector<8x16xf32> to vector<8x16xbf16>
    %69 = vector.extract_strided_slice %32 {offsets = [0, 0], sizes = [8, 16], strides = [1, 1]} : vector<8x128xf32> to vector<8x16xf32>
    %70 = arith.mulf %69, %69 : vector<8x16xf32>
    %cst_38 = arith.constant dense<0.000000e+00> : vector<8xf32>
    %71 = vector.multi_reduction <add>, %70, %cst_38 [1] : vector<8x16xf32> to vector<8xf32>
    %72 = vector.shape_cast %71 : vector<8xf32> to vector<8x1xf32>
    %cst_39 = arith.constant 1.600000e+01 : f32
    %73 = vector.broadcast %cst_39 : f32 to vector<8x1xf32>
    %74 = arith.divf %72, %73 : vector<8x1xf32>
    %cst_40 = arith.constant 9.99999997E-7 : f32
    %75 = vector.broadcast %cst_40 : f32 to vector<8x1xf32>
    %76 = arith.addf %74, %75 : vector<8x1xf32>
    %77 = math.rsqrt %76 : vector<8x1xf32>
    %78 = vector.broadcast %77 : vector<8x1xf32> to vector<8x16xf32>
    %79 = arith.mulf %69, %78 : vector<8x16xf32>
    %cst_41 = arith.constant 1.000000e+00 : f32
    %80 = vector.broadcast %cst_41 : f32 to vector<1x16xf32>
    %81 = arith.addf %80, %9 : vector<1x16xf32>
    %82 = vector.broadcast %81 : vector<1x16xf32> to vector<8x16xf32>
    %83 = arith.mulf %79, %82 : vector<8x16xf32>
    %cst_42 = arith.constant 2.500000e-01 : f32
    %84 = vector.broadcast %cst_42 : f32 to vector<8x16xf32>
    %85 = arith.mulf %83, %84 : vector<8x16xf32>
    %86 = vector.extract_strided_slice %85 {offsets = [0, 0], sizes = [8, 8], strides = [1, 1]} : vector<8x16xf32> to vector<8x8xf32>
    %87 = vector.extract_strided_slice %85 {offsets = [0, 8], sizes = [8, 8], strides = [1, 1]} : vector<8x16xf32> to vector<8x8xf32>
    %88 = arith.mulf %86, %5 : vector<8x8xf32>
    %89 = arith.mulf %87, %6 : vector<8x8xf32>
    %90 = arith.subf %88, %89 : vector<8x8xf32>
    %91 = arith.mulf %87, %5 : vector<8x8xf32>
    %92 = arith.mulf %86, %6 : vector<8x8xf32>
    %93 = arith.addf %91, %92 : vector<8x8xf32>
    %94 = tpu.concatenate %90, %93 in 1 : vector<8x8xf32>, vector<8x8xf32> -> vector<8x16xf32>
    %95 = arith.truncf %94 : vector<8x16xf32> to vector<8x16xbf16>
    %cst_43 = arith.constant dense<0.000000e+00> : vector<8x8xf32>
    %96 = tpu.matmul %95, %67, %cst_43 {dimension_numbers = #tpu.dot_dimension_numbers<[1], [1], [0], [0], [0, 0, 1, 0], [], []>} : vector<8x16xbf16>, vector<8x16xbf16>, vector<8x8xf32> -> vector<8x8xf32>
    %cst_44 = arith.constant -1.000000e+30 : f32
    %97 = vector.broadcast %cst_44 : f32 to vector<8x8xf32>
    %98 = arith.select %39, %96, %97 : vector<8x8xi1>, vector<8x8xf32>
    %cst_45 = arith.constant dense<0xFF800000> : vector<8xf32>
    %99 = vector.multi_reduction <maximumf>, %98, %cst_45 [1] : vector<8x8xf32> to vector<8xf32>
    %100 = vector.shape_cast %99 : vector<8xf32> to vector<8x1xf32>
    %101 = vector.broadcast %100 : vector<8x1xf32> to vector<8x8xf32>
    %102 = arith.subf %98, %101 : vector<8x8xf32>
    %103 = math.exp %102 : vector<8x8xf32>
    %cst_46 = arith.constant dense<0.000000e+00> : vector<8xf32>
    %104 = vector.multi_reduction <add>, %103, %cst_46 [1] : vector<8x8xf32> to vector<8xf32>
    %105 = vector.shape_cast %104 : vector<8xf32> to vector<8x1xf32>
    %106 = tpu.reciprocal %105 {approx = true} : vector<8x1xf32> -> vector<8x1xf32>
    %107 = vector.broadcast %106 : vector<8x1xf32> to vector<8x8xf32>
    %108 = arith.mulf %103, %107 : vector<8x8xf32>
    %109 = arith.truncf %108 : vector<8x8xf32> to vector<8x8xbf16>
    %cst_47 = arith.constant dense<0.000000e+00> : vector<8x16xf32>
    %110 = tpu.matmul %109, %68, %cst_47 {dimension_numbers = #tpu.dot_dimension_numbers<[1], [0], [0], [1], [0, 0, 1, 1], [], []>} : vector<8x8xbf16>, vector<8x16xbf16>, vector<8x16xf32> -> vector<8x16xf32>
    %111 = vector.extract_strided_slice %32 {offsets = [0, 16], sizes = [8, 16], strides = [1, 1]} : vector<8x128xf32> to vector<8x16xf32>
    %112 = arith.mulf %111, %111 : vector<8x16xf32>
    %cst_48 = arith.constant dense<0.000000e+00> : vector<8xf32>
    %113 = vector.multi_reduction <add>, %112, %cst_48 [1] : vector<8x16xf32> to vector<8xf32>
    %114 = vector.shape_cast %113 : vector<8xf32> to vector<8x1xf32>
    %cst_49 = arith.constant 1.600000e+01 : f32
    %115 = vector.broadcast %cst_49 : f32 to vector<8x1xf32>
    %116 = arith.divf %114, %115 : vector<8x1xf32>
    %cst_50 = arith.constant 9.99999997E-7 : f32
    %117 = vector.broadcast %cst_50 : f32 to vector<8x1xf32>
    %118 = arith.addf %116, %117 : vector<8x1xf32>
    %119 = math.rsqrt %118 : vector<8x1xf32>
    %120 = vector.broadcast %119 : vector<8x1xf32> to vector<8x16xf32>
    %121 = arith.mulf %111, %120 : vector<8x16xf32>
    %cst_51 = arith.constant 1.000000e+00 : f32
    %122 = vector.broadcast %cst_51 : f32 to vector<1x16xf32>
    %123 = arith.addf %122, %9 : vector<1x16xf32>
    %124 = vector.broadcast %123 : vector<1x16xf32> to vector<8x16xf32>
    %125 = arith.mulf %121, %124 : vector<8x16xf32>
    %cst_52 = arith.constant 2.500000e-01 : f32
    %126 = vector.broadcast %cst_52 : f32 to vector<8x16xf32>
    %127 = arith.mulf %125, %126 : vector<8x16xf32>
    %128 = vector.extract_strided_slice %127 {offsets = [0, 0], sizes = [8, 8], strides = [1, 1]} : vector<8x16xf32> to vector<8x8xf32>
    %129 = vector.extract_strided_slice %127 {offsets = [0, 8], sizes = [8, 8], strides = [1, 1]} : vector<8x16xf32> to vector<8x8xf32>
    %130 = arith.mulf %128, %5 : vector<8x8xf32>
    %131 = arith.mulf %129, %6 : vector<8x8xf32>
    %132 = arith.subf %130, %131 : vector<8x8xf32>
    %133 = arith.mulf %129, %5 : vector<8x8xf32>
    %134 = arith.mulf %128, %6 : vector<8x8xf32>
    %135 = arith.addf %133, %134 : vector<8x8xf32>
    %136 = tpu.concatenate %132, %135 in 1 : vector<8x8xf32>, vector<8x8xf32> -> vector<8x16xf32>
    %137 = arith.truncf %136 : vector<8x16xf32> to vector<8x16xbf16>
    %cst_53 = arith.constant dense<0.000000e+00> : vector<8x8xf32>
    %138 = tpu.matmul %137, %67, %cst_53 {dimension_numbers = #tpu.dot_dimension_numbers<[1], [1], [0], [0], [0, 0, 1, 0], [], []>} : vector<8x16xbf16>, vector<8x16xbf16>, vector<8x8xf32> -> vector<8x8xf32>
    %cst_54 = arith.constant -1.000000e+30 : f32
    %139 = vector.broadcast %cst_54 : f32 to vector<8x8xf32>
    %140 = arith.select %39, %138, %139 : vector<8x8xi1>, vector<8x8xf32>
    %cst_55 = arith.constant dense<0xFF800000> : vector<8xf32>
    %141 = vector.multi_reduction <maximumf>, %140, %cst_55 [1] : vector<8x8xf32> to vector<8xf32>
    %142 = vector.shape_cast %141 : vector<8xf32> to vector<8x1xf32>
    %143 = vector.broadcast %142 : vector<8x1xf32> to vector<8x8xf32>
    %144 = arith.subf %140, %143 : vector<8x8xf32>
    %145 = math.exp %144 : vector<8x8xf32>
    %cst_56 = arith.constant dense<0.000000e+00> : vector<8xf32>
    %146 = vector.multi_reduction <add>, %145, %cst_56 [1] : vector<8x8xf32> to vector<8xf32>
    %147 = vector.shape_cast %146 : vector<8xf32> to vector<8x1xf32>
    %148 = tpu.reciprocal %147 {approx = true} : vector<8x1xf32> -> vector<8x1xf32>
    %149 = vector.broadcast %148 : vector<8x1xf32> to vector<8x8xf32>
    %150 = arith.mulf %145, %149 : vector<8x8xf32>
    %151 = arith.truncf %150 : vector<8x8xf32> to vector<8x8xbf16>
    %cst_57 = arith.constant dense<0.000000e+00> : vector<8x16xf32>
    %152 = tpu.matmul %151, %68, %cst_57 {dimension_numbers = #tpu.dot_dimension_numbers<[1], [0], [0], [1], [0, 0, 1, 1], [], []>} : vector<8x8xbf16>, vector<8x16xbf16>, vector<8x16xf32> -> vector<8x16xf32>
    %153 = vector.extract_strided_slice %32 {offsets = [0, 80], sizes = [8, 16], strides = [1, 1]} : vector<8x128xf32> to vector<8x16xf32>
    %154 = vector.extract_strided_slice %32 {offsets = [0, 112], sizes = [8, 16], strides = [1, 1]} : vector<8x128xf32> to vector<8x16xf32>
    %155 = arith.mulf %153, %153 : vector<8x16xf32>
    %cst_58 = arith.constant dense<0.000000e+00> : vector<8xf32>
    %156 = vector.multi_reduction <add>, %155, %cst_58 [1] : vector<8x16xf32> to vector<8xf32>
    %157 = vector.shape_cast %156 : vector<8xf32> to vector<8x1xf32>
    %cst_59 = arith.constant 1.600000e+01 : f32
    %158 = vector.broadcast %cst_59 : f32 to vector<8x1xf32>
    %159 = arith.divf %157, %158 : vector<8x1xf32>
    %cst_60 = arith.constant 9.99999997E-7 : f32
    %160 = vector.broadcast %cst_60 : f32 to vector<8x1xf32>
    %161 = arith.addf %159, %160 : vector<8x1xf32>
    %162 = math.rsqrt %161 : vector<8x1xf32>
    %163 = vector.broadcast %162 : vector<8x1xf32> to vector<8x16xf32>
    %164 = arith.mulf %153, %163 : vector<8x16xf32>
    %cst_61 = arith.constant 1.000000e+00 : f32
    %165 = vector.broadcast %cst_61 : f32 to vector<1x16xf32>
    %166 = arith.addf %165, %10 : vector<1x16xf32>
    %167 = vector.broadcast %166 : vector<1x16xf32> to vector<8x16xf32>
    %168 = arith.mulf %164, %167 : vector<8x16xf32>
    %cst_62 = arith.constant 1.000000e+00 : f32
    %169 = vector.broadcast %cst_62 : f32 to vector<8x16xf32>
    %170 = arith.mulf %168, %169 : vector<8x16xf32>
    %171 = vector.extract_strided_slice %170 {offsets = [0, 0], sizes = [8, 8], strides = [1, 1]} : vector<8x16xf32> to vector<8x8xf32>
    %172 = vector.extract_strided_slice %170 {offsets = [0, 8], sizes = [8, 8], strides = [1, 1]} : vector<8x16xf32> to vector<8x8xf32>
    %173 = arith.mulf %171, %5 : vector<8x8xf32>
    %174 = arith.mulf %172, %6 : vector<8x8xf32>
    %175 = arith.subf %173, %174 : vector<8x8xf32>
    %176 = arith.mulf %172, %5 : vector<8x8xf32>
    %177 = arith.mulf %171, %6 : vector<8x8xf32>
    %178 = arith.addf %176, %177 : vector<8x8xf32>
    %179 = tpu.concatenate %175, %178 in 1 : vector<8x8xf32>, vector<8x8xf32> -> vector<8x16xf32>
    %180 = arith.truncf %179 : vector<8x16xf32> to vector<8x16xbf16>
    %181 = arith.truncf %154 : vector<8x16xf32> to vector<8x16xbf16>
    %182 = vector.extract_strided_slice %32 {offsets = [0, 32], sizes = [8, 16], strides = [1, 1]} : vector<8x128xf32> to vector<8x16xf32>
    %183 = arith.mulf %182, %182 : vector<8x16xf32>
    %cst_63 = arith.constant dense<0.000000e+00> : vector<8xf32>
    %184 = vector.multi_reduction <add>, %183, %cst_63 [1] : vector<8x16xf32> to vector<8xf32>
    %185 = vector.shape_cast %184 : vector<8xf32> to vector<8x1xf32>
    %cst_64 = arith.constant 1.600000e+01 : f32
    %186 = vector.broadcast %cst_64 : f32 to vector<8x1xf32>
    %187 = arith.divf %185, %186 : vector<8x1xf32>
    %cst_65 = arith.constant 9.99999997E-7 : f32
    %188 = vector.broadcast %cst_65 : f32 to vector<8x1xf32>
    %189 = arith.addf %187, %188 : vector<8x1xf32>
    %190 = math.rsqrt %189 : vector<8x1xf32>
    %191 = vector.broadcast %190 : vector<8x1xf32> to vector<8x16xf32>
    %192 = arith.mulf %182, %191 : vector<8x16xf32>
    %cst_66 = arith.constant 1.000000e+00 : f32
    %193 = vector.broadcast %cst_66 : f32 to vector<1x16xf32>
    %194 = arith.addf %193, %9 : vector<1x16xf32>
    %195 = vector.broadcast %194 : vector<1x16xf32> to vector<8x16xf32>
    %196 = arith.mulf %192, %195 : vector<8x16xf32>
    %cst_67 = arith.constant 2.500000e-01 : f32
    %197 = vector.broadcast %cst_67 : f32 to vector<8x16xf32>
    %198 = arith.mulf %196, %197 : vector<8x16xf32>
    %199 = vector.extract_strided_slice %198 {offsets = [0, 0], sizes = [8, 8], strides = [1, 1]} : vector<8x16xf32> to vector<8x8xf32>
    %200 = vector.extract_strided_slice %198 {offsets = [0, 8], sizes = [8, 8], strides = [1, 1]} : vector<8x16xf32> to vector<8x8xf32>
    %201 = arith.mulf %199, %5 : vector<8x8xf32>
    %202 = arith.mulf %200, %6 : vector<8x8xf32>
    %203 = arith.subf %201, %202 : vector<8x8xf32>
    %204 = arith.mulf %200, %5 : vector<8x8xf32>
    %205 = arith.mulf %199, %6 : vector<8x8xf32>
    %206 = arith.addf %204, %205 : vector<8x8xf32>
    %207 = tpu.concatenate %203, %206 in 1 : vector<8x8xf32>, vector<8x8xf32> -> vector<8x16xf32>
    %208 = arith.truncf %207 : vector<8x16xf32> to vector<8x16xbf16>
    %cst_68 = arith.constant dense<0.000000e+00> : vector<8x8xf32>
    %209 = tpu.matmul %208, %180, %cst_68 {dimension_numbers = #tpu.dot_dimension_numbers<[1], [1], [0], [0], [0, 0, 1, 0], [], []>} : vector<8x16xbf16>, vector<8x16xbf16>, vector<8x8xf32> -> vector<8x8xf32>
    %cst_69 = arith.constant -1.000000e+30 : f32
    %210 = vector.broadcast %cst_69 : f32 to vector<8x8xf32>
    %211 = arith.select %39, %209, %210 : vector<8x8xi1>, vector<8x8xf32>
    %cst_70 = arith.constant dense<0xFF800000> : vector<8xf32>
    %212 = vector.multi_reduction <maximumf>, %211, %cst_70 [1] : vector<8x8xf32> to vector<8xf32>
    %213 = vector.shape_cast %212 : vector<8xf32> to vector<8x1xf32>
    %214 = vector.broadcast %213 : vector<8x1xf32> to vector<8x8xf32>
    %215 = arith.subf %211, %214 : vector<8x8xf32>
    %216 = math.exp %215 : vector<8x8xf32>
    %cst_71 = arith.constant dense<0.000000e+00> : vector<8xf32>
    %217 = vector.multi_reduction <add>, %216, %cst_71 [1] : vector<8x8xf32> to vector<8xf32>
    %218 = vector.shape_cast %217 : vector<8xf32> to vector<8x1xf32>
    %219 = tpu.reciprocal %218 {approx = true} : vector<8x1xf32> -> vector<8x1xf32>
    %220 = vector.broadcast %219 : vector<8x1xf32> to vector<8x8xf32>
    %221 = arith.mulf %216, %220 : vector<8x8xf32>
    %222 = arith.truncf %221 : vector<8x8xf32> to vector<8x8xbf16>
    %cst_72 = arith.constant dense<0.000000e+00> : vector<8x16xf32>
    %223 = tpu.matmul %222, %181, %cst_72 {dimension_numbers = #tpu.dot_dimension_numbers<[1], [0], [0], [1], [0, 0, 1, 1], [], []>} : vector<8x8xbf16>, vector<8x16xbf16>, vector<8x16xf32> -> vector<8x16xf32>
    %224 = vector.extract_strided_slice %32 {offsets = [0, 48], sizes = [8, 16], strides = [1, 1]} : vector<8x128xf32> to vector<8x16xf32>
    %225 = arith.mulf %224, %224 : vector<8x16xf32>
    %cst_73 = arith.constant dense<0.000000e+00> : vector<8xf32>
    %226 = vector.multi_reduction <add>, %225, %cst_73 [1] : vector<8x16xf32> to vector<8xf32>
    %227 = vector.shape_cast %226 : vector<8xf32> to vector<8x1xf32>
    %cst_74 = arith.constant 1.600000e+01 : f32
    %228 = vector.broadcast %cst_74 : f32 to vector<8x1xf32>
    %229 = arith.divf %227, %228 : vector<8x1xf32>
    %cst_75 = arith.constant 9.99999997E-7 : f32
    %230 = vector.broadcast %cst_75 : f32 to vector<8x1xf32>
    %231 = arith.addf %229, %230 : vector<8x1xf32>
    %232 = math.rsqrt %231 : vector<8x1xf32>
    %233 = vector.broadcast %232 : vector<8x1xf32> to vector<8x16xf32>
    %234 = arith.mulf %224, %233 : vector<8x16xf32>
    %cst_76 = arith.constant 1.000000e+00 : f32
    %235 = vector.broadcast %cst_76 : f32 to vector<1x16xf32>
    %236 = arith.addf %235, %9 : vector<1x16xf32>
    %237 = vector.broadcast %236 : vector<1x16xf32> to vector<8x16xf32>
    %238 = arith.mulf %234, %237 : vector<8x16xf32>
    %cst_77 = arith.constant 2.500000e-01 : f32
    %239 = vector.broadcast %cst_77 : f32 to vector<8x16xf32>
    %240 = arith.mulf %238, %239 : vector<8x16xf32>
    %241 = vector.extract_strided_slice %240 {offsets = [0, 0], sizes = [8, 8], strides = [1, 1]} : vector<8x16xf32> to vector<8x8xf32>
    %242 = vector.extract_strided_slice %240 {offsets = [0, 8], sizes = [8, 8], strides = [1, 1]} : vector<8x16xf32> to vector<8x8xf32>
    %243 = arith.mulf %241, %5 : vector<8x8xf32>
    %244 = arith.mulf %242, %6 : vector<8x8xf32>
    %245 = arith.subf %243, %244 : vector<8x8xf32>
    %246 = arith.mulf %242, %5 : vector<8x8xf32>
    %247 = arith.mulf %241, %6 : vector<8x8xf32>
    %248 = arith.addf %246, %247 : vector<8x8xf32>
    %249 = tpu.concatenate %245, %248 in 1 : vector<8x8xf32>, vector<8x8xf32> -> vector<8x16xf32>
    %250 = arith.truncf %249 : vector<8x16xf32> to vector<8x16xbf16>
    %cst_78 = arith.constant dense<0.000000e+00> : vector<8x8xf32>
    %251 = tpu.matmul %250, %180, %cst_78 {dimension_numbers = #tpu.dot_dimension_numbers<[1], [1], [0], [0], [0, 0, 1, 0], [], []>} : vector<8x16xbf16>, vector<8x16xbf16>, vector<8x8xf32> -> vector<8x8xf32>
    %cst_79 = arith.constant -1.000000e+30 : f32
    %252 = vector.broadcast %cst_79 : f32 to vector<8x8xf32>
    %253 = arith.select %39, %251, %252 : vector<8x8xi1>, vector<8x8xf32>
    %cst_80 = arith.constant dense<0xFF800000> : vector<8xf32>
    %254 = vector.multi_reduction <maximumf>, %253, %cst_80 [1] : vector<8x8xf32> to vector<8xf32>
    %255 = vector.shape_cast %254 : vector<8xf32> to vector<8x1xf32>
    %256 = vector.broadcast %255 : vector<8x1xf32> to vector<8x8xf32>
    %257 = arith.subf %253, %256 : vector<8x8xf32>
    %258 = math.exp %257 : vector<8x8xf32>
    %cst_81 = arith.constant dense<0.000000e+00> : vector<8xf32>
    %259 = vector.multi_reduction <add>, %258, %cst_81 [1] : vector<8x8xf32> to vector<8xf32>
    %260 = vector.shape_cast %259 : vector<8xf32> to vector<8x1xf32>
    %261 = tpu.reciprocal %260 {approx = true} : vector<8x1xf32> -> vector<8x1xf32>
    %262 = vector.broadcast %261 : vector<8x1xf32> to vector<8x8xf32>
    %263 = arith.mulf %258, %262 : vector<8x8xf32>
    %264 = arith.truncf %263 : vector<8x8xf32> to vector<8x8xbf16>
    %cst_82 = arith.constant dense<0.000000e+00> : vector<8x16xf32>
    %265 = tpu.matmul %264, %181, %cst_82 {dimension_numbers = #tpu.dot_dimension_numbers<[1], [0], [0], [1], [0, 0, 1, 1], [], []>} : vector<8x8xbf16>, vector<8x16xbf16>, vector<8x16xf32> -> vector<8x16xf32>
    %266 = tpu.concatenate %110, %152, %223, %265 in 1 : vector<8x16xf32>, vector<8x16xf32>, vector<8x16xf32>, vector<8x16xf32> -> vector<8x64xf32>
    %267 = arith.truncf %266 : vector<8x64xf32> to vector<8x64xbf16>
    %cst_83 = arith.constant dense<0.000000e+00> : vector<8x64xf32>
    %268 = tpu.matmul %267, %11, %cst_83 {dimension_numbers = #tpu.dot_dimension_numbers<[1], [0], [0], [1], [0, 0, 1, 1], [], []>} : vector<8x64xbf16>, vector<64x64xbf16>, vector<8x64xf32> -> vector<8x64xf32>
    %269 = arith.mulf %268, %268 : vector<8x64xf32>
    %cst_84 = arith.constant dense<0.000000e+00> : vector<8xf32>
    %270 = vector.multi_reduction <add>, %269, %cst_84 [1] : vector<8x64xf32> to vector<8xf32>
    %271 = vector.shape_cast %270 : vector<8xf32> to vector<8x1xf32>
    %cst_85 = arith.constant 6.400000e+01 : f32
    %272 = vector.broadcast %cst_85 : f32 to vector<8x1xf32>
    %273 = arith.divf %271, %272 : vector<8x1xf32>
    %cst_86 = arith.constant 9.99999997E-7 : f32
    %274 = vector.broadcast %cst_86 : f32 to vector<8x1xf32>
    %275 = arith.addf %273, %274 : vector<8x1xf32>
    %276 = math.rsqrt %275 : vector<8x1xf32>
    %277 = vector.broadcast %276 : vector<8x1xf32> to vector<8x64xf32>
    %278 = arith.mulf %268, %277 : vector<8x64xf32>
    %cst_87 = arith.constant 1.000000e+00 : f32
    %279 = vector.broadcast %cst_87 : f32 to vector<1x64xf32>
    %280 = arith.addf %279, %12 : vector<1x64xf32>
    %281 = vector.broadcast %280 : vector<1x64xf32> to vector<8x64xf32>
    %282 = arith.mulf %278, %281 : vector<8x64xf32>
    %283 = arith.addf %2, %282 : vector<8x64xf32>
    %284 = arith.mulf %283, %283 : vector<8x64xf32>
    %cst_88 = arith.constant dense<0.000000e+00> : vector<8xf32>
    %285 = vector.multi_reduction <add>, %284, %cst_88 [1] : vector<8x64xf32> to vector<8xf32>
    %286 = vector.shape_cast %285 : vector<8xf32> to vector<8x1xf32>
    %cst_89 = arith.constant 6.400000e+01 : f32
    %287 = vector.broadcast %cst_89 : f32 to vector<8x1xf32>
    %288 = arith.divf %286, %287 : vector<8x1xf32>
    %cst_90 = arith.constant 9.99999997E-7 : f32
    %289 = vector.broadcast %cst_90 : f32 to vector<8x1xf32>
    %290 = arith.addf %288, %289 : vector<8x1xf32>
    %291 = math.rsqrt %290 : vector<8x1xf32>
    %292 = vector.broadcast %291 : vector<8x1xf32> to vector<8x64xf32>
    %293 = arith.mulf %283, %292 : vector<8x64xf32>
    %cst_91 = arith.constant 1.000000e+00 : f32
    %294 = vector.broadcast %cst_91 : f32 to vector<1x64xf32>
    %295 = arith.addf %294, %13 : vector<1x64xf32>
    %296 = vector.broadcast %295 : vector<1x64xf32> to vector<8x64xf32>
    %297 = arith.mulf %293, %296 : vector<8x64xf32>
    %298 = arith.truncf %297 : vector<8x64xf32> to vector<8x64xbf16>
    %cst_92 = arith.constant dense<0.000000e+00> : vector<8x256xf32>
    %299 = tpu.matmul %298, %14, %cst_92 {dimension_numbers = #tpu.dot_dimension_numbers<[1], [0], [0], [1], [0, 0, 1, 1], [], []>} : vector<8x64xbf16>, vector<64x256xbf16>, vector<8x256xf32> -> vector<8x256xf32>
    %300 = vector.extract_strided_slice %299 {offsets = [0, 0], sizes = [8, 128], strides = [1, 1]} : vector<8x256xf32> to vector<8x128xf32>
    %301 = arith.mulf %300, %300 : vector<8x128xf32>
    %302 = arith.mulf %300, %301 : vector<8x128xf32>
    %cst_93 = arith.constant 4.471500e-02 : f32
    %303 = vector.broadcast %cst_93 : f32 to vector<8x128xf32>
    %304 = arith.mulf %303, %302 : vector<8x128xf32>
    %305 = arith.addf %300, %304 : vector<8x128xf32>
    %cst_94 = arith.constant 0.797884583 : f32
    %306 = vector.broadcast %cst_94 : f32 to vector<8x128xf32>
    %307 = arith.mulf %306, %305 : vector<8x128xf32>
    %308 = math.tanh %307 : vector<8x128xf32>
    %cst_95 = arith.constant 1.000000e+00 : f32
    %309 = vector.broadcast %cst_95 : f32 to vector<8x128xf32>
    %310 = arith.addf %309, %308 : vector<8x128xf32>
    %cst_96 = arith.constant 5.000000e-01 : f32
    %311 = vector.broadcast %cst_96 : f32 to vector<8x128xf32>
    %312 = arith.mulf %311, %310 : vector<8x128xf32>
    %313 = arith.mulf %300, %312 : vector<8x128xf32>
    %314 = vector.extract_strided_slice %299 {offsets = [0, 128], sizes = [8, 128], strides = [1, 1]} : vector<8x256xf32> to vector<8x128xf32>
    %315 = arith.mulf %313, %314 : vector<8x128xf32>
    %316 = arith.truncf %315 : vector<8x128xf32> to vector<8x128xbf16>
    %cst_97 = arith.constant dense<0.000000e+00> : vector<8x64xf32>
    %317 = tpu.matmul %316, %15, %cst_97 {dimension_numbers = #tpu.dot_dimension_numbers<[1], [0], [0], [1], [0, 0, 1, 1], [], []>} : vector<8x128xbf16>, vector<128x64xbf16>, vector<8x64xf32> -> vector<8x64xf32>
    %318 = arith.mulf %317, %317 : vector<8x64xf32>
    %cst_98 = arith.constant dense<0.000000e+00> : vector<8xf32>
    %319 = vector.multi_reduction <add>, %318, %cst_98 [1] : vector<8x64xf32> to vector<8xf32>
    %320 = vector.shape_cast %319 : vector<8xf32> to vector<8x1xf32>
    %cst_99 = arith.constant 6.400000e+01 : f32
    %321 = vector.broadcast %cst_99 : f32 to vector<8x1xf32>
    %322 = arith.divf %320, %321 : vector<8x1xf32>
    %cst_100 = arith.constant 9.99999997E-7 : f32
    %323 = vector.broadcast %cst_100 : f32 to vector<8x1xf32>
    %324 = arith.addf %322, %323 : vector<8x1xf32>
    %325 = math.rsqrt %324 : vector<8x1xf32>
    %326 = vector.broadcast %325 : vector<8x1xf32> to vector<8x64xf32>
    %327 = arith.mulf %317, %326 : vector<8x64xf32>
    %cst_101 = arith.constant 1.000000e+00 : f32
    %328 = vector.broadcast %cst_101 : f32 to vector<1x64xf32>
    %329 = arith.addf %328, %16 : vector<1x64xf32>
    %330 = vector.broadcast %329 : vector<1x64xf32> to vector<8x64xf32>
    %331 = arith.mulf %327, %330 : vector<8x64xf32>
    %332 = arith.addf %283, %331 : vector<8x64xf32>
    %333 = arith.truncf %332 : vector<8x64xf32> to vector<8x64xbf16>
    %c0_102 = arith.constant 0 : index
    %c0_103 = arith.constant 0 : index
    %c0_104 = arith.constant 0 : index
    %334 = vector.load %arg15[%c0_102, %c0_103, %c0_104] : memref<1x8x64xbf16, #tpu.memory_space<vmem>>, vector<1x8x64xbf16>
    %335 = vector.shape_cast %334 : vector<1x8x64xbf16> to vector<8x64xbf16>
    %336 = vector.shape_cast %333 : vector<8x64xbf16> to vector<1x8x64xbf16>
    tpu.vector_store %arg15[%c0_102, %c0_103, %c0_104], %336 {strides = array<i32>} : memref<1x8x64xbf16, #tpu.memory_space<vmem>>, vector<1x8x64xbf16>,
    return
  }
  func.func @transform_0(%arg0: i32) -> (i32, i32, i32) {
    %c0_i32 = arith.constant 0 : i32
    %c0_i32_0 = arith.constant 0 : i32
    %c0_i32_1 = arith.constant 0 : i32
    return %arg0, %c0_i32, %c0_i32_0 : i32, i32, i32
  }
  func.func @transform_1(%arg0: i32) -> (i32, i32, i32) {
    %c0_i32 = arith.constant 0 : i32
    %c0_i32_0 = arith.constant 0 : i32
    %c0_i32_1 = arith.constant 0 : i32
    return %arg0, %c0_i32, %c0_i32_0 : i32, i32, i32
  }
  func.func @transform_2(%arg0: i32) -> (i32, i32) {
    %c0_i32 = arith.constant 0 : i32
    %c0_i32_0 = arith.constant 0 : i32
    %c0_i32_1 = arith.constant 0 : i32
    return %c0_i32, %c0_i32_0 : i32, i32
  }
  func.func @transform_3(%arg0: i32) -> (i32, i32) {
    %c0_i32 = arith.constant 0 : i32
    %c0_i32_0 = arith.constant 0 : i32
    %c0_i32_1 = arith.constant 0 : i32
    return %c0_i32, %c0_i32_0 : i32, i32
  }
  func.func @transform_4(%arg0: i32) -> (i32, i32) {
    %c0_i32 = arith.constant 0 : i32
    %c0_i32_0 = arith.constant 0 : i32
    %c0_i32_1 = arith.constant 0 : i32
    return %c0_i32, %c0_i32_0 : i32, i32
  }
  func.func @transform_5(%arg0: i32) -> (i32, i32) {
    %c0_i32 = arith.constant 0 : i32
    %c0_i32_0 = arith.constant 0 : i32
    %c0_i32_1 = arith.constant 0 : i32
    return %c0_i32, %c0_i32_0 : i32, i32
  }
  func.func @transform_6(%arg0: i32) -> (i32, i32) {
    %c0_i32 = arith.constant 0 : i32
    %c0_i32_0 = arith.constant 0 : i32
    %c0_i32_1 = arith.constant 0 : i32
    return %c0_i32, %c0_i32_0 : i32, i32
  }
  func.func @transform_7(%arg0: i32) -> (i32, i32) {
    %c0_i32 = arith.constant 0 : i32
    %c0_i32_0 = arith.constant 0 : i32
    %c0_i32_1 = arith.constant 0 : i32
    return %c0_i32, %c0_i32_0 : i32, i32
  }
  func.func @transform_8(%arg0: i32) -> (i32, i32) {
    %c0_i32 = arith.constant 0 : i32
    %c0_i32_0 = arith.constant 0 : i32
    %c0_i32_1 = arith.constant 0 : i32
    return %c0_i32, %c0_i32_0 : i32, i32
  }
  func.func @transform_9(%arg0: i32) -> (i32, i32) {
    %c0_i32 = arith.constant 0 : i32
    %c0_i32_0 = arith.constant 0 : i32
    %c0_i32_1 = arith.constant 0 : i32
    return %c0_i32, %c0_i32_0 : i32, i32
  }
  func.func @transform_10(%arg0: i32) -> (i32, i32) {
    %c0_i32 = arith.constant 0 : i32
    %c0_i32_0 = arith.constant 0 : i32
    %c0_i32_1 = arith.constant 0 : i32
    return %c0_i32, %c0_i32_0 : i32, i32
  }
  func.func @transform_11(%arg0: i32) -> (i32, i32) {
    %c0_i32 = arith.constant 0 : i32
    %c0_i32_0 = arith.constant 0 : i32
    %c0_i32_1 = arith.constant 0 : i32
    return %c0_i32, %c0_i32_0 : i32, i32
  }
  func.func @transform_12(%arg0: i32) -> (i32, i32) {
    %c0_i32 = arith.constant 0 : i32
    %c0_i32_0 = arith.constant 0 : i32
    %c0_i32_1 = arith.constant 0 : i32
    return %c0_i32, %c0_i32_0 : i32, i32
  }
  func.func @transform_13(%arg0: i32) -> (i32, i32) {
    %c0_i32 = arith.constant 0 : i32
    %c0_i32_0 = arith.constant 0 : i32
    %c0_i32_1 = arith.constant 0 : i32
    return %c0_i32, %c0_i32_0 : i32, i32
  }
  func.func @transform_14(%arg0: i32) -> (i32, i32, i32) {
    %c0_i32 = arith.constant 0 : i32
    %c0_i32_0 = arith.constant 0 : i32
    %c0_i32_1 = arith.constant 0 : i32
    return %arg0, %c0_i32, %c0_i32_0 : i32, i32, i32
  }
}

module attributes {stable_mosaic.version = 11 : i64} {
  func.func @_last_layer_kernel(%arg0: i32, %arg1: memref<1x8x64xbf16, #tpu.memory_space<vmem>>, %arg2: memref<1x1x8xi32, #tpu.memory_space<vmem>>, %arg3: memref<8x8xf32, #tpu.memory_space<vmem>>, %arg4: memref<8x8xf32, #tpu.memory_space<vmem>>, %arg5: memref<1x64xf32, #tpu.memory_space<vmem>>, %arg6: memref<64x128xbf16, #tpu.memory_space<vmem>>, %arg7: memref<1x16xf32, #tpu.memory_space<vmem>>, %arg8: memref<1x16xf32, #tpu.memory_space<vmem>>, %arg9: memref<64x64xbf16, #tpu.memory_space<vmem>>, %arg10: memref<1x64xf32, #tpu.memory_space<vmem>>, %arg11: memref<1x64xf32, #tpu.memory_space<vmem>>, %arg12: memref<64x256xbf16, #tpu.memory_space<vmem>>, %arg13: memref<128x64xbf16, #tpu.memory_space<vmem>>, %arg14: memref<1x64xf32, #tpu.memory_space<vmem>>, %arg15: memref<1x64xf32, #tpu.memory_space<vmem>>, %arg16: memref<1x64xf32, #tpu.memory_space<vmem>>, %arg17: memref<1x1x8xf32, #tpu.memory_space<vmem>>) attributes {dimension_semantics = [#tpu.dimension_semantics<parallel>], iteration_bounds = array<i64: 2>, scalar_prefetch = 0 : i64, scratch_operands = 0 : i64, tpu.core_type = #tpu.core_type<tc>, window_params = [{transform_indices = @transform_0, window_bounds = array<i64: 1, 8, 64>}, {transform_indices = @transform_1, window_bounds = array<i64: 1, 1, 8>}, {pipeline_mode = #tpu.pipeline_mode<synchronous>, transform_indices = @transform_2, window_bounds = array<i64: 8, 8>}, {pipeline_mode = #tpu.pipeline_mode<synchronous>, transform_indices = @transform_3, window_bounds = array<i64: 8, 8>}, {pipeline_mode = #tpu.pipeline_mode<synchronous>, transform_indices = @transform_4, window_bounds = array<i64: 1, 64>}, {pipeline_mode = #tpu.pipeline_mode<synchronous>, transform_indices = @transform_5, window_bounds = array<i64: 64, 128>}, {pipeline_mode = #tpu.pipeline_mode<synchronous>, transform_indices = @transform_6, window_bounds = array<i64: 1, 16>}, {pipeline_mode = #tpu.pipeline_mode<synchronous>, transform_indices = @transform_7, window_bounds = array<i64: 1, 16>}, {pipeline_mode = #tpu.pipeline_mode<synchronous>, transform_indices = @transform_8, window_bounds = array<i64: 64, 64>}, {pipeline_mode = #tpu.pipeline_mode<synchronous>, transform_indices = @transform_9, window_bounds = array<i64: 1, 64>}, {pipeline_mode = #tpu.pipeline_mode<synchronous>, transform_indices = @transform_10, window_bounds = array<i64: 1, 64>}, {pipeline_mode = #tpu.pipeline_mode<synchronous>, transform_indices = @transform_11, window_bounds = array<i64: 64, 256>}, {pipeline_mode = #tpu.pipeline_mode<synchronous>, transform_indices = @transform_12, window_bounds = array<i64: 128, 64>}, {pipeline_mode = #tpu.pipeline_mode<synchronous>, transform_indices = @transform_13, window_bounds = array<i64: 1, 64>}, {pipeline_mode = #tpu.pipeline_mode<synchronous>, transform_indices = @transform_14, window_bounds = array<i64: 1, 64>}, {pipeline_mode = #tpu.pipeline_mode<synchronous>, transform_indices = @transform_15, window_bounds = array<i64: 1, 64>}, {transform_indices = @transform_16, window_bounds = array<i64: 1, 1, 8>}]} {
    %c0 = arith.constant 0 : index
    %c0_0 = arith.constant 0 : index
    %c0_1 = arith.constant 0 : index
    %0 = vector.load %arg1[%c0, %c0_0, %c0_1] : memref<1x8x64xbf16, #tpu.memory_space<vmem>>, vector<1x8x64xbf16>
    %1 = vector.shape_cast %0 : vector<1x8x64xbf16> to vector<8x64xbf16>
    %2 = arith.extf %1 : vector<8x64xbf16> to vector<8x64xf32>
    %c0_2 = arith.constant 0 : index
    %c0_3 = arith.constant 0 : index
    %c0_4 = arith.constant 0 : index
    %3 = vector.load %arg2[%c0_2, %c0_3, %c0_4] : memref<1x1x8xi32, #tpu.memory_space<vmem>>, vector<1x1x8xi32>
    %4 = vector.shape_cast %3 : vector<1x1x8xi32> to vector<1x8xi32>
    %c0_5 = arith.constant 0 : index
    %c0_6 = arith.constant 0 : index
    %5 = vector.load %arg3[%c0_5, %c0_6] : memref<8x8xf32, #tpu.memory_space<vmem>>, vector<8x8xf32>
    %c0_7 = arith.constant 0 : index
    %c0_8 = arith.constant 0 : index
    %6 = vector.load %arg4[%c0_7, %c0_8] : memref<8x8xf32, #tpu.memory_space<vmem>>, vector<8x8xf32>
    %c0_9 = arith.constant 0 : index
    %c0_10 = arith.constant 0 : index
    %7 = vector.load %arg5[%c0_9, %c0_10] : memref<1x64xf32, #tpu.memory_space<vmem>>, vector<1x64xf32>
    %c0_11 = arith.constant 0 : index
    %c0_12 = arith.constant 0 : index
    %8 = vector.load %arg6[%c0_11, %c0_12] : memref<64x128xbf16, #tpu.memory_space<vmem>>, vector<64x128xbf16>
    %c0_13 = arith.constant 0 : index
    %c0_14 = arith.constant 0 : index
    %9 = vector.load %arg7[%c0_13, %c0_14] : memref<1x16xf32, #tpu.memory_space<vmem>>, vector<1x16xf32>
    %c0_15 = arith.constant 0 : index
    %c0_16 = arith.constant 0 : index
    %10 = vector.load %arg8[%c0_15, %c0_16] : memref<1x16xf32, #tpu.memory_space<vmem>>, vector<1x16xf32>
    %c0_17 = arith.constant 0 : index
    %c0_18 = arith.constant 0 : index
    %11 = vector.load %arg9[%c0_17, %c0_18] : memref<64x64xbf16, #tpu.memory_space<vmem>>, vector<64x64xbf16>
    %c0_19 = arith.constant 0 : index
    %c0_20 = arith.constant 0 : index
    %12 = vector.load %arg10[%c0_19, %c0_20] : memref<1x64xf32, #tpu.memory_space<vmem>>, vector<1x64xf32>
    %c0_21 = arith.constant 0 : index
    %c0_22 = arith.constant 0 : index
    %13 = vector.load %arg11[%c0_21, %c0_22] : memref<1x64xf32, #tpu.memory_space<vmem>>, vector<1x64xf32>
    %c0_23 = arith.constant 0 : index
    %c0_24 = arith.constant 0 : index
    %14 = vector.load %arg12[%c0_23, %c0_24] : memref<64x256xbf16, #tpu.memory_space<vmem>>, vector<64x256xbf16>
    %c0_25 = arith.constant 0 : index
    %c0_26 = arith.constant 0 : index
    %15 = vector.load %arg13[%c0_25, %c0_26] : memref<128x64xbf16, #tpu.memory_space<vmem>>, vector<128x64xbf16>
    %c0_27 = arith.constant 0 : index
    %c0_28 = arith.constant 0 : index
    %16 = vector.load %arg14[%c0_27, %c0_28] : memref<1x64xf32, #tpu.memory_space<vmem>>, vector<1x64xf32>
    %17 = arith.mulf %2, %2 : vector<8x64xf32>
    %cst = arith.constant dense<0.000000e+00> : vector<8xf32>
    %18 = vector.multi_reduction <add>, %17, %cst [1] : vector<8x64xf32> to vector<8xf32>
    %19 = vector.shape_cast %18 : vector<8xf32> to vector<8x1xf32>
    %cst_29 = arith.constant 6.400000e+01 : f32
    %20 = vector.broadcast %cst_29 : f32 to vector<8x1xf32>
    %21 = arith.divf %19, %20 : vector<8x1xf32>
    %cst_30 = arith.constant 9.99999997E-7 : f32
    %22 = vector.broadcast %cst_30 : f32 to vector<8x1xf32>
    %23 = arith.addf %21, %22 : vector<8x1xf32>
    %24 = math.rsqrt %23 : vector<8x1xf32>
    %25 = vector.broadcast %24 : vector<8x1xf32> to vector<8x64xf32>
    %26 = arith.mulf %2, %25 : vector<8x64xf32>
    %cst_31 = arith.constant 1.000000e+00 : f32
    %27 = vector.broadcast %cst_31 : f32 to vector<1x64xf32>
    %28 = arith.addf %27, %7 : vector<1x64xf32>
    %29 = vector.broadcast %28 : vector<1x64xf32> to vector<8x64xf32>
    %30 = arith.mulf %26, %29 : vector<8x64xf32>
    %31 = arith.truncf %30 : vector<8x64xf32> to vector<8x64xbf16>
    %cst_32 = arith.constant dense<0.000000e+00> : vector<8x128xf32>
    %32 = tpu.matmul %31, %8, %cst_32 {dimension_numbers = #tpu.dot_dimension_numbers<[1], [0], [0], [1], [0, 0, 1, 1], [], []>} : vector<8x64xbf16>, vector<64x128xbf16>, vector<8x128xf32> -> vector<8x128xf32>
    %33 = tpu.iota {dimensions = array<i32: 0>} : vector<8x8xi32>
    %34 = tpu.iota {dimensions = array<i32: 1>} : vector<8x8xi32>
    %35 = arith.cmpi sle, %34, %33 : vector<8x8xi32>
    %c0_i32 = arith.constant 0 : i32
    %36 = vector.broadcast %c0_i32 : i32 to vector<1x8xi32>
    %37 = arith.cmpi sgt, %4, %36 : vector<1x8xi32>
    %38 = vector.broadcast %37 : vector<1x8xi1> to vector<8x8xi1>
    %39 = arith.andi %35, %38 : vector<8x8xi1>
    %40 = vector.extract_strided_slice %32 {offsets = [0, 64], sizes = [8, 16], strides = [1, 1]} : vector<8x128xf32> to vector<8x16xf32>
    %41 = vector.extract_strided_slice %32 {offsets = [0, 96], sizes = [8, 16], strides = [1, 1]} : vector<8x128xf32> to vector<8x16xf32>
    %42 = arith.mulf %40, %40 : vector<8x16xf32>
    %cst_33 = arith.constant dense<0.000000e+00> : vector<8xf32>
    %43 = vector.multi_reduction <add>, %42, %cst_33 [1] : vector<8x16xf32> to vector<8xf32>
    %44 = vector.shape_cast %43 : vector<8xf32> to vector<8x1xf32>
    %cst_34 = arith.constant 1.600000e+01 : f32
    %45 = vector.broadcast %cst_34 : f32 to vector<8x1xf32>
    %46 = arith.divf %44, %45 : vector<8x1xf32>
    %cst_35 = arith.constant 9.99999997E-7 : f32
    %47 = vector.broadcast %cst_35 : f32 to vector<8x1xf32>
    %48 = arith.addf %46, %47 : vector<8x1xf32>
    %49 = math.rsqrt %48 : vector<8x1xf32>
    %50 = vector.broadcast %49 : vector<8x1xf32> to vector<8x16xf32>
    %51 = arith.mulf %40, %50 : vector<8x16xf32>
    %cst_36 = arith.constant 1.000000e+00 : f32
    %52 = vector.broadcast %cst_36 : f32 to vector<1x16xf32>
    %53 = arith.addf %52, %10 : vector<1x16xf32>
    %54 = vector.broadcast %53 : vector<1x16xf32> to vector<8x16xf32>
    %55 = arith.mulf %51, %54 : vector<8x16xf32>
    %cst_37 = arith.constant 1.000000e+00 : f32
    %56 = vector.broadcast %cst_37 : f32 to vector<8x16xf32>
    %57 = arith.mulf %55, %56 : vector<8x16xf32>
    %58 = vector.extract_strided_slice %57 {offsets = [0, 0], sizes = [8, 8], strides = [1, 1]} : vector<8x16xf32> to vector<8x8xf32>
    %59 = vector.extract_strided_slice %57 {offsets = [0, 8], sizes = [8, 8], strides = [1, 1]} : vector<8x16xf32> to vector<8x8xf32>
    %60 = arith.mulf %58, %5 : vector<8x8xf32>
    %61 = arith.mulf %59, %6 : vector<8x8xf32>
    %62 = arith.subf %60, %61 : vector<8x8xf32>
    %63 = arith.mulf %59, %5 : vector<8x8xf32>
    %64 = arith.mulf %58, %6 : vector<8x8xf32>
    %65 = arith.addf %63, %64 : vector<8x8xf32>
    %66 = tpu.concatenate %62, %65 in 1 : vector<8x8xf32>, vector<8x8xf32> -> vector<8x16xf32>
    %67 = arith.truncf %66 : vector<8x16xf32> to vector<8x16xbf16>
    %68 = arith.truncf %41 : vector<8x16xf32> to vector<8x16xbf16>
    %69 = vector.extract_strided_slice %32 {offsets = [0, 0], sizes = [8, 16], strides = [1, 1]} : vector<8x128xf32> to vector<8x16xf32>
    %70 = arith.mulf %69, %69 : vector<8x16xf32>
    %cst_38 = arith.constant dense<0.000000e+00> : vector<8xf32>
    %71 = vector.multi_reduction <add>, %70, %cst_38 [1] : vector<8x16xf32> to vector<8xf32>
    %72 = vector.shape_cast %71 : vector<8xf32> to vector<8x1xf32>
    %cst_39 = arith.constant 1.600000e+01 : f32
    %73 = vector.broadcast %cst_39 : f32 to vector<8x1xf32>
    %74 = arith.divf %72, %73 : vector<8x1xf32>
    %cst_40 = arith.constant 9.99999997E-7 : f32
    %75 = vector.broadcast %cst_40 : f32 to vector<8x1xf32>
    %76 = arith.addf %74, %75 : vector<8x1xf32>
    %77 = math.rsqrt %76 : vector<8x1xf32>
    %78 = vector.broadcast %77 : vector<8x1xf32> to vector<8x16xf32>
    %79 = arith.mulf %69, %78 : vector<8x16xf32>
    %cst_41 = arith.constant 1.000000e+00 : f32
    %80 = vector.broadcast %cst_41 : f32 to vector<1x16xf32>
    %81 = arith.addf %80, %9 : vector<1x16xf32>
    %82 = vector.broadcast %81 : vector<1x16xf32> to vector<8x16xf32>
    %83 = arith.mulf %79, %82 : vector<8x16xf32>
    %cst_42 = arith.constant 2.500000e-01 : f32
    %84 = vector.broadcast %cst_42 : f32 to vector<8x16xf32>
    %85 = arith.mulf %83, %84 : vector<8x16xf32>
    %86 = vector.extract_strided_slice %85 {offsets = [0, 0], sizes = [8, 8], strides = [1, 1]} : vector<8x16xf32> to vector<8x8xf32>
    %87 = vector.extract_strided_slice %85 {offsets = [0, 8], sizes = [8, 8], strides = [1, 1]} : vector<8x16xf32> to vector<8x8xf32>
    %88 = arith.mulf %86, %5 : vector<8x8xf32>
    %89 = arith.mulf %87, %6 : vector<8x8xf32>
    %90 = arith.subf %88, %89 : vector<8x8xf32>
    %91 = arith.mulf %87, %5 : vector<8x8xf32>
    %92 = arith.mulf %86, %6 : vector<8x8xf32>
    %93 = arith.addf %91, %92 : vector<8x8xf32>
    %94 = tpu.concatenate %90, %93 in 1 : vector<8x8xf32>, vector<8x8xf32> -> vector<8x16xf32>
    %95 = arith.truncf %94 : vector<8x16xf32> to vector<8x16xbf16>
    %cst_43 = arith.constant dense<0.000000e+00> : vector<8x8xf32>
    %96 = tpu.matmul %95, %67, %cst_43 {dimension_numbers = #tpu.dot_dimension_numbers<[1], [1], [0], [0], [0, 0, 1, 0], [], []>} : vector<8x16xbf16>, vector<8x16xbf16>, vector<8x8xf32> -> vector<8x8xf32>
    %cst_44 = arith.constant -1.000000e+30 : f32
    %97 = vector.broadcast %cst_44 : f32 to vector<8x8xf32>
    %98 = arith.select %39, %96, %97 : vector<8x8xi1>, vector<8x8xf32>
    %cst_45 = arith.constant dense<0xFF800000> : vector<8xf32>
    %99 = vector.multi_reduction <maximumf>, %98, %cst_45 [1] : vector<8x8xf32> to vector<8xf32>
    %100 = vector.shape_cast %99 : vector<8xf32> to vector<8x1xf32>
    %101 = vector.broadcast %100 : vector<8x1xf32> to vector<8x8xf32>
    %102 = arith.subf %98, %101 : vector<8x8xf32>
    %103 = math.exp %102 : vector<8x8xf32>
    %cst_46 = arith.constant dense<0.000000e+00> : vector<8xf32>
    %104 = vector.multi_reduction <add>, %103, %cst_46 [1] : vector<8x8xf32> to vector<8xf32>
    %105 = vector.shape_cast %104 : vector<8xf32> to vector<8x1xf32>
    %106 = tpu.reciprocal %105 {approx = true} : vector<8x1xf32> -> vector<8x1xf32>
    %107 = vector.broadcast %106 : vector<8x1xf32> to vector<8x8xf32>
    %108 = arith.mulf %103, %107 : vector<8x8xf32>
    %109 = arith.truncf %108 : vector<8x8xf32> to vector<8x8xbf16>
    %cst_47 = arith.constant dense<0.000000e+00> : vector<8x16xf32>
    %110 = tpu.matmul %109, %68, %cst_47 {dimension_numbers = #tpu.dot_dimension_numbers<[1], [0], [0], [1], [0, 0, 1, 1], [], []>} : vector<8x8xbf16>, vector<8x16xbf16>, vector<8x16xf32> -> vector<8x16xf32>
    %111 = vector.extract_strided_slice %32 {offsets = [0, 16], sizes = [8, 16], strides = [1, 1]} : vector<8x128xf32> to vector<8x16xf32>
    %112 = arith.mulf %111, %111 : vector<8x16xf32>
    %cst_48 = arith.constant dense<0.000000e+00> : vector<8xf32>
    %113 = vector.multi_reduction <add>, %112, %cst_48 [1] : vector<8x16xf32> to vector<8xf32>
    %114 = vector.shape_cast %113 : vector<8xf32> to vector<8x1xf32>
    %cst_49 = arith.constant 1.600000e+01 : f32
    %115 = vector.broadcast %cst_49 : f32 to vector<8x1xf32>
    %116 = arith.divf %114, %115 : vector<8x1xf32>
    %cst_50 = arith.constant 9.99999997E-7 : f32
    %117 = vector.broadcast %cst_50 : f32 to vector<8x1xf32>
    %118 = arith.addf %116, %117 : vector<8x1xf32>
    %119 = math.rsqrt %118 : vector<8x1xf32>
    %120 = vector.broadcast %119 : vector<8x1xf32> to vector<8x16xf32>
    %121 = arith.mulf %111, %120 : vector<8x16xf32>
    %cst_51 = arith.constant 1.000000e+00 : f32
    %122 = vector.broadcast %cst_51 : f32 to vector<1x16xf32>
    %123 = arith.addf %122, %9 : vector<1x16xf32>
    %124 = vector.broadcast %123 : vector<1x16xf32> to vector<8x16xf32>
    %125 = arith.mulf %121, %124 : vector<8x16xf32>
    %cst_52 = arith.constant 2.500000e-01 : f32
    %126 = vector.broadcast %cst_52 : f32 to vector<8x16xf32>
    %127 = arith.mulf %125, %126 : vector<8x16xf32>
    %128 = vector.extract_strided_slice %127 {offsets = [0, 0], sizes = [8, 8], strides = [1, 1]} : vector<8x16xf32> to vector<8x8xf32>
    %129 = vector.extract_strided_slice %127 {offsets = [0, 8], sizes = [8, 8], strides = [1, 1]} : vector<8x16xf32> to vector<8x8xf32>
    %130 = arith.mulf %128, %5 : vector<8x8xf32>
    %131 = arith.mulf %129, %6 : vector<8x8xf32>
    %132 = arith.subf %130, %131 : vector<8x8xf32>
    %133 = arith.mulf %129, %5 : vector<8x8xf32>
    %134 = arith.mulf %128, %6 : vector<8x8xf32>
    %135 = arith.addf %133, %134 : vector<8x8xf32>
    %136 = tpu.concatenate %132, %135 in 1 : vector<8x8xf32>, vector<8x8xf32> -> vector<8x16xf32>
    %137 = arith.truncf %136 : vector<8x16xf32> to vector<8x16xbf16>
    %cst_53 = arith.constant dense<0.000000e+00> : vector<8x8xf32>
    %138 = tpu.matmul %137, %67, %cst_53 {dimension_numbers = #tpu.dot_dimension_numbers<[1], [1], [0], [0], [0, 0, 1, 0], [], []>} : vector<8x16xbf16>, vector<8x16xbf16>, vector<8x8xf32> -> vector<8x8xf32>
    %cst_54 = arith.constant -1.000000e+30 : f32
    %139 = vector.broadcast %cst_54 : f32 to vector<8x8xf32>
    %140 = arith.select %39, %138, %139 : vector<8x8xi1>, vector<8x8xf32>
    %cst_55 = arith.constant dense<0xFF800000> : vector<8xf32>
    %141 = vector.multi_reduction <maximumf>, %140, %cst_55 [1] : vector<8x8xf32> to vector<8xf32>
    %142 = vector.shape_cast %141 : vector<8xf32> to vector<8x1xf32>
    %143 = vector.broadcast %142 : vector<8x1xf32> to vector<8x8xf32>
    %144 = arith.subf %140, %143 : vector<8x8xf32>
    %145 = math.exp %144 : vector<8x8xf32>
    %cst_56 = arith.constant dense<0.000000e+00> : vector<8xf32>
    %146 = vector.multi_reduction <add>, %145, %cst_56 [1] : vector<8x8xf32> to vector<8xf32>
    %147 = vector.shape_cast %146 : vector<8xf32> to vector<8x1xf32>
    %148 = tpu.reciprocal %147 {approx = true} : vector<8x1xf32> -> vector<8x1xf32>
    %149 = vector.broadcast %148 : vector<8x1xf32> to vector<8x8xf32>
    %150 = arith.mulf %145, %149 : vector<8x8xf32>
    %151 = arith.truncf %150 : vector<8x8xf32> to vector<8x8xbf16>
    %cst_57 = arith.constant dense<0.000000e+00> : vector<8x16xf32>
    %152 = tpu.matmul %151, %68, %cst_57 {dimension_numbers = #tpu.dot_dimension_numbers<[1], [0], [0], [1], [0, 0, 1, 1], [], []>} : vector<8x8xbf16>, vector<8x16xbf16>, vector<8x16xf32> -> vector<8x16xf32>
    %153 = vector.extract_strided_slice %32 {offsets = [0, 80], sizes = [8, 16], strides = [1, 1]} : vector<8x128xf32> to vector<8x16xf32>
    %154 = vector.extract_strided_slice %32 {offsets = [0, 112], sizes = [8, 16], strides = [1, 1]} : vector<8x128xf32> to vector<8x16xf32>
    %155 = arith.mulf %153, %153 : vector<8x16xf32>
    %cst_58 = arith.constant dense<0.000000e+00> : vector<8xf32>
    %156 = vector.multi_reduction <add>, %155, %cst_58 [1] : vector<8x16xf32> to vector<8xf32>
    %157 = vector.shape_cast %156 : vector<8xf32> to vector<8x1xf32>
    %cst_59 = arith.constant 1.600000e+01 : f32
    %158 = vector.broadcast %cst_59 : f32 to vector<8x1xf32>
    %159 = arith.divf %157, %158 : vector<8x1xf32>
    %cst_60 = arith.constant 9.99999997E-7 : f32
    %160 = vector.broadcast %cst_60 : f32 to vector<8x1xf32>
    %161 = arith.addf %159, %160 : vector<8x1xf32>
    %162 = math.rsqrt %161 : vector<8x1xf32>
    %163 = vector.broadcast %162 : vector<8x1xf32> to vector<8x16xf32>
    %164 = arith.mulf %153, %163 : vector<8x16xf32>
    %cst_61 = arith.constant 1.000000e+00 : f32
    %165 = vector.broadcast %cst_61 : f32 to vector<1x16xf32>
    %166 = arith.addf %165, %10 : vector<1x16xf32>
    %167 = vector.broadcast %166 : vector<1x16xf32> to vector<8x16xf32>
    %168 = arith.mulf %164, %167 : vector<8x16xf32>
    %cst_62 = arith.constant 1.000000e+00 : f32
    %169 = vector.broadcast %cst_62 : f32 to vector<8x16xf32>
    %170 = arith.mulf %168, %169 : vector<8x16xf32>
    %171 = vector.extract_strided_slice %170 {offsets = [0, 0], sizes = [8, 8], strides = [1, 1]} : vector<8x16xf32> to vector<8x8xf32>
    %172 = vector.extract_strided_slice %170 {offsets = [0, 8], sizes = [8, 8], strides = [1, 1]} : vector<8x16xf32> to vector<8x8xf32>
    %173 = arith.mulf %171, %5 : vector<8x8xf32>
    %174 = arith.mulf %172, %6 : vector<8x8xf32>
    %175 = arith.subf %173, %174 : vector<8x8xf32>
    %176 = arith.mulf %172, %5 : vector<8x8xf32>
    %177 = arith.mulf %171, %6 : vector<8x8xf32>
    %178 = arith.addf %176, %177 : vector<8x8xf32>
    %179 = tpu.concatenate %175, %178 in 1 : vector<8x8xf32>, vector<8x8xf32> -> vector<8x16xf32>
    %180 = arith.truncf %179 : vector<8x16xf32> to vector<8x16xbf16>
    %181 = arith.truncf %154 : vector<8x16xf32> to vector<8x16xbf16>
    %182 = vector.extract_strided_slice %32 {offsets = [0, 32], sizes = [8, 16], strides = [1, 1]} : vector<8x128xf32> to vector<8x16xf32>
    %183 = arith.mulf %182, %182 : vector<8x16xf32>
    %cst_63 = arith.constant dense<0.000000e+00> : vector<8xf32>
    %184 = vector.multi_reduction <add>, %183, %cst_63 [1] : vector<8x16xf32> to vector<8xf32>
    %185 = vector.shape_cast %184 : vector<8xf32> to vector<8x1xf32>
    %cst_64 = arith.constant 1.600000e+01 : f32
    %186 = vector.broadcast %cst_64 : f32 to vector<8x1xf32>
    %187 = arith.divf %185, %186 : vector<8x1xf32>
    %cst_65 = arith.constant 9.99999997E-7 : f32
    %188 = vector.broadcast %cst_65 : f32 to vector<8x1xf32>
    %189 = arith.addf %187, %188 : vector<8x1xf32>
    %190 = math.rsqrt %189 : vector<8x1xf32>
    %191 = vector.broadcast %190 : vector<8x1xf32> to vector<8x16xf32>
    %192 = arith.mulf %182, %191 : vector<8x16xf32>
    %cst_66 = arith.constant 1.000000e+00 : f32
    %193 = vector.broadcast %cst_66 : f32 to vector<1x16xf32>
    %194 = arith.addf %193, %9 : vector<1x16xf32>
    %195 = vector.broadcast %194 : vector<1x16xf32> to vector<8x16xf32>
    %196 = arith.mulf %192, %195 : vector<8x16xf32>
    %cst_67 = arith.constant 2.500000e-01 : f32
    %197 = vector.broadcast %cst_67 : f32 to vector<8x16xf32>
    %198 = arith.mulf %196, %197 : vector<8x16xf32>
    %199 = vector.extract_strided_slice %198 {offsets = [0, 0], sizes = [8, 8], strides = [1, 1]} : vector<8x16xf32> to vector<8x8xf32>
    %200 = vector.extract_strided_slice %198 {offsets = [0, 8], sizes = [8, 8], strides = [1, 1]} : vector<8x16xf32> to vector<8x8xf32>
    %201 = arith.mulf %199, %5 : vector<8x8xf32>
    %202 = arith.mulf %200, %6 : vector<8x8xf32>
    %203 = arith.subf %201, %202 : vector<8x8xf32>
    %204 = arith.mulf %200, %5 : vector<8x8xf32>
    %205 = arith.mulf %199, %6 : vector<8x8xf32>
    %206 = arith.addf %204, %205 : vector<8x8xf32>
    %207 = tpu.concatenate %203, %206 in 1 : vector<8x8xf32>, vector<8x8xf32> -> vector<8x16xf32>
    %208 = arith.truncf %207 : vector<8x16xf32> to vector<8x16xbf16>
    %cst_68 = arith.constant dense<0.000000e+00> : vector<8x8xf32>
    %209 = tpu.matmul %208, %180, %cst_68 {dimension_numbers = #tpu.dot_dimension_numbers<[1], [1], [0], [0], [0, 0, 1, 0], [], []>} : vector<8x16xbf16>, vector<8x16xbf16>, vector<8x8xf32> -> vector<8x8xf32>
    %cst_69 = arith.constant -1.000000e+30 : f32
    %210 = vector.broadcast %cst_69 : f32 to vector<8x8xf32>
    %211 = arith.select %39, %209, %210 : vector<8x8xi1>, vector<8x8xf32>
    %cst_70 = arith.constant dense<0xFF800000> : vector<8xf32>
    %212 = vector.multi_reduction <maximumf>, %211, %cst_70 [1] : vector<8x8xf32> to vector<8xf32>
    %213 = vector.shape_cast %212 : vector<8xf32> to vector<8x1xf32>
    %214 = vector.broadcast %213 : vector<8x1xf32> to vector<8x8xf32>
    %215 = arith.subf %211, %214 : vector<8x8xf32>
    %216 = math.exp %215 : vector<8x8xf32>
    %cst_71 = arith.constant dense<0.000000e+00> : vector<8xf32>
    %217 = vector.multi_reduction <add>, %216, %cst_71 [1] : vector<8x8xf32> to vector<8xf32>
    %218 = vector.shape_cast %217 : vector<8xf32> to vector<8x1xf32>
    %219 = tpu.reciprocal %218 {approx = true} : vector<8x1xf32> -> vector<8x1xf32>
    %220 = vector.broadcast %219 : vector<8x1xf32> to vector<8x8xf32>
    %221 = arith.mulf %216, %220 : vector<8x8xf32>
    %222 = arith.truncf %221 : vector<8x8xf32> to vector<8x8xbf16>
    %cst_72 = arith.constant dense<0.000000e+00> : vector<8x16xf32>
    %223 = tpu.matmul %222, %181, %cst_72 {dimension_numbers = #tpu.dot_dimension_numbers<[1], [0], [0], [1], [0, 0, 1, 1], [], []>} : vector<8x8xbf16>, vector<8x16xbf16>, vector<8x16xf32> -> vector<8x16xf32>
    %224 = vector.extract_strided_slice %32 {offsets = [0, 48], sizes = [8, 16], strides = [1, 1]} : vector<8x128xf32> to vector<8x16xf32>
    %225 = arith.mulf %224, %224 : vector<8x16xf32>
    %cst_73 = arith.constant dense<0.000000e+00> : vector<8xf32>
    %226 = vector.multi_reduction <add>, %225, %cst_73 [1] : vector<8x16xf32> to vector<8xf32>
    %227 = vector.shape_cast %226 : vector<8xf32> to vector<8x1xf32>
    %cst_74 = arith.constant 1.600000e+01 : f32
    %228 = vector.broadcast %cst_74 : f32 to vector<8x1xf32>
    %229 = arith.divf %227, %228 : vector<8x1xf32>
    %cst_75 = arith.constant 9.99999997E-7 : f32
    %230 = vector.broadcast %cst_75 : f32 to vector<8x1xf32>
    %231 = arith.addf %229, %230 : vector<8x1xf32>
    %232 = math.rsqrt %231 : vector<8x1xf32>
    %233 = vector.broadcast %232 : vector<8x1xf32> to vector<8x16xf32>
    %234 = arith.mulf %224, %233 : vector<8x16xf32>
    %cst_76 = arith.constant 1.000000e+00 : f32
    %235 = vector.broadcast %cst_76 : f32 to vector<1x16xf32>
    %236 = arith.addf %235, %9 : vector<1x16xf32>
    %237 = vector.broadcast %236 : vector<1x16xf32> to vector<8x16xf32>
    %238 = arith.mulf %234, %237 : vector<8x16xf32>
    %cst_77 = arith.constant 2.500000e-01 : f32
    %239 = vector.broadcast %cst_77 : f32 to vector<8x16xf32>
    %240 = arith.mulf %238, %239 : vector<8x16xf32>
    %241 = vector.extract_strided_slice %240 {offsets = [0, 0], sizes = [8, 8], strides = [1, 1]} : vector<8x16xf32> to vector<8x8xf32>
    %242 = vector.extract_strided_slice %240 {offsets = [0, 8], sizes = [8, 8], strides = [1, 1]} : vector<8x16xf32> to vector<8x8xf32>
    %243 = arith.mulf %241, %5 : vector<8x8xf32>
    %244 = arith.mulf %242, %6 : vector<8x8xf32>
    %245 = arith.subf %243, %244 : vector<8x8xf32>
    %246 = arith.mulf %242, %5 : vector<8x8xf32>
    %247 = arith.mulf %241, %6 : vector<8x8xf32>
    %248 = arith.addf %246, %247 : vector<8x8xf32>
    %249 = tpu.concatenate %245, %248 in 1 : vector<8x8xf32>, vector<8x8xf32> -> vector<8x16xf32>
    %250 = arith.truncf %249 : vector<8x16xf32> to vector<8x16xbf16>
    %cst_78 = arith.constant dense<0.000000e+00> : vector<8x8xf32>
    %251 = tpu.matmul %250, %180, %cst_78 {dimension_numbers = #tpu.dot_dimension_numbers<[1], [1], [0], [0], [0, 0, 1, 0], [], []>} : vector<8x16xbf16>, vector<8x16xbf16>, vector<8x8xf32> -> vector<8x8xf32>
    %cst_79 = arith.constant -1.000000e+30 : f32
    %252 = vector.broadcast %cst_79 : f32 to vector<8x8xf32>
    %253 = arith.select %39, %251, %252 : vector<8x8xi1>, vector<8x8xf32>
    %cst_80 = arith.constant dense<0xFF800000> : vector<8xf32>
    %254 = vector.multi_reduction <maximumf>, %253, %cst_80 [1] : vector<8x8xf32> to vector<8xf32>
    %255 = vector.shape_cast %254 : vector<8xf32> to vector<8x1xf32>
    %256 = vector.broadcast %255 : vector<8x1xf32> to vector<8x8xf32>
    %257 = arith.subf %253, %256 : vector<8x8xf32>
    %258 = math.exp %257 : vector<8x8xf32>
    %cst_81 = arith.constant dense<0.000000e+00> : vector<8xf32>
    %259 = vector.multi_reduction <add>, %258, %cst_81 [1] : vector<8x8xf32> to vector<8xf32>
    %260 = vector.shape_cast %259 : vector<8xf32> to vector<8x1xf32>
    %261 = tpu.reciprocal %260 {approx = true} : vector<8x1xf32> -> vector<8x1xf32>
    %262 = vector.broadcast %261 : vector<8x1xf32> to vector<8x8xf32>
    %263 = arith.mulf %258, %262 : vector<8x8xf32>
    %264 = arith.truncf %263 : vector<8x8xf32> to vector<8x8xbf16>
    %cst_82 = arith.constant dense<0.000000e+00> : vector<8x16xf32>
    %265 = tpu.matmul %264, %181, %cst_82 {dimension_numbers = #tpu.dot_dimension_numbers<[1], [0], [0], [1], [0, 0, 1, 1], [], []>} : vector<8x8xbf16>, vector<8x16xbf16>, vector<8x16xf32> -> vector<8x16xf32>
    %266 = tpu.concatenate %110, %152, %223, %265 in 1 : vector<8x16xf32>, vector<8x16xf32>, vector<8x16xf32>, vector<8x16xf32> -> vector<8x64xf32>
    %267 = arith.truncf %266 : vector<8x64xf32> to vector<8x64xbf16>
    %cst_83 = arith.constant dense<0.000000e+00> : vector<8x64xf32>
    %268 = tpu.matmul %267, %11, %cst_83 {dimension_numbers = #tpu.dot_dimension_numbers<[1], [0], [0], [1], [0, 0, 1, 1], [], []>} : vector<8x64xbf16>, vector<64x64xbf16>, vector<8x64xf32> -> vector<8x64xf32>
    %269 = arith.mulf %268, %268 : vector<8x64xf32>
    %cst_84 = arith.constant dense<0.000000e+00> : vector<8xf32>
    %270 = vector.multi_reduction <add>, %269, %cst_84 [1] : vector<8x64xf32> to vector<8xf32>
    %271 = vector.shape_cast %270 : vector<8xf32> to vector<8x1xf32>
    %cst_85 = arith.constant 6.400000e+01 : f32
    %272 = vector.broadcast %cst_85 : f32 to vector<8x1xf32>
    %273 = arith.divf %271, %272 : vector<8x1xf32>
    %cst_86 = arith.constant 9.99999997E-7 : f32
    %274 = vector.broadcast %cst_86 : f32 to vector<8x1xf32>
    %275 = arith.addf %273, %274 : vector<8x1xf32>
    %276 = math.rsqrt %275 : vector<8x1xf32>
    %277 = vector.broadcast %276 : vector<8x1xf32> to vector<8x64xf32>
    %278 = arith.mulf %268, %277 : vector<8x64xf32>
    %cst_87 = arith.constant 1.000000e+00 : f32
    %279 = vector.broadcast %cst_87 : f32 to vector<1x64xf32>
    %280 = arith.addf %279, %12 : vector<1x64xf32>
    %281 = vector.broadcast %280 : vector<1x64xf32> to vector<8x64xf32>
    %282 = arith.mulf %278, %281 : vector<8x64xf32>
    %283 = arith.addf %2, %282 : vector<8x64xf32>
    %284 = arith.mulf %283, %283 : vector<8x64xf32>
    %cst_88 = arith.constant dense<0.000000e+00> : vector<8xf32>
    %285 = vector.multi_reduction <add>, %284, %cst_88 [1] : vector<8x64xf32> to vector<8xf32>
    %286 = vector.shape_cast %285 : vector<8xf32> to vector<8x1xf32>
    %cst_89 = arith.constant 6.400000e+01 : f32
    %287 = vector.broadcast %cst_89 : f32 to vector<8x1xf32>
    %288 = arith.divf %286, %287 : vector<8x1xf32>
    %cst_90 = arith.constant 9.99999997E-7 : f32
    %289 = vector.broadcast %cst_90 : f32 to vector<8x1xf32>
    %290 = arith.addf %288, %289 : vector<8x1xf32>
    %291 = math.rsqrt %290 : vector<8x1xf32>
    %292 = vector.broadcast %291 : vector<8x1xf32> to vector<8x64xf32>
    %293 = arith.mulf %283, %292 : vector<8x64xf32>
    %cst_91 = arith.constant 1.000000e+00 : f32
    %294 = vector.broadcast %cst_91 : f32 to vector<1x64xf32>
    %295 = arith.addf %294, %13 : vector<1x64xf32>
    %296 = vector.broadcast %295 : vector<1x64xf32> to vector<8x64xf32>
    %297 = arith.mulf %293, %296 : vector<8x64xf32>
    %298 = arith.truncf %297 : vector<8x64xf32> to vector<8x64xbf16>
    %cst_92 = arith.constant dense<0.000000e+00> : vector<8x256xf32>
    %299 = tpu.matmul %298, %14, %cst_92 {dimension_numbers = #tpu.dot_dimension_numbers<[1], [0], [0], [1], [0, 0, 1, 1], [], []>} : vector<8x64xbf16>, vector<64x256xbf16>, vector<8x256xf32> -> vector<8x256xf32>
    %300 = vector.extract_strided_slice %299 {offsets = [0, 0], sizes = [8, 128], strides = [1, 1]} : vector<8x256xf32> to vector<8x128xf32>
    %301 = arith.mulf %300, %300 : vector<8x128xf32>
    %302 = arith.mulf %300, %301 : vector<8x128xf32>
    %cst_93 = arith.constant 4.471500e-02 : f32
    %303 = vector.broadcast %cst_93 : f32 to vector<8x128xf32>
    %304 = arith.mulf %303, %302 : vector<8x128xf32>
    %305 = arith.addf %300, %304 : vector<8x128xf32>
    %cst_94 = arith.constant 0.797884583 : f32
    %306 = vector.broadcast %cst_94 : f32 to vector<8x128xf32>
    %307 = arith.mulf %306, %305 : vector<8x128xf32>
    %308 = math.tanh %307 : vector<8x128xf32>
    %cst_95 = arith.constant 1.000000e+00 : f32
    %309 = vector.broadcast %cst_95 : f32 to vector<8x128xf32>
    %310 = arith.addf %309, %308 : vector<8x128xf32>
    %cst_96 = arith.constant 5.000000e-01 : f32
    %311 = vector.broadcast %cst_96 : f32 to vector<8x128xf32>
    %312 = arith.mulf %311, %310 : vector<8x128xf32>
    %313 = arith.mulf %300, %312 : vector<8x128xf32>
    %314 = vector.extract_strided_slice %299 {offsets = [0, 128], sizes = [8, 128], strides = [1, 1]} : vector<8x256xf32> to vector<8x128xf32>
    %315 = arith.mulf %313, %314 : vector<8x128xf32>
    %316 = arith.truncf %315 : vector<8x128xf32> to vector<8x128xbf16>
    %cst_97 = arith.constant dense<0.000000e+00> : vector<8x64xf32>
    %317 = tpu.matmul %316, %15, %cst_97 {dimension_numbers = #tpu.dot_dimension_numbers<[1], [0], [0], [1], [0, 0, 1, 1], [], []>} : vector<8x128xbf16>, vector<128x64xbf16>, vector<8x64xf32> -> vector<8x64xf32>
    %318 = arith.mulf %317, %317 : vector<8x64xf32>
    %cst_98 = arith.constant dense<0.000000e+00> : vector<8xf32>
    %319 = vector.multi_reduction <add>, %318, %cst_98 [1] : vector<8x64xf32> to vector<8xf32>
    %320 = vector.shape_cast %319 : vector<8xf32> to vector<8x1xf32>
    %cst_99 = arith.constant 6.400000e+01 : f32
    %321 = vector.broadcast %cst_99 : f32 to vector<8x1xf32>
    %322 = arith.divf %320, %321 : vector<8x1xf32>
    %cst_100 = arith.constant 9.99999997E-7 : f32
    %323 = vector.broadcast %cst_100 : f32 to vector<8x1xf32>
    %324 = arith.addf %322, %323 : vector<8x1xf32>
    %325 = math.rsqrt %324 : vector<8x1xf32>
    %326 = vector.broadcast %325 : vector<8x1xf32> to vector<8x64xf32>
    %327 = arith.mulf %317, %326 : vector<8x64xf32>
    %cst_101 = arith.constant 1.000000e+00 : f32
    %328 = vector.broadcast %cst_101 : f32 to vector<1x64xf32>
    %329 = arith.addf %328, %16 : vector<1x64xf32>
    %330 = vector.broadcast %329 : vector<1x64xf32> to vector<8x64xf32>
    %331 = arith.mulf %327, %330 : vector<8x64xf32>
    %332 = arith.addf %283, %331 : vector<8x64xf32>
    %c0_102 = arith.constant 0 : index
    %c0_103 = arith.constant 0 : index
    %333 = vector.load %arg15[%c0_102, %c0_103] : memref<1x64xf32, #tpu.memory_space<vmem>>, vector<1x64xf32>
    %334 = arith.mulf %332, %332 : vector<8x64xf32>
    %cst_104 = arith.constant dense<0.000000e+00> : vector<8xf32>
    %335 = vector.multi_reduction <add>, %334, %cst_104 [1] : vector<8x64xf32> to vector<8xf32>
    %336 = vector.shape_cast %335 : vector<8xf32> to vector<8x1xf32>
    %cst_105 = arith.constant 6.400000e+01 : f32
    %337 = vector.broadcast %cst_105 : f32 to vector<8x1xf32>
    %338 = arith.divf %336, %337 : vector<8x1xf32>
    %cst_106 = arith.constant 9.99999997E-7 : f32
    %339 = vector.broadcast %cst_106 : f32 to vector<8x1xf32>
    %340 = arith.addf %338, %339 : vector<8x1xf32>
    %341 = math.rsqrt %340 : vector<8x1xf32>
    %342 = vector.broadcast %341 : vector<8x1xf32> to vector<8x64xf32>
    %343 = arith.mulf %332, %342 : vector<8x64xf32>
    %cst_107 = arith.constant 1.000000e+00 : f32
    %344 = vector.broadcast %cst_107 : f32 to vector<1x64xf32>
    %345 = arith.addf %344, %333 : vector<1x64xf32>
    %346 = vector.broadcast %345 : vector<1x64xf32> to vector<8x64xf32>
    %347 = arith.mulf %343, %346 : vector<8x64xf32>
    %348 = arith.truncf %347 : vector<8x64xf32> to vector<8x64xbf16>
    %c0_108 = arith.constant 0 : index
    %c0_109 = arith.constant 0 : index
    %349 = vector.load %arg16[%c0_108, %c0_109] : memref<1x64xf32, #tpu.memory_space<vmem>>, vector<1x64xf32>
    %350 = arith.truncf %349 : vector<1x64xf32> to vector<1x64xbf16>
    %cst_110 = arith.constant dense<0.000000e+00> : vector<1x8xf32>
    %351 = tpu.matmul %350, %348, %cst_110 {dimension_numbers = #tpu.dot_dimension_numbers<[1], [1], [0], [0], [0, 0, 1, 0], [], []>} : vector<1x64xbf16>, vector<8x64xbf16>, vector<1x8xf32> -> vector<1x8xf32>
    %c0_111 = arith.constant 0 : index
    %c0_112 = arith.constant 0 : index
    %c0_113 = arith.constant 0 : index
    %352 = vector.load %arg17[%c0_111, %c0_112, %c0_113] : memref<1x1x8xf32, #tpu.memory_space<vmem>>, vector<1x1x8xf32>
    %353 = vector.shape_cast %352 : vector<1x1x8xf32> to vector<1x8xf32>
    %354 = vector.shape_cast %351 : vector<1x8xf32> to vector<1x1x8xf32>
    tpu.vector_store %arg17[%c0_111, %c0_112, %c0_113], %354 {strides = array<i32>} : memref<1x1x8xf32, #tpu.memory_space<vmem>>, vector<1x1x8xf32>,
    return
  }
  func.func @transform_0(%arg0: i32) -> (i32, i32, i32) {
    %c0_i32 = arith.constant 0 : i32
    %c0_i32_0 = arith.constant 0 : i32
    %c0_i32_1 = arith.constant 0 : i32
    return %arg0, %c0_i32, %c0_i32_0 : i32, i32, i32
  }
  func.func @transform_1(%arg0: i32) -> (i32, i32, i32) {
    %c0_i32 = arith.constant 0 : i32
    %c0_i32_0 = arith.constant 0 : i32
    %c0_i32_1 = arith.constant 0 : i32
    return %arg0, %c0_i32, %c0_i32_0 : i32, i32, i32
  }
  func.func @transform_2(%arg0: i32) -> (i32, i32) {
    %c0_i32 = arith.constant 0 : i32
    %c0_i32_0 = arith.constant 0 : i32
    %c0_i32_1 = arith.constant 0 : i32
    return %c0_i32, %c0_i32_0 : i32, i32
  }
  func.func @transform_3(%arg0: i32) -> (i32, i32) {
    %c0_i32 = arith.constant 0 : i32
    %c0_i32_0 = arith.constant 0 : i32
    %c0_i32_1 = arith.constant 0 : i32
    return %c0_i32, %c0_i32_0 : i32, i32
  }
  func.func @transform_4(%arg0: i32) -> (i32, i32) {
    %c0_i32 = arith.constant 0 : i32
    %c0_i32_0 = arith.constant 0 : i32
    %c0_i32_1 = arith.constant 0 : i32
    return %c0_i32, %c0_i32_0 : i32, i32
  }
  func.func @transform_5(%arg0: i32) -> (i32, i32) {
    %c0_i32 = arith.constant 0 : i32
    %c0_i32_0 = arith.constant 0 : i32
    %c0_i32_1 = arith.constant 0 : i32
    return %c0_i32, %c0_i32_0 : i32, i32
  }
  func.func @transform_6(%arg0: i32) -> (i32, i32) {
    %c0_i32 = arith.constant 0 : i32
    %c0_i32_0 = arith.constant 0 : i32
    %c0_i32_1 = arith.constant 0 : i32
    return %c0_i32, %c0_i32_0 : i32, i32
  }
  func.func @transform_7(%arg0: i32) -> (i32, i32) {
    %c0_i32 = arith.constant 0 : i32
    %c0_i32_0 = arith.constant 0 : i32
    %c0_i32_1 = arith.constant 0 : i32
    return %c0_i32, %c0_i32_0 : i32, i32
  }
  func.func @transform_8(%arg0: i32) -> (i32, i32) {
    %c0_i32 = arith.constant 0 : i32
    %c0_i32_0 = arith.constant 0 : i32
    %c0_i32_1 = arith.constant 0 : i32
    return %c0_i32, %c0_i32_0 : i32, i32
  }
  func.func @transform_9(%arg0: i32) -> (i32, i32) {
    %c0_i32 = arith.constant 0 : i32
    %c0_i32_0 = arith.constant 0 : i32
    %c0_i32_1 = arith.constant 0 : i32
    return %c0_i32, %c0_i32_0 : i32, i32
  }
  func.func @transform_10(%arg0: i32) -> (i32, i32) {
    %c0_i32 = arith.constant 0 : i32
    %c0_i32_0 = arith.constant 0 : i32
    %c0_i32_1 = arith.constant 0 : i32
    return %c0_i32, %c0_i32_0 : i32, i32
  }
  func.func @transform_11(%arg0: i32) -> (i32, i32) {
    %c0_i32 = arith.constant 0 : i32
    %c0_i32_0 = arith.constant 0 : i32
    %c0_i32_1 = arith.constant 0 : i32
    return %c0_i32, %c0_i32_0 : i32, i32
  }
  func.func @transform_12(%arg0: i32) -> (i32, i32) {
    %c0_i32 = arith.constant 0 : i32
    %c0_i32_0 = arith.constant 0 : i32
    %c0_i32_1 = arith.constant 0 : i32
    return %c0_i32, %c0_i32_0 : i32, i32
  }
  func.func @transform_13(%arg0: i32) -> (i32, i32) {
    %c0_i32 = arith.constant 0 : i32
    %c0_i32_0 = arith.constant 0 : i32
    %c0_i32_1 = arith.constant 0 : i32
    return %c0_i32, %c0_i32_0 : i32, i32
  }
  func.func @transform_14(%arg0: i32) -> (i32, i32) {
    %c0_i32 = arith.constant 0 : i32
    %c0_i32_0 = arith.constant 0 : i32
    %c0_i32_1 = arith.constant 0 : i32
    return %c0_i32, %c0_i32_0 : i32, i32
  }
  func.func @transform_15(%arg0: i32) -> (i32, i32) {
    %c0_i32 = arith.constant 0 : i32
    %c0_i32_0 = arith.constant 0 : i32
    %c0_i32_1 = arith.constant 0 : i32
    return %c0_i32, %c0_i32_0 : i32, i32
  }
  func.func @transform_16(%arg0: i32) -> (i32, i32, i32) {
    %c0_i32 = arith.constant 0 : i32
    %c0_i32_0 = arith.constant 0 : i32
    %c0_i32_1 = arith.constant 0 : i32
    return %arg0, %c0_i32, %c0_i32_0 : i32, i32, i32
  }
}

</mosaic_0001>

<llo_original>
// kernel: forward.2
$region0: #{forward.2}
  #allocation0 [shape = 'u32[]', space=smem, size = 0x4, offset = 0x4, fixed_abs, tag = 'smem constant byte address 0x4 - core index']
  #allocation1 [shape = 'u32[144,128]{1,0:T(1,128)}', space=vmem, size = 0x12000, scoped, tag = 'internal scratch']
  %s0 = inlined_call_operand.vmem [shape: bf16[2,8,64], index: 0, kind: input, shape index: {}]
  %s1 = inlined_call_operand.vmem [shape: s32[2,1,8], index: 1, kind: input, shape index: {}]
  %s2 = inlined_call_operand.vmem [shape: f32[8,8], index: 2, kind: input, shape index: {}]
  %s3 = inlined_call_operand.vmem [shape: f32[8,8], index: 3, kind: input, shape index: {}]
  %s4 = inlined_call_operand.vmem [shape: f32[1,64], index: 4, kind: input, shape index: {}]
  %s5 = inlined_call_operand.vmem [shape: bf16[64,128], index: 5, kind: input, shape index: {}]
  %s6 = inlined_call_operand.vmem [shape: f32[1,16], index: 6, kind: input, shape index: {}]
  %s7 = inlined_call_operand.vmem [shape: f32[1,16], index: 7, kind: input, shape index: {}]
  %s8 = inlined_call_operand.vmem [shape: bf16[64,64], index: 8, kind: input, shape index: {}]
  %s9 = inlined_call_operand.vmem [shape: f32[1,64], index: 9, kind: input, shape index: {}]
  %s10 = inlined_call_operand.vmem [shape: f32[1,64], index: 10, kind: input, shape index: {}]
  %s11 = inlined_call_operand.vmem [shape: bf16[64,256], index: 11, kind: input, shape index: {}]
  %s12 = inlined_call_operand.vmem [shape: bf16[128,64], index: 12, kind: input, shape index: {}]
  %s13 = inlined_call_operand.vmem [shape: f32[1,64], index: 13, kind: input, shape index: {}]
  %s14 = inlined_call_operand.vmem [shape: bf16[2,8,64], index: 14, kind: output, shape index: {}]
  %s15 = sld [smem:[#allocation0]]
  $region89: #{forward.2} parent=0
    _
  %s17 = ssub.s32 1, %s15
  %s18 = scalar_select 0, %s17, %s15
  loop: start=0, step=1, limit=4
  $region2: #{forward.2} parent=0 // loop_pre_header
    _
  $region3: #{forward.2} parent=0 // loop_header
    %s20 = sphi 0, %s24
    %p21 = scmp.ge.s32.totalorder %s20, 4
    %s30 = sphi 0, %s32
    %s33 = sphi 0, %s30
    %s34 = sphi 0, %s33
    %s50 = sphi 0, %s34
    %s56 = sphi 0, %s58
    %s59 = sphi 0, %s56
    %s60 = sphi 0, %s59
    %s76 = sphi 0, %s60
    %s80 = sphi 0, %s80
    %s82 = sphi 0, %s80
    %s83 = sphi 0, %s82
    %s97 = sphi 0, %s83
    %s101 = sphi 0, %s101
    %s103 = sphi 0, %s101
    %s104 = sphi 0, %s103
    %s118 = sphi 0, %s104
    %s122 = sphi 0, %s122
    %s124 = sphi 0, %s122
    %s125 = sphi 0, %s124
    %s139 = sphi 0, %s125
    %s143 = sphi 0, %s143
    %s145 = sphi 0, %s143
    %s146 = sphi 0, %s145
    %s160 = sphi 0, %s146
    %s164 = sphi 0, %s164
    %s166 = sphi 0, %s164
    %s167 = sphi 0, %s166
    %s181 = sphi 0, %s167
    %s185 = sphi 0, %s185
    %s187 = sphi 0, %s185
    %s188 = sphi 0, %s187
    %s202 = sphi 0, %s188
    %s206 = sphi 0, %s206
    %s208 = sphi 0, %s206
    %s209 = sphi 0, %s208
    %s223 = sphi 0, %s209
    %s227 = sphi 0, %s227
    %s229 = sphi 0, %s227
    %s230 = sphi 0, %s229
    %s244 = sphi 0, %s230
    %s248 = sphi 0, %s248
    %s250 = sphi 0, %s248
    %s251 = sphi 0, %s250
    %s265 = sphi 0, %s251
    %s269 = sphi 0, %s269
    %s271 = sphi 0, %s269
    %s272 = sphi 0, %s271
    %s286 = sphi 0, %s272
    %s290 = sphi 0, %s290
    %s292 = sphi 0, %s290
    %s293 = sphi 0, %s292
    %s307 = sphi 0, %s293
    %s311 = sphi 0, %s311
    %s313 = sphi 0, %s311
    %s314 = sphi 0, %s313
    %s328 = sphi 0, %s314
    %s334 = sphi 0, %s336
    %s337 = sphi 0, %s334
    %s338 = sphi 0, %s337
    %s354 = sphi 0, %s338
  $region4: #{forward.2} parent=0 // loop_header_branch
    %23 = sbr.rel (%p21) target = $region8
  $region5: #{forward.2} parent=0 // loop_body
    %s25 = ssub.s32 %s20, 1
    %s26 = ssub.s32 %s20, 2
    %s27 = sadd.s32 %s20, 1
    %s28 = ssub.s32 %s20, %s27
    %p29 = scmp.eq.s32.totalorder %s28, 0
    %s31 = sadd.s32 %s30, 1
    %s32 = scalar_select %p29, %s30, %s31
    %p35 = pneg %p29
    %p36 = scmp.eq.s32.totalorder %s20, 1
    %p37 = por %p35, %p36
    %p38 = scmp.ne.s32.totalorder %s30, %s33
    %p39 = scmp.eq.s32.totalorder %s20, 0
    %p40 = por %p38, %p39
    %p41 = scmp.ne.s32.totalorder %s30, %s33
    %p42 = scmp.eq.s32.totalorder %s25, 1
    %p43 = por %p41, %p42
    %p44 = scmp.ne.s32.totalorder %s33, %s34
    %p45 = scmp.eq.s32.totalorder %s25, 0
    %p46 = por %p44, %p45
    %p47 = scmp.ne.s32.totalorder %s33, %s34
    %p48 = scmp.eq.s32.totalorder %s26, 1
    %p49 = por %p47, %p48
    %p51 = scmp.ne.s32.totalorder %s34, %s50
    %p52 = scmp.eq.s32.totalorder %s26, 0
    %p53 = por %p51, %p52
    %s54 = ssub.s32 %s20, %s27
    %p55 = scmp.eq.s32.totalorder %s54, 0
    %s57 = sadd.s32 %s56, 1
    %s58 = scalar_select %p55, %s56, %s57
    %p61 = pneg %p55
    %p62 = scmp.eq.s32.totalorder %s20, 1
    %p63 = por %p61, %p62
    %p64 = scmp.ne.s32.totalorder %s56, %s59
    %p65 = scmp.eq.s32.totalorder %s20, 0
    %p66 = por %p64, %p65
    %p67 = scmp.ne.s32.totalorder %s56, %s59
    %p68 = scmp.eq.s32.totalorder %s25, 1
    %p69 = por %p67, %p68
    %p70 = scmp.ne.s32.totalorder %s59, %s60
    %p71 = scmp.eq.s32.totalorder %s25, 0
    %p72 = por %p70, %p71
    %p73 = scmp.ne.s32.totalorder %s59, %s60
    %p74 = scmp.eq.s32.totalorder %s26, 1
    %p75 = por %p73, %p74
    %p77 = scmp.ne.s32.totalorder %s60, %s76
    %p78 = scmp.eq.s32.totalorder %s26, 0
    %p79 = por %p77, %p78
    %s81 = sadd.s32 %s80, 1
    %p84 = scmp.eq.s32.totalorder %s20, 1
    %p85 = scmp.ne.s32.totalorder %s80, %s82
    %p86 = scmp.eq.s32.totalorder %s20, 0
    %p87 = por %p85, %p86
    %p88 = scmp.ne.s32.totalorder %s80, %s82
    %p89 = scmp.eq.s32.totalorder %s25, 1
    %p90 = por %p88, %p89
    %p91 = scmp.ne.s32.totalorder %s82, %s83
    %p92 = scmp.eq.s32.totalorder %s25, 0
    %p93 = por %p91, %p92
    %p94 = scmp.ne.s32.totalorder %s82, %s83
    %p95 = scmp.eq.s32.totalorder %s26, 1
    %p96 = por %p94, %p95
    %p98 = scmp.ne.s32.totalorder %s83, %s97
    %p99 = scmp.eq.s32.totalorder %s26, 0
    %p100 = por %p98, %p99
    %s102 = sadd.s32 %s101, 1
    %p105 = scmp.eq.s32.totalorder %s20, 1
    %p106 = scmp.ne.s32.totalorder %s101, %s103
    %p107 = scmp.eq.s32.totalorder %s20, 0
    %p108 = por %p106, %p107
    %p109 = scmp.ne.s32.totalorder %s101, %s103
    %p110 = scmp.eq.s32.totalorder %s25, 1
    %p111 = por %p109, %p110
    %p112 = scmp.ne.s32.totalorder %s103, %s104
    %p113 = scmp.eq.s32.totalorder %s25, 0
    %p114 = por %p112, %p113
    %p115 = scmp.ne.s32.totalorder %s103, %s104
    %p116 = scmp.eq.s32.totalorder %s26, 1
    %p117 = por %p115, %p116
    %p119 = scmp.ne.s32.totalorder %s104, %s118
    %p120 = scmp.eq.s32.totalorder %s26, 0
    %p121 = por %p119, %p120
    %s123 = sadd.s32 %s122, 1
    %p126 = scmp.eq.s32.totalorder %s20, 1
    %p127 = scmp.ne.s32.totalorder %s122, %s124
    %p128 = scmp.eq.s32.totalorder %s20, 0
    %p129 = por %p127, %p128
    %p130 = scmp.ne.s32.totalorder %s122, %s124
    %p131 = scmp.eq.s32.totalorder %s25, 1
    %p132 = por %p130, %p131
    %p133 = scmp.ne.s32.totalorder %s124, %s125
    %p134 = scmp.eq.s32.totalorder %s25, 0
    %p135 = por %p133, %p134
    %p136 = scmp.ne.s32.totalorder %s124, %s125
    %p137 = scmp.eq.s32.totalorder %s26, 1
    %p138 = por %p136, %p137
    %p140 = scmp.ne.s32.totalorder %s125, %s139
    %p141 = scmp.eq.s32.totalorder %s26, 0
    %p142 = por %p140, %p141
    %s144 = sadd.s32 %s143, 1
    %p147 = scmp.eq.s32.totalorder %s20, 1
    %p148 = scmp.ne.s32.totalorder %s143, %s145
    %p149 = scmp.eq.s32.totalorder %s20, 0
    %p150 = por %p148, %p149
    %p151 = scmp.ne.s32.totalorder %s143, %s145
    %p152 = scmp.eq.s32.totalorder %s25, 1
    %p153 = por %p151, %p152
    %p154 = scmp.ne.s32.totalorder %s145, %s146
    %p155 = scmp.eq.s32.totalorder %s25, 0
    %p156 = por %p154, %p155
    %p157 = scmp.ne.s32.totalorder %s145, %s146
    %p158 = scmp.eq.s32.totalorder %s26, 1
    %p159 = por %p157, %p158
    %p161 = scmp.ne.s32.totalorder %s146, %s160
    %p162 = scmp.eq.s32.totalorder %s26, 0
    %p163 = por %p161, %p162
    %s165 = sadd.s32 %s164, 1
    %p168 = scmp.eq.s32.totalorder %s20, 1
    %p169 = scmp.ne.s32.totalorder %s164, %s166
    %p170 = scmp.eq.s32.totalorder %s20, 0
    %p171 = por %p169, %p170
    %p172 = scmp.ne.s32.totalorder %s164, %s166
    %p173 = scmp.eq.s32.totalorder %s25, 1
    %p174 = por %p172, %p173
    %p175 = scmp.ne.s32.totalorder %s166, %s167
    %p176 = scmp.eq.s32.totalorder %s25, 0
    %p177 = por %p175, %p176
    %p178 = scmp.ne.s32.totalorder %s166, %s167
    %p179 = scmp.eq.s32.totalorder %s26, 1
    %p180 = por %p178, %p179
    %p182 = scmp.ne.s32.totalorder %s167, %s181
    %p183 = scmp.eq.s32.totalorder %s26, 0
    %p184 = por %p182, %p183
    %s186 = sadd.s32 %s185, 1
    %p189 = scmp.eq.s32.totalorder %s20, 1
    %p190 = scmp.ne.s32.totalorder %s185, %s187
    %p191 = scmp.eq.s32.totalorder %s20, 0
    %p192 = por %p190, %p191
    %p193 = scmp.ne.s32.totalorder %s185, %s187
    %p194 = scmp.eq.s32.totalorder %s25, 1
    %p195 = por %p193, %p194
    %p196 = scmp.ne.s32.totalorder %s187, %s188
    %p197 = scmp.eq.s32.totalorder %s25, 0
    %p198 = por %p196, %p197
    %p199 = scmp.ne.s32.totalorder %s187, %s188
    %p200 = scmp.eq.s32.totalorder %s26, 1
    %p201 = por %p199, %p200
    %p203 = scmp.ne.s32.totalorder %s188, %s202
    %p204 = scmp.eq.s32.totalorder %s26, 0
    %p205 = por %p203, %p204
    %s207 = sadd.s32 %s206, 1
    %p210 = scmp.eq.s32.totalorder %s20, 1
    %p211 = scmp.ne.s32.totalorder %s206, %s208
    %p212 = scmp.eq.s32.totalorder %s20, 0
    %p213 = por %p211, %p212
    %p214 = scmp.ne.s32.totalorder %s206, %s208
    %p215 = scmp.eq.s32.totalorder %s25, 1
    %p216 = por %p214, %p215
    %p217 = scmp.ne.s32.totalorder %s208, %s209
    %p218 = scmp.eq.s32.totalorder %s25, 0
    %p219 = por %p217, %p218
    %p220 = scmp.ne.s32.totalorder %s208, %s209
    %p221 = scmp.eq.s32.totalorder %s26, 1
    %p222 = por %p220, %p221
    %p224 = scmp.ne.s32.totalorder %s209, %s223
    %p225 = scmp.eq.s32.totalorder %s26, 0
    %p226 = por %p224, %p225
    %s228 = sadd.s32 %s227, 1
    %p231 = scmp.eq.s32.totalorder %s20, 1
    %p232 = scmp.ne.s32.totalorder %s227, %s229
    %p233 = scmp.eq.s32.totalorder %s20, 0
    %p234 = por %p232, %p233
    %p235 = scmp.ne.s32.totalorder %s227, %s229
    %p236 = scmp.eq.s32.totalorder %s25, 1
    %p237 = por %p235, %p236
    %p238 = scmp.ne.s32.totalorder %s229, %s230
    %p239 = scmp.eq.s32.totalorder %s25, 0
    %p240 = por %p238, %p239
    %p241 = scmp.ne.s32.totalorder %s229, %s230
    %p242 = scmp.eq.s32.totalorder %s26, 1
    %p243 = por %p241, %p242
    %p245 = scmp.ne.s32.totalorder %s230, %s244
    %p246 = scmp.eq.s32.totalorder %s26, 0
    %p247 = por %p245, %p246
    %s249 = sadd.s32 %s248, 1
    %p252 = scmp.eq.s32.totalorder %s20, 1
    %p253 = scmp.ne.s32.totalorder %s248, %s250
    %p254 = scmp.eq.s32.totalorder %s20, 0
    %p255 = por %p253, %p254
    %p256 = scmp.ne.s32.totalorder %s248, %s250
    %p257 = scmp.eq.s32.totalorder %s25, 1
    %p258 = por %p256, %p257
    %p259 = scmp.ne.s32.totalorder %s250, %s251
    %p260 = scmp.eq.s32.totalorder %s25, 0
    %p261 = por %p259, %p260
    %p262 = scmp.ne.s32.totalorder %s250, %s251
    %p263 = scmp.eq.s32.totalorder %s26, 1
    %p264 = por %p262, %p263
    %p266 = scmp.ne.s32.totalorder %s251, %s265
    %p267 = scmp.eq.s32.totalorder %s26, 0
    %p268 = por %p266, %p267
    %s270 = sadd.s32 %s269, 1
    %p273 = scmp.eq.s32.totalorder %s20, 1
    %p274 = scmp.ne.s32.totalorder %s269, %s271
    %p275 = scmp.eq.s32.totalorder %s20, 0
    %p276 = por %p274, %p275
    %p277 = scmp.ne.s32.totalorder %s269, %s271
    %p278 = scmp.eq.s32.totalorder %s25, 1
    %p279 = por %p277, %p278
    %p280 = scmp.ne.s32.totalorder %s271, %s272
    %p281 = scmp.eq.s32.totalorder %s25, 0
    %p282 = por %p280, %p281
    %p283 = scmp.ne.s32.totalorder %s271, %s272
    %p284 = scmp.eq.s32.totalorder %s26, 1
    %p285 = por %p283, %p284
    %p287 = scmp.ne.s32.totalorder %s272, %s286
    %p288 = scmp.eq.s32.totalorder %s26, 0
    %p289 = por %p287, %p288
    %s291 = sadd.s32 %s290, 1
    %p294 = scmp.eq.s32.totalorder %s20, 1
    %p295 = scmp.ne.s32.totalorder %s290, %s292
    %p296 = scmp.eq.s32.totalorder %s20, 0
    %p297 = por %p295, %p296
    %p298 = scmp.ne.s32.totalorder %s290, %s292
    %p299 = scmp.eq.s32.totalorder %s25, 1
    %p300 = por %p298, %p299
    %p301 = scmp.ne.s32.totalorder %s292, %s293
    %p302 = scmp.eq.s32.totalorder %s25, 0
    %p303 = por %p301, %p302
    %p304 = scmp.ne.s32.totalorder %s292, %s293
    %p305 = scmp.eq.s32.totalorder %s26, 1
    %p306 = por %p304, %p305
    %p308 = scmp.ne.s32.totalorder %s293, %s307
    %p309 = scmp.eq.s32.totalorder %s26, 0
    %p310 = por %p308, %p309
    %s312 = sadd.s32 %s311, 1
    %p315 = scmp.eq.s32.totalorder %s20, 1
    %p316 = scmp.ne.s32.totalorder %s311, %s313
    %p317 = scmp.eq.s32.totalorder %s20, 0
    %p318 = por %p316, %p317
    %p319 = scmp.ne.s32.totalorder %s311, %s313
    %p320 = scmp.eq.s32.totalorder %s25, 1
    %p321 = por %p319, %p320
    %p322 = scmp.ne.s32.totalorder %s313, %s314
    %p323 = scmp.eq.s32.totalorder %s25, 0
    %p324 = por %p322, %p323
    %p325 = scmp.ne.s32.totalorder %s313, %s314
    %p326 = scmp.eq.s32.totalorder %s26, 1
    %p327 = por %p325, %p326
    %p329 = scmp.ne.s32.totalorder %s314, %s328
    %p330 = scmp.eq.s32.totalorder %s26, 0
    %p331 = por %p329, %p330
    %s332 = ssub.s32 %s20, %s27
    %p333 = scmp.eq.s32.totalorder %s332, 0
    %s335 = sadd.s32 %s334, 1
    %s336 = scalar_select %p333, %s334, %s335
    %p339 = pneg %p333
    %p340 = scmp.eq.s32.totalorder %s20, 1
    %p341 = por %p339, %p340
    %p342 = scmp.ne.s32.totalorder %s334, %s337
    %p343 = scmp.eq.s32.totalorder %s20, 0
    %p344 = por %p342, %p343
    %p345 = scmp.ne.s32.totalorder %s334, %s337
    %p346 = scmp.eq.s32.totalorder %s25, 1
    %p347 = por %p345, %p346
    %p348 = scmp.ne.s32.totalorder %s337, %s338
    %p349 = scmp.eq.s32.totalorder %s25, 0
    %p350 = por %p348, %p349
    %p351 = scmp.ne.s32.totalorder %s337, %s338
    %p352 = scmp.eq.s32.totalorder %s26, 1
    %p353 = por %p351, %p352
    %p355 = scmp.ne.s32.totalorder %s338, %s354
    %p356 = scmp.eq.s32.totalorder %s26, 0
    %p357 = por %p355, %p356
    %p358 = scmp.le.s32.totalorder 1, %s20
    %p359 = scmp.lt.s32.totalorder %s20, 3
    %p360 = pnand %p358, %p359
    %p361 = pneg %p360
    // Predicated region
    $region9: #{forward.2} parent=5 // pred_check
      _
    $region10: #{forward.2} parent=5 // pred_check_branch
      %363 = sbr.rel (%p360) target = $region12
    $region11: #{forward.2} parent=5 // pred_region
      %s364 = ssub.s32 %s20, 1
      // Predicated region
      $region13: #{forward.2} parent=11 // pred_check
        %p365 = pneg %p93
      $region14: #{forward.2} parent=11 // pred_check_branch
        %367 = sbr.rel (%p365) target = $region16
      $region15: #{forward.2} parent=11 // pred_region
        _
      $region16: #{forward.2} parent=11 // pred_fallthru
        _
      // Predicated region
      $region17: #{forward.2} parent=11 // pred_check
        %p368 = pneg %p114
      $region18: #{forward.2} parent=11 // pred_check_branch
        %370 = sbr.rel (%p368) target = $region20
      $region19: #{forward.2} parent=11 // pred_region
        _
      $region20: #{forward.2} parent=11 // pred_fallthru
        _
      // Predicated region
      $region21: #{forward.2} parent=11 // pred_check
        %p371 = pneg %p135
      $region22: #{forward.2} parent=11 // pred_check_branch
        %373 = sbr.rel (%p371) target = $region24
      $region23: #{forward.2} parent=11 // pred_region
        _
      $region24: #{forward.2} parent=11 // pred_fallthru
        _
      // Predicated region
      $region25: #{forward.2} parent=11 // pred_check
        %p374 = pneg %p156
      $region26: #{forward.2} parent=11 // pred_check_branch
        %376 = sbr.rel (%p374) target = $region28
      $region27: #{forward.2} parent=11 // pred_region
        _
      $region28: #{forward.2} parent=11 // pred_fallthru
        _
      // Predicated region
      $region29: #{forward.2} parent=11 // pred_check
        %p377 = pneg %p177
      $region30: #{forward.2} parent=11 // pred_check_branch
        %379 = sbr.rel (%p377) target = $region32
      $region31: #{forward.2} parent=11 // pred_region
        _
      $region32: #{forward.2} parent=11 // pred_fallthru
        _
      // Predicated region
      $region33: #{forward.2} parent=11 // pred_check
        %p380 = pneg %p198
      $region34: #{forward.2} parent=11 // pred_check_branch
        %382 = sbr.rel (%p380) target = $region36
      $region35: #{forward.2} parent=11 // pred_region
        _
      $region36: #{forward.2} parent=11 // pred_fallthru
        _
      // Predicated region
      $region37: #{forward.2} parent=11 // pred_check
        %p383 = pneg %p219
      $region38: #{forward.2} parent=11 // pred_check_branch
        %385 = sbr.rel (%p383) target = $region40
      $region39: #{forward.2} parent=11 // pred_region
        _
      $region40: #{forward.2} parent=11 // pred_fallthru
        _
      // Predicated region
      $region41: #{forward.2} parent=11 // pred_check
        %p386 = pneg %p240
      $region42: #{forward.2} parent=11 // pred_check_branch
        %388 = sbr.rel (%p386) target = $region44
      $region43: #{forward.2} parent=11 // pred_region
        _
      $region44: #{forward.2} parent=11 // pred_fallthru
        _
      // Predicated region
      $region45: #{forward.2} parent=11 // pred_check
        %p389 = pneg %p261
      $region46: #{forward.2} parent=11 // pred_check_branch
        %391 = sbr.rel (%p389) target = $region48
      $region47: #{forward.2} parent=11 // pred_region
        _
      $region48: #{forward.2} parent=11 // pred_fallthru
        _
      // Predicated region
      $region49: #{forward.2} parent=11 // pred_check
        %p392 = pneg %p282
      $region50: #{forward.2} parent=11 // pred_check_branch
        %394 = sbr.rel (%p392) target = $region52
      $region51: #{forward.2} parent=11 // pred_region
        _
      $region52: #{forward.2} parent=11 // pred_fallthru
        _
      // Predicated region
      $region53: #{forward.2} parent=11 // pred_check
        %p395 = pneg %p303
      $region54: #{forward.2} parent=11 // pred_check_branch
        %397 = sbr.rel (%p395) target = $region56
      $region55: #{forward.2} parent=11 // pred_region
        _
      $region56: #{forward.2} parent=11 // pred_fallthru
        _
      // Predicated region
      $region57: #{forward.2} parent=11 // pred_check
        %p398 = pneg %p324
      $region58: #{forward.2} parent=11 // pred_check_branch
        %400 = sbr.rel (%p398) target = $region60
      $region59: #{forward.2} parent=11 // pred_region
        _
      $region60: #{forward.2} parent=11 // pred_fallthru
        _
    $region12: #{forward.2} parent=5 // pred_fallthru
      _
    %p401 = scmp.lt.s32.totalorder %s20, 2
    // Predicated region
    $region61: #{forward.2} parent=5 // pred_check
      %p402 = pneg %p401
    $region62: #{forward.2} parent=5 // pred_check_branch
      %404 = sbr.rel (%p402) target = $region64
    $region63: #{forward.2} parent=5 // pred_region
      // Predicated region
      $region65: #{forward.2} parent=63 // pred_check
        %p405 = pneg %p40
      $region66: #{forward.2} parent=63 // pred_check_branch
        %407 = sbr.rel (%p405) target = $region68
      $region67: #{forward.2} parent=63 // pred_region
        %p408 = scmp.lt.s32.totalorder %s20, 1
        %s409 = scalar_select %p408, %s20, 1
        %s410 = smul.addr %s409, 4
        %s411 = scalar_lea.vmem %s0, %s410
      $region68: #{forward.2} parent=63 // pred_fallthru
        _
      // Predicated region
      $region69: #{forward.2} parent=63 // pred_check
        %p412 = pneg %p66
      $region70: #{forward.2} parent=63 // pred_check_branch
        %414 = sbr.rel (%p412) target = $region72
      $region71: #{forward.2} parent=63 // pred_region
        %p415 = scmp.lt.s32.totalorder %s20, 1
        %s416 = scalar_select %p415, %s20, 1
        %s417 = scalar_lea.vmem %s1, %s416
      $region72: #{forward.2} parent=63 // pred_fallthru
        _
    $region64: #{forward.2} parent=5 // pred_fallthru
      _
    %p418 = scmp.le.s32.totalorder 1, %s20
    %p419 = scmp.lt.s32.totalorder %s20, 3
    %p420 = pnand %p418, %p419
    %p421 = pneg %p420
    // Predicated region
    $region73: #{forward.2} parent=5 // pred_check
      _
    $region74: #{forward.2} parent=5 // pred_check_branch
      %423 = sbr.rel (%p420) target = $region76
    $region75: #{forward.2} parent=5 // pred_region
      %s424 = ssub.s32 %s20, 1
      %p425 = scmp.lt.s32.totalorder %s25, 1
      %s426 = scalar_select %p425, %s25, 1
      %s427 = smul.addr %s426, 4
      %s428 = scalar_lea.vmem %s0, %s427
      %p429 = pneg %p46
      %p430 = pneg %p43
      %p431 = scmp.lt.s32.totalorder %s25, 1
      %s432 = scalar_select %p431, %s25, 1
      %s433 = scalar_lea.vmem %s1, %s432
      %p434 = pneg %p72
      %p435 = pneg %p69
      %p436 = pneg %p93
      %p437 = pneg %p90
      %p438 = pneg %p114
      %p439 = pneg %p111
      %p440 = pneg %p135
      %p441 = pneg %p132
      %p442 = pneg %p156
      %p443 = pneg %p153
      %p444 = pneg %p177
      %p445 = pneg %p174
      %p446 = pneg %p198
      %p447 = pneg %p195
      %p448 = pneg %p219
      %p449 = pneg %p216
      %p450 = pneg %p240
      %p451 = pneg %p237
      %p452 = pneg %p261
      %p453 = pneg %p258
      %p454 = pneg %p282
      %p455 = pneg %p279
      %p456 = pneg %p303
      %p457 = pneg %p300
      %p458 = pneg %p324
      %p459 = pneg %p321
      %p460 = pneg %p350
      %p461 = pneg %p347
      %p462 = scmp.lt.s32.totalorder %s25, 1
      %s463 = scalar_select %p462, %s25, 1
      %s464 = smul.addr %s463, 4
      %s465 = scalar_lea.vmem %s14, %s464
      %p466 = scmp.lt.s32.totalorder %s25, 1
      %s467 = scalar_select %p466, %s25, 1
      %s468 = smul.addr %s467, 4
      %s469 = scalar_lea.vmem %s0, %s468
      %p470 = scmp.lt.s32.totalorder %s25, 1
      %s471 = scalar_select %p470, %s25, 1
      %s472 = scalar_lea.vmem %s1, %s471
      %p473 = scmp.lt.s32.totalorder %s25, 1
      %s474 = scalar_select %p473, %s25, 1
      %s475 = smul.addr %s474, 4
      %s476 = scalar_lea.vmem %s14, %s475
      %v478 = vld [vmem:[%s469] sm:$0xf]
      %v479 = vunpack.c.l.bf16 %v478
      %v480 = vld [vmem:[%s472] sm:$0x1]
      %v481 = vld [vmem:[%s2] sm:$0xff]
      %v482 = vld [vmem:[%s3] sm:$0xff]
      %v483 = vld [vmem:[%s4] sm:$0x1]
      %v484 = vld [vmem:[%s5] sm:$0xf]
      %v485 = vld [vmem:[%s5 + $0x4] sm:$0xf]
      %v486 = vld [vmem:[%s5 + $0x8] sm:$0xf]
      %v487 = vld [vmem:[%s5 + $0xc] sm:$0xf]
      %v488 = vld [vmem:[%s5 + $0x10] sm:$0xf]
      %v489 = vld [vmem:[%s5 + $0x14] sm:$0xf]
      %v490 = vld [vmem:[%s5 + $0x18] sm:$0xf]
      %v491 = vld [vmem:[%s5 + $0x1c] sm:$0xf]
      %v492 = vld [vmem:[%s6] sm:$0x1]
      %v493 = vld [vmem:[%s7] sm:$0x1]
      %v494 = vld [vmem:[%s8] sm:$0xf]
      %v495 = vld [vmem:[%s8 + $0x4] sm:$0xf]
      %v496 = vld [vmem:[%s8 + $0x8] sm:$0xf]
      %v497 = vld [vmem:[%s8 + $0xc] sm:$0xf]
      %v498 = vld [vmem:[%s8 + $0x10] sm:$0xf]
      %v499 = vld [vmem:[%s8 + $0x14] sm:$0xf]
      %v500 = vld [vmem:[%s8 + $0x18] sm:$0xf]
      %v501 = vld [vmem:[%s8 + $0x1c] sm:$0xf]
      %v502 = vld [vmem:[%s9] sm:$0x1]
      %v503 = vld [vmem:[%s10] sm:$0x1]
      %v504 = vld [vmem:[%s11] sm:$0xff]
      %v505 = vld [vmem:[%s11 + $0x8] sm:$0xff]
      %v506 = vld [vmem:[%s11 + $0x10] sm:$0xff]
      %v507 = vld [vmem:[%s11 + $0x18] sm:$0xff]
      %v508 = vld [vmem:[%s11 + $0x20] sm:$0xff]
      %v509 = vld [vmem:[%s11 + $0x28] sm:$0xff]
      %v510 = vld [vmem:[%s11 + $0x30] sm:$0xff]
      %v511 = vld [vmem:[%s11 + $0x38] sm:$0xff]
      %v512 = vld [vmem:[%s12] sm:$0xf]
      %v513 = vld [vmem:[%s12 + $0x4] sm:$0xf]
      %v514 = vld [vmem:[%s12 + $0x8] sm:$0xf]
      %v515 = vld [vmem:[%s12 + $0xc] sm:$0xf]
      %v516 = vld [vmem:[%s12 + $0x10] sm:$0xf]
      %v517 = vld [vmem:[%s12 + $0x14] sm:$0xf]
      %v518 = vld [vmem:[%s12 + $0x18] sm:$0xf]
      %v519 = vld [vmem:[%s12 + $0x1c] sm:$0xf]
      %v520 = vld [vmem:[%s12 + $0x20] sm:$0xf]
      %v521 = vld [vmem:[%s12 + $0x24] sm:$0xf]
      %v522 = vld [vmem:[%s12 + $0x28] sm:$0xf]
      %v523 = vld [vmem:[%s12 + $0x2c] sm:$0xf]
      %v524 = vld [vmem:[%s12 + $0x30] sm:$0xf]
      %v525 = vld [vmem:[%s12 + $0x34] sm:$0xf]
      %v526 = vld [vmem:[%s12 + $0x38] sm:$0xf]
      %v527 = vld [vmem:[%s12 + $0x3c] sm:$0xf]
      %v528 = vld [vmem:[%s13] sm:$0x1]
      %v529 = vmul.f32 %v479, %v479
      %vm530 = vcmask 523264
      %v531 = vsel %vm530, %v529, 0.0
      %532 = vadd.xlane.f32.xlu0 %v531
      %v533 = vpop.xlane.xlu0 %532
      %v534 = vrcp.pop 64.0
      %v535 = vmul.f32 %v533, %v534
      %v536 = vadd.f32 %v535, 1e-06
      %v537 = vrsqrt.pop %v536
      %v538 = vmul.f32 %v479, %v537
      %v539 = vadd.f32 %v483, 1.0
      %v541 = vlaneseq
      %v542 = vshrl.u32 %v541, 7
      %v543 = vsub.s32 0, %v542
      %v544 = vrot.slane %v539, %v543
      %v546 = vmul.f32 %v538, %v544
      %v547 = vpack.c.bf16 %v546, %v546
      %v556 = vunpack.c.l.b16 %v484
      %v557 = vunpack.c.l.b16 %v485
      %v558 = vunpack.c.l.b16 %v486
      %v559 = vunpack.c.l.b16 %v487
      %v560 = vunpack.c.l.b16 %v488
      %v561 = vunpack.c.l.b16 %v489
      %v562 = vunpack.c.l.b16 %v490
      %v563 = vunpack.c.l.b16 %v491
      %v564 = vpack.c.b16 %v557, %v556
      %v565 = vpack.c.b16 %v559, %v558
      %v566 = vpack.c.b16 %v561, %v560
      %v567 = vpack.c.b16 %v563, %v562
      %v573 = vsel %vm530, %v547, 0
      %575 = vmatprep.subr.bf16.mxu0 0
      %576 = vmatpush1.bf16.msra.mxu0 %v564
      %577 = vmatprep.subr.bf16.mxu0 0
      %578 = vmatpush1.bf16.msra.mxu0 %v565
      %579 = vmatprep.subr.bf16.mxu0 0
      %580 = vmatpush1.bf16.msra.mxu0 %v566
      %581 = vmatprep.subr.bf16.mxu0 0
      %582 = vmatpush1.bf16.msra.mxu0 %v567
      %583 = vmatprep.subr.bf16.mxu0 0
      %584 = vmatpush1.bf16.msra.mxu0 0
      %585 = vmatprep.subr.bf16.mxu0 0
      %586 = vmatpush1.bf16.msra.mxu0 0
      %587 = vmatprep.subr.bf16.mxu0 0
      %588 = vmatpush1.bf16.msra.mxu0 0
      %589 = vmatprep.subr.bf16.mxu0 0
      %590 = vmatpush1.bf16.msra.mxu0 0
      %591 = vmatprep.subr.bf16.mxu0 0
      %592 = vmatpush1.bf16.msra.mxu0 0
      %593 = vmatprep.subr.bf16.mxu0 0
      %594 = vmatpush1.bf16.msra.mxu0 0
      %595 = vmatprep.subr.bf16.mxu0 0
      %596 = vmatpush1.bf16.msra.mxu0 0
      %597 = vmatprep.subr.bf16.mxu0 0
      %598 = vmatpush1.bf16.msra.mxu0 0
      %599 = vmatprep.subr.bf16.mxu0 0
      %600 = vmatpush1.bf16.msra.mxu0 0
      %601 = vmatprep.subr.bf16.mxu0 0
      %602 = vmatpush1.bf16.msra.mxu0 0
      %603 = vmatprep.subr.bf16.mxu0 0
      %604 = vmatpush1.bf16.msra.mxu0 0
      %605 = vmatprep.subr.bf16.mxu0 0
      %606 = vmatpush1.bf16.msra.mxu0 0
      %607 = vmatprep.mubr.bf16.mxu0 0
      %608 = vmatmul.mubr.bf16.gmra.mrb[0].mxu0 %v573
      %v609 = vpop.f32.mrb[0].mxu0
      %v610 = vadd.f32 0.0, %v609
      %v611 = vpop.f32.mrb[0].mxu0
      %v612 = vpop.f32.mrb[0].mxu0
      %v613 = vpop.f32.mrb[0].mxu0
      %614 = vdwg.mxu0
      %v615 = vlaneseq
      %v616 = vshrl.u32 %v615, 7
      %v617 = vlaneseq
      %v618 = vand.u32 %v617, 127
      %vm619 = vcmp.le.s32.totalorder %v618, %v616
      %vm620 = vcmp.gt.s32.totalorder %v480, 0
      %v621 = vsel %vm620, 1, 0
      %v622 = vlaneseq
      %v623 = vshrl.u32 %v622, 7
      %v624 = vsub.s32 0, %v623
      %v625 = vrot.slane %v621, %v624
      %vm626 = vcmp.eq.s32.totalorder %v625, 1
      %vm627 = vmand %vm619, %vm626
      %v628 = vmul.f32 %v610, %v610
      %630 = vrot.lane.b32.xlu0 %v628, 64
      %v631 = vpop.permute.xlu0 %630
      %vm633 = vcmask 130048
      %v634 = vsel %vm633, %v631, 0.0
      %635 = vadd.xlane.f32.xlu0 %v634
      %v636 = vpop.xlane.xlu0 %635
      %v637 = vrcp.pop 16.0
      %v638 = vmul.f32 %v636, %v637
      %v639 = vadd.f32 %v638, 1e-06
      %v640 = vrsqrt.pop %v639
      %v641 = vmul.f32 %v610, %v640
      %v642 = vadd.f32 %v493, 1.0
      %v644 = vlaneseq
      %v645 = vshrl.u32 %v644, 7
      %v646 = vsub.s32 0, %v645
      %v647 = vrot.slane %v642, %v646
      %648 = vrot.lane.b32.xlu0 %v647, 64
      %v649 = vpop.permute.xlu0 %648
      %v651 = vmul.f32 %v641, %v649
      %653 = vrot.lane.b32.xlu0 %v481, 64
      %v654 = vpop.permute.xlu0 %653
      %v656 = vmul.f32 %v651, %v654
      %658 = vrot.lane.b32.xlu0 %v482, 72
      %v659 = vpop.permute.xlu0 %658
      %v661 = vmul.f32 %v651, %v659
      %663 = vrot.lane.b32.xlu0 %v661, 120
      %v664 = vpop.permute.xlu0 %663
      %v666 = vsub.f32 %v656, %v664
      %667 = vrot.lane.b32.xlu0 %v481, 72
      %v668 = vpop.permute.xlu0 %667
      %v670 = vmul.f32 %v651, %v668
      %671 = vrot.lane.b32.xlu0 %v482, 64
      %v672 = vpop.permute.xlu0 %671
      %v674 = vmul.f32 %v651, %v672
      %676 = vrot.lane.b32.xlu0 %v674, 8
      %v677 = vpop.permute.xlu0 %676
      %v679 = vadd.f32 %v670, %v677
      %681 = vrot.lane.b32.xlu0 %v666, 64
      %v682 = vpop.permute.xlu0 %681
      %685 = vrot.lane.b32.xlu0 %v679, 64
      %v686 = vpop.permute.xlu0 %685
      %vm688 = vcmask 64512
      %v689 = vsel %vm688, %v682, %v686
      %v690 = vpack.c.bf16 %v689, %v689
      %v691 = vpack.c.bf16 %v610, %v610
      %v692 = vsel %vm633, %v628, 0.0
      %693 = vadd.xlane.f32.xlu0 %v692
      %v694 = vpop.xlane.xlu0 %693
      %v695 = vmul.f32 %v694, %v637
      %v696 = vadd.f32 %v695, 1e-06
      %v697 = vrsqrt.pop %v696
      %v698 = vmul.f32 %v610, %v697
      %v699 = vadd.f32 %v492, 1.0
      %v701 = vlaneseq
      %v702 = vshrl.u32 %v701, 7
      %v703 = vsub.s32 0, %v702
      %v704 = vrot.slane %v699, %v703
      %v706 = vmul.f32 %v698, %v704
      %v707 = vmul.f32 %v706, 0.25
      %v708 = vmul.f32 %v707, %v481
      %709 = vrot.lane.b32.xlu0 %v482, 8
      %v710 = vpop.permute.xlu0 %709
      %v712 = vmul.f32 %v707, %v710
      %714 = vrot.lane.b32.xlu0 %v712, 120
      %v715 = vpop.permute.xlu0 %714
      %v717 = vsub.f32 %v708, %v715
      %718 = vrot.lane.b32.xlu0 %v481, 8
      %v719 = vpop.permute.xlu0 %718
      %v721 = vmul.f32 %v707, %v719
      %v722 = vmul.f32 %v707, %v482
      %724 = vrot.lane.b32.xlu0 %v722, 8
      %v725 = vpop.permute.xlu0 %724
      %v727 = vadd.f32 %v721, %v725
      %v728 = vsel %vm688, %v717, %v727
      %v729 = vpack.c.bf16 %v728, %v728
      %v731 = vsel %vm633, %v729, 0
      %v734 = vsel %vm633, %v690, 0
      %736 = vmatprep.subr.bf16.mxu0 0
      %737 = vmatpush1.bf16.xpose.msra.mxu0 %v734
      %738 = vmatprep.subr.bf16.mxu0 0
      %739 = vmatpush1.bf16.xpose.msra.mxu0 0
      %740 = vmatprep.subr.bf16.mxu0 0
      %741 = vmatpush1.bf16.xpose.msra.mxu0 0
      %742 = vmatprep.subr.bf16.mxu0 0
      %743 = vmatpush1.bf16.xpose.msra.mxu0 0
      %744 = vmatprep.subr.bf16.mxu0 0
      %745 = vmatpush1.bf16.xpose.msra.mxu0 0
      %746 = vmatprep.subr.bf16.mxu0 0
      %747 = vmatpush1.bf16.xpose.msra.mxu0 0
      %748 = vmatprep.subr.bf16.mxu0 0
      %749 = vmatpush1.bf16.xpose.msra.mxu0 0
      %750 = vmatprep.subr.bf16.mxu0 0
      %751 = vmatpush1.bf16.xpose.msra.mxu0 0
      %752 = vmatprep.subr.bf16.mxu0 0
      %753 = vmatpush1.bf16.xpose.msra.mxu0 0
      %754 = vmatprep.subr.bf16.mxu0 0
      %755 = vmatpush1.bf16.xpose.msra.mxu0 0
      %756 = vmatprep.subr.bf16.mxu0 0
      %757 = vmatpush1.bf16.xpose.msra.mxu0 0
      %758 = vmatprep.subr.bf16.mxu0 0
      %759 = vmatpush1.bf16.xpose.msra.mxu0 0
      %760 = vmatprep.subr.bf16.mxu0 0
      %761 = vmatpush1.bf16.xpose.msra.mxu0 0
      %762 = vmatprep.subr.bf16.mxu0 0
      %763 = vmatpush1.bf16.xpose.msra.mxu0 0
      %764 = vmatprep.subr.bf16.mxu0 0
      %765 = vmatpush1.bf16.xpose.msra.mxu0 0
      %766 = vmatprep.subr.bf16.mxu0 0
      %767 = vmatpush1.bf16.xpose.msra.mxu0 0
      %768 = vmatprep.mubr.bf16.mxu0 0
      %769 = vmatmul.mubr.bf16.gmra.mrb[0].mxu0 %v731
      %v770 = vpop.f32.mrb[0].mxu0
      %v771 = vadd.f32 0.0, %v770
      %v772 = vpop.f32.mrb[0].mxu0
      %v773 = vpop.f32.mrb[0].mxu0
      %v774 = vpop.f32.mrb[0].mxu0
      %775 = vdwg.mxu0
      %v776 = vsel %vm627, %v771, -1e+30
      %v777 = vsel %vm688, %v776, -inf
      %778 = vmax.xlane.f32.xlu0 %v777
      %v779 = vpop.xlane.xlu0 %778
      %v780 = vsub.f32 %v776, %v779
      %v781 = vmul.f32 %v780, 1.442695
      %v782 = vpow.pop %v781
      %v783 = vsel %vm688, %v782, 0.0
      %784 = vadd.xlane.f32.xlu0 %v783
      %v785 = vpop.xlane.xlu0 %784
      %v786 = vrcp.pop %v785
      %v787 = vmul.f32 %v782, %v786
      %v788 = vpack.c.bf16 %v787, %v787
      %790 = vrot.lane.b32.xlu0 %v691, 32
      %v791 = vpop.permute.xlu0 %790
      %v793 = vsel %vm688, %v788, 0
      %vm795 = vcmask 1043456
      %v797 = vsel %vm795, %v791, 0
      %799 = vmatprep.subr.bf16.mxu0 0
      %800 = vmatpush1.bf16.msra.mxu0 %v797
      %801 = vmatprep.subr.bf16.mxu0 0
      %802 = vmatpush1.bf16.msra.mxu0 0
      %803 = vmatprep.subr.bf16.mxu0 0
      %804 = vmatpush1.bf16.msra.mxu0 0
      %805 = vmatprep.subr.bf16.mxu0 0
      %806 = vmatpush1.bf16.msra.mxu0 0
      %807 = vmatprep.subr.bf16.mxu0 0
      %808 = vmatpush1.bf16.msra.mxu0 0
      %809 = vmatprep.subr.bf16.mxu0 0
      %810 = vmatpush1.bf16.msra.mxu0 0
      %811 = vmatprep.subr.bf16.mxu0 0
      %812 = vmatpush1.bf16.msra.mxu0 0
      %813 = vmatprep.subr.bf16.mxu0 0
      %814 = vmatpush1.bf16.msra.mxu0 0
      %815 = vmatprep.subr.bf16.mxu0 0
      %816 = vmatpush1.bf16.msra.mxu0 0
      %817 = vmatprep.subr.bf16.mxu0 0
      %818 = vmatpush1.bf16.msra.mxu0 0
      %819 = vmatprep.subr.bf16.mxu0 0
      %820 = vmatpush1.bf16.msra.mxu0 0
      %821 = vmatprep.subr.bf16.mxu0 0
      %822 = vmatpush1.bf16.msra.mxu0 0
      %823 = vmatprep.subr.bf16.mxu0 0
      %824 = vmatpush1.bf16.msra.mxu0 0
      %825 = vmatprep.subr.bf16.mxu0 0
      %826 = vmatpush1.bf16.msra.mxu0 0
      %827 = vmatprep.subr.bf16.mxu0 0
      %828 = vmatpush1.bf16.msra.mxu0 0
      %829 = vmatprep.subr.bf16.mxu0 0
      %830 = vmatpush1.bf16.msra.mxu0 0
      %831 = vmatprep.mubr.bf16.mxu0 0
      %832 = vmatmul.mubr.bf16.gmra.mrb[0].mxu0 %v793
      %v833 = vpop.f32.mrb[0].mxu0
      %v834 = vadd.f32 0.0, %v833
      %v835 = vpop.f32.mrb[0].mxu0
      %v836 = vpop.f32.mrb[0].mxu0
      %v837 = vpop.f32.mrb[0].mxu0
      %838 = vdwg.mxu0
      %839 = vrot.lane.b32.xlu0 %v628, 112
      %v840 = vpop.permute.xlu0 %839
      %v842 = vsel %vm633, %v840, 0.0
      %843 = vadd.xlane.f32.xlu0 %v842
      %v844 = vpop.xlane.xlu0 %843
      %v845 = vmul.f32 %v844, %v637
      %v846 = vadd.f32 %v845, 1e-06
      %v847 = vrsqrt.pop %v846
      %v848 = vmul.f32 %v610, %v847
      %849 = vrot.lane.b32.xlu0 %v704, 16
      %v850 = vpop.permute.xlu0 %849
      %v852 = vmul.f32 %v848, %v850
      %v853 = vmul.f32 %v852, 0.25
      %854 = vrot.lane.b32.xlu0 %v481, 16
      %v855 = vpop.permute.xlu0 %854
      %v857 = vmul.f32 %v853, %v855
      %858 = vrot.lane.b32.xlu0 %v482, 24
      %v859 = vpop.permute.xlu0 %858
      %v861 = vmul.f32 %v853, %v859
      %863 = vrot.lane.b32.xlu0 %v861, 120
      %v864 = vpop.permute.xlu0 %863
      %v866 = vsub.f32 %v857, %v864
      %867 = vrot.lane.b32.xlu0 %v481, 24
      %v868 = vpop.permute.xlu0 %867
      %v870 = vmul.f32 %v853, %v868
      %871 = vrot.lane.b32.xlu0 %v482, 16
      %v872 = vpop.permute.xlu0 %871
      %v874 = vmul.f32 %v853, %v872
      %876 = vrot.lane.b32.xlu0 %v874, 8
      %v877 = vpop.permute.xlu0 %876
      %v879 = vadd.f32 %v870, %v877
      %881 = vrot.lane.b32.xlu0 %v866, 112
      %v882 = vpop.permute.xlu0 %881
      %885 = vrot.lane.b32.xlu0 %v879, 112
      %v886 = vpop.permute.xlu0 %885
      %v888 = vsel %vm688, %v882, %v886
      %v889 = vpack.c.bf16 %v888, %v888
      %v891 = vsel %vm633, %v889, 0
      %893 = vmatprep.subr.bf16.mxu0 0
      %894 = vmatpush1.bf16.xpose.msra.mxu0 %v734
      %895 = vmatprep.subr.bf16.mxu0 0
      %896 = vmatpush1.bf16.xpose.msra.mxu0 0
      %897 = vmatprep.subr.bf16.mxu0 0
      %898 = vmatpush1.bf16.xpose.msra.mxu0 0
      %899 = vmatprep.subr.bf16.mxu0 0
      %900 = vmatpush1.bf16.xpose.msra.mxu0 0
      %901 = vmatprep.subr.bf16.mxu0 0
      %902 = vmatpush1.bf16.xpose.msra.mxu0 0
      %903 = vmatprep.subr.bf16.mxu0 0
      %904 = vmatpush1.bf16.xpose.msra.mxu0 0
      %905 = vmatprep.subr.bf16.mxu0 0
      %906 = vmatpush1.bf16.xpose.msra.mxu0 0
      %907 = vmatprep.subr.bf16.mxu0 0
      %908 = vmatpush1.bf16.xpose.msra.mxu0 0
      %909 = vmatprep.subr.bf16.mxu0 0
      %910 = vmatpush1.bf16.xpose.msra.mxu0 0
      %911 = vmatprep.subr.bf16.mxu0 0
      %912 = vmatpush1.bf16.xpose.msra.mxu0 0
      %913 = vmatprep.subr.bf16.mxu0 0
      %914 = vmatpush1.bf16.xpose.msra.mxu0 0
      %915 = vmatprep.subr.bf16.mxu0 0
      %916 = vmatpush1.bf16.xpose.msra.mxu0 0
      %917 = vmatprep.subr.bf16.mxu0 0
      %918 = vmatpush1.bf16.xpose.msra.mxu0 0
      %919 = vmatprep.subr.bf16.mxu0 0
      %920 = vmatpush1.bf16.xpose.msra.mxu0 0
      %921 = vmatprep.subr.bf16.mxu0 0
      %922 = vmatpush1.bf16.xpose.msra.mxu0 0
      %923 = vmatprep.subr.bf16.mxu0 0
      %924 = vmatpush1.bf16.xpose.msra.mxu0 0
      %925 = vmatprep.mubr.bf16.mxu0 0
      %926 = vmatmul.mubr.bf16.gmra.mrb[0].mxu0 %v891
      %v927 = vpop.f32.mrb[0].mxu0
      %v928 = vadd.f32 0.0, %v927
      %v929 = vpop.f32.mrb[0].mxu0
      %v930 = vpop.f32.mrb[0].mxu0
      %v931 = vpop.f32.mrb[0].mxu0
      %932 = vdwg.mxu0
      %v933 = vsel %vm627, %v928, -1e+30
      %v934 = vsel %vm688, %v933, -inf
      %935 = vmax.xlane.f32.xlu0 %v934
      %v936 = vpop.xlane.xlu0 %935
      %v937 = vsub.f32 %v933, %v936
      %v938 = vmul.f32 %v937, 1.442695
      %v939 = vpow.pop %v938
      %v940 = vsel %vm688, %v939, 0.0
      %941 = vadd.xlane.f32.xlu0 %v940
      %v942 = vpop.xlane.xlu0 %941
      %v943 = vrcp.pop %v942
      %v944 = vmul.f32 %v939, %v943
      %v945 = vpack.c.bf16 %v944, %v944
      %v947 = vsel %vm688, %v945, 0
      %949 = vmatprep.subr.bf16.mxu0 0
      %950 = vmatpush1.bf16.msra.mxu0 %v797
      %951 = vmatprep.subr.bf16.mxu0 0
      %952 = vmatpush1.bf16.msra.mxu0 0
      %953 = vmatprep.subr.bf16.mxu0 0
      %954 = vmatpush1.bf16.msra.mxu0 0
      %955 = vmatprep.subr.bf16.mxu0 0
      %956 = vmatpush1.bf16.msra.mxu0 0
      %957 = vmatprep.subr.bf16.mxu0 0
      %958 = vmatpush1.bf16.msra.mxu0 0
      %959 = vmatprep.subr.bf16.mxu0 0
      %960 = vmatpush1.bf16.msra.mxu0 0
      %961 = vmatprep.subr.bf16.mxu0 0
      %962 = vmatpush1.bf16.msra.mxu0 0
      %963 = vmatprep.subr.bf16.mxu0 0
      %964 = vmatpush1.bf16.msra.mxu0 0
      %965 = vmatprep.subr.bf16.mxu0 0
      %966 = vmatpush1.bf16.msra.mxu0 0
      %967 = vmatprep.subr.bf16.mxu0 0
      %968 = vmatpush1.bf16.msra.mxu0 0
      %969 = vmatprep.subr.bf16.mxu0 0
      %970 = vmatpush1.bf16.msra.mxu0 0
      %971 = vmatprep.subr.bf16.mxu0 0
      %972 = vmatpush1.bf16.msra.mxu0 0
      %973 = vmatprep.subr.bf16.mxu0 0
      %974 = vmatpush1.bf16.msra.mxu0 0
      %975 = vmatprep.subr.bf16.mxu0 0
      %976 = vmatpush1.bf16.msra.mxu0 0
      %977 = vmatprep.subr.bf16.mxu0 0
      %978 = vmatpush1.bf16.msra.mxu0 0
      %979 = vmatprep.subr.bf16.mxu0 0
      %980 = vmatpush1.bf16.msra.mxu0 0
      %981 = vmatprep.mubr.bf16.mxu0 0
      %982 = vmatmul.mubr.bf16.gmra.mrb[0].mxu0 %v947
      %v983 = vpop.f32.mrb[0].mxu0
      %v984 = vadd.f32 0.0, %v983
      %v985 = vpop.f32.mrb[0].mxu0
      %v986 = vpop.f32.mrb[0].mxu0
      %v987 = vpop.f32.mrb[0].mxu0
      %988 = vdwg.mxu0
      %989 = vrot.lane.b32.xlu0 %v628, 48
      %v990 = vpop.permute.xlu0 %989
      %v992 = vsel %vm633, %v990, 0.0
      %993 = vadd.xlane.f32.xlu0 %v992
      %v994 = vpop.xlane.xlu0 %993
      %v995 = vmul.f32 %v994, %v637
      %v996 = vadd.f32 %v995, 1e-06
      %v997 = vrsqrt.pop %v996
      %v998 = vmul.f32 %v610, %v997
      %999 = vrot.lane.b32.xlu0 %v647, 80
      %v1000 = vpop.permute.xlu0 %999
      %v1002 = vmul.f32 %v998, %v1000
      %1003 = vrot.lane.b32.xlu0 %v481, 80
      %v1004 = vpop.permute.xlu0 %1003
      %v1006 = vmul.f32 %v1002, %v1004
      %1007 = vrot.lane.b32.xlu0 %v482, 88
      %v1008 = vpop.permute.xlu0 %1007
      %v1010 = vmul.f32 %v1002, %v1008
      %1012 = vrot.lane.b32.xlu0 %v1010, 120
      %v1013 = vpop.permute.xlu0 %1012
      %v1015 = vsub.f32 %v1006, %v1013
      %1016 = vrot.lane.b32.xlu0 %v481, 88
      %v1017 = vpop.permute.xlu0 %1016
      %v1019 = vmul.f32 %v1002, %v1017
      %1020 = vrot.lane.b32.xlu0 %v482, 80
      %v1021 = vpop.permute.xlu0 %1020
      %v1023 = vmul.f32 %v1002, %v1021
      %1025 = vrot.lane.b32.xlu0 %v1023, 8
      %v1026 = vpop.permute.xlu0 %1025
      %v1028 = vadd.f32 %v1019, %v1026
      %1030 = vrot.lane.b32.xlu0 %v1015, 48
      %v1031 = vpop.permute.xlu0 %1030
      %1034 = vrot.lane.b32.xlu0 %v1028, 48
      %v1035 = vpop.permute.xlu0 %1034
      %v1037 = vsel %vm688, %v1031, %v1035
      %v1038 = vpack.c.bf16 %v1037, %v1037
      %1039 = vrot.lane.b32.xlu0 %v628, 96
      %v1040 = vpop.permute.xlu0 %1039
      %v1042 = vsel %vm633, %v1040, 0.0
      %1043 = vadd.xlane.f32.xlu0 %v1042
      %v1044 = vpop.xlane.xlu0 %1043
      %v1045 = vmul.f32 %v1044, %v637
      %v1046 = vadd.f32 %v1045, 1e-06
      %v1047 = vrsqrt.pop %v1046
      %v1048 = vmul.f32 %v610, %v1047
      %1049 = vrot.lane.b32.xlu0 %v704, 32
      %v1050 = vpop.permute.xlu0 %1049
      %v1052 = vmul.f32 %v1048, %v1050
      %v1053 = vmul.f32 %v1052, 0.25
      %1054 = vrot.lane.b32.xlu0 %v481, 32
      %v1055 = vpop.permute.xlu0 %1054
      %v1057 = vmul.f32 %v1053, %v1055
      %1058 = vrot.lane.b32.xlu0 %v482, 40
      %v1059 = vpop.permute.xlu0 %1058
      %v1061 = vmul.f32 %v1053, %v1059
      %1063 = vrot.lane.b32.xlu0 %v1061, 120
      %v1064 = vpop.permute.xlu0 %1063
      %v1066 = vsub.f32 %v1057, %v1064
      %1067 = vrot.lane.b32.xlu0 %v481, 40
      %v1068 = vpop.permute.xlu0 %1067
      %v1070 = vmul.f32 %v1053, %v1068
      %1071 = vrot.lane.b32.xlu0 %v482, 32
      %v1072 = vpop.permute.xlu0 %1071
      %v1074 = vmul.f32 %v1053, %v1072
      %1076 = vrot.lane.b32.xlu0 %v1074, 8
      %v1077 = vpop.permute.xlu0 %1076
      %v1079 = vadd.f32 %v1070, %v1077
      %1081 = vrot.lane.b32.xlu0 %v1066, 96
      %v1082 = vpop.permute.xlu0 %1081
      %1085 = vrot.lane.b32.xlu0 %v1079, 96
      %v1086 = vpop.permute.xlu0 %1085
      %v1088 = vsel %vm688, %v1082, %v1086
      %v1089 = vpack.c.bf16 %v1088, %v1088
      %v1091 = vsel %vm633, %v1089, 0
      %v1094 = vsel %vm633, %v1038, 0
      %1096 = vmatprep.subr.bf16.mxu0 0
      %1097 = vmatpush1.bf16.xpose.msra.mxu0 %v1094
      %1098 = vmatprep.subr.bf16.mxu0 0
      %1099 = vmatpush1.bf16.xpose.msra.mxu0 0
      %1100 = vmatprep.subr.bf16.mxu0 0
      %1101 = vmatpush1.bf16.xpose.msra.mxu0 0
      %1102 = vmatprep.subr.bf16.mxu0 0
      %1103 = vmatpush1.bf16.xpose.msra.mxu0 0
      %1104 = vmatprep.subr.bf16.mxu0 0
      %1105 = vmatpush1.bf16.xpose.msra.mxu0 0
      %1106 = vmatprep.subr.bf16.mxu0 0
      %1107 = vmatpush1.bf16.xpose.msra.mxu0 0
      %1108 = vmatprep.subr.bf16.mxu0 0
      %1109 = vmatpush1.bf16.xpose.msra.mxu0 0
      %1110 = vmatprep.subr.bf16.mxu0 0
      %1111 = vmatpush1.bf16.xpose.msra.mxu0 0
      %1112 = vmatprep.subr.bf16.mxu0 0
      %1113 = vmatpush1.bf16.xpose.msra.mxu0 0
      %1114 = vmatprep.subr.bf16.mxu0 0
      %1115 = vmatpush1.bf16.xpose.msra.mxu0 0
      %1116 = vmatprep.subr.bf16.mxu0 0
      %1117 = vmatpush1.bf16.xpose.msra.mxu0 0
      %1118 = vmatprep.subr.bf16.mxu0 0
      %1119 = vmatpush1.bf16.xpose.msra.mxu0 0
      %1120 = vmatprep.subr.bf16.mxu0 0
      %1121 = vmatpush1.bf16.xpose.msra.mxu0 0
      %1122 = vmatprep.subr.bf16.mxu0 0
      %1123 = vmatpush1.bf16.xpose.msra.mxu0 0
      %1124 = vmatprep.subr.bf16.mxu0 0
      %1125 = vmatpush1.bf16.xpose.msra.mxu0 0
      %1126 = vmatprep.subr.bf16.mxu0 0
      %1127 = vmatpush1.bf16.xpose.msra.mxu0 0
      %1128 = vmatprep.mubr.bf16.mxu0 0
      %1129 = vmatmul.mubr.bf16.gmra.mrb[0].mxu0 %v1091
      %v1130 = vpop.f32.mrb[0].mxu0
      %v1131 = vadd.f32 0.0, %v1130
      %v1132 = vpop.f32.mrb[0].mxu0
      %v1133 = vpop.f32.mrb[0].mxu0
      %v1134 = vpop.f32.mrb[0].mxu0
      %1135 = vdwg.mxu0
      %v1136 = vsel %vm627, %v1131, -1e+30
      %v1137 = vsel %vm688, %v1136, -inf
      %1138 = vmax.xlane.f32.xlu0 %v1137
      %v1139 = vpop.xlane.xlu0 %1138
      %v1140 = vsub.f32 %v1136, %v1139
      %v1141 = vmul.f32 %v1140, 1.442695
      %v1142 = vpow.pop %v1141
      %v1143 = vsel %vm688, %v1142, 0.0
      %1144 = vadd.xlane.f32.xlu0 %v1143
      %v1145 = vpop.xlane.xlu0 %1144
      %v1146 = vrcp.pop %v1145
      %v1147 = vmul.f32 %v1142, %v1146
      %v1148 = vpack.c.bf16 %v1147, %v1147
      %1149 = vrot.lane.b32.xlu0 %v691, 16
      %v1150 = vpop.permute.xlu0 %1149
      %v1152 = vsel %vm688, %v1148, 0
      %v1155 = vsel %vm795, %v1150, 0
      %1157 = vmatprep.subr.bf16.mxu0 0
      %1158 = vmatpush1.bf16.msra.mxu0 %v1155
      %1159 = vmatprep.subr.bf16.mxu0 0
      %1160 = vmatpush1.bf16.msra.mxu0 0
      %1161 = vmatprep.subr.bf16.mxu0 0
      %1162 = vmatpush1.bf16.msra.mxu0 0
      %1163 = vmatprep.subr.bf16.mxu0 0
      %1164 = vmatpush1.bf16.msra.mxu0 0
      %1165 = vmatprep.subr.bf16.mxu0 0
      %1166 = vmatpush1.bf16.msra.mxu0 0
      %1167 = vmatprep.subr.bf16.mxu0 0
      %1168 = vmatpush1.bf16.msra.mxu0 0
      %1169 = vmatprep.subr.bf16.mxu0 0
      %1170 = vmatpush1.bf16.msra.mxu0 0
      %1171 = vmatprep.subr.bf16.mxu0 0
      %1172 = vmatpush1.bf16.msra.mxu0 0
      %1173 = vmatprep.subr.bf16.mxu0 0
      %1174 = vmatpush1.bf16.msra.mxu0 0
      %1175 = vmatprep.subr.bf16.mxu0 0
      %1176 = vmatpush1.bf16.msra.mxu0 0
      %1177 = vmatprep.subr.bf16.mxu0 0
      %1178 = vmatpush1.bf16.msra.mxu0 0
      %1179 = vmatprep.subr.bf16.mxu0 0
      %1180 = vmatpush1.bf16.msra.mxu0 0
      %1181 = vmatprep.subr.bf16.mxu0 0
      %1182 = vmatpush1.bf16.msra.mxu0 0
      %1183 = vmatprep.subr.bf16.mxu0 0
      %1184 = vmatpush1.bf16.msra.mxu0 0
      %1185 = vmatprep.subr.bf16.mxu0 0
      %1186 = vmatpush1.bf16.msra.mxu0 0
      %1187 = vmatprep.subr.bf16.mxu0 0
      %1188 = vmatpush1.bf16.msra.mxu0 0
      %1189 = vmatprep.mubr.bf16.mxu0 0
      %1190 = vmatmul.mubr.bf16.gmra.mrb[0].mxu0 %v1152
      %v1191 = vpop.f32.mrb[0].mxu0
      %v1192 = vadd.f32 0.0, %v1191
      %v1193 = vpop.f32.mrb[0].mxu0
      %v1194 = vpop.f32.mrb[0].mxu0
      %v1195 = vpop.f32.mrb[0].mxu0
      %1196 = vdwg.mxu0
      %1197 = vrot.lane.b32.xlu0 %v628, 80
      %v1198 = vpop.permute.xlu0 %1197
      %v1200 = vsel %vm633, %v1198, 0.0
      %1201 = vadd.xlane.f32.xlu0 %v1200
      %v1202 = vpop.xlane.xlu0 %1201
      %v1203 = vmul.f32 %v1202, %v637
      %v1204 = vadd.f32 %v1203, 1e-06
      %v1205 = vrsqrt.pop %v1204
      %v1206 = vmul.f32 %v610, %v1205
      %1207 = vrot.lane.b32.xlu0 %v704, 48
      %v1208 = vpop.permute.xlu0 %1207
      %v1210 = vmul.f32 %v1206, %v1208
      %v1211 = vmul.f32 %v1210, 0.25
      %1212 = vrot.lane.b32.xlu0 %v481, 48
      %v1213 = vpop.permute.xlu0 %1212
      %v1215 = vmul.f32 %v1211, %v1213
      %1216 = vrot.lane.b32.xlu0 %v482, 56
      %v1217 = vpop.permute.xlu0 %1216
      %v1219 = vmul.f32 %v1211, %v1217
      %1221 = vrot.lane.b32.xlu0 %v1219, 120
      %v1222 = vpop.permute.xlu0 %1221
      %v1224 = vsub.f32 %v1215, %v1222
      %1225 = vrot.lane.b32.xlu0 %v481, 56
      %v1226 = vpop.permute.xlu0 %1225
      %v1228 = vmul.f32 %v1211, %v1226
      %1229 = vrot.lane.b32.xlu0 %v482, 48
      %v1230 = vpop.permute.xlu0 %1229
      %v1232 = vmul.f32 %v1211, %v1230
      %1234 = vrot.lane.b32.xlu0 %v1232, 8
      %v1235 = vpop.permute.xlu0 %1234
      %v1237 = vadd.f32 %v1228, %v1235
      %1239 = vrot.lane.b32.xlu0 %v1224, 80
      %v1240 = vpop.permute.xlu0 %1239
      %1243 = vrot.lane.b32.xlu0 %v1237, 80
      %v1244 = vpop.permute.xlu0 %1243
      %v1246 = vsel %vm688, %v1240, %v1244
      %v1247 = vpack.c.bf16 %v1246, %v1246
      %v1249 = vsel %vm633, %v1247, 0
      %1251 = vmatprep.subr.bf16.mxu0 0
      %1252 = vmatpush1.bf16.xpose.msra.mxu0 %v1094
      %1253 = vmatprep.subr.bf16.mxu0 0
      %1254 = vmatpush1.bf16.xpose.msra.mxu0 0
      %1255 = vmatprep.subr.bf16.mxu0 0
      %1256 = vmatpush1.bf16.xpose.msra.mxu0 0
      %1257 = vmatprep.subr.bf16.mxu0 0
      %1258 = vmatpush1.bf16.xpose.msra.mxu0 0
      %1259 = vmatprep.subr.bf16.mxu0 0
      %1260 = vmatpush1.bf16.xpose.msra.mxu0 0
      %1261 = vmatprep.subr.bf16.mxu0 0
      %1262 = vmatpush1.bf16.xpose.msra.mxu0 0
      %1263 = vmatprep.subr.bf16.mxu0 0
      %1264 = vmatpush1.bf16.xpose.msra.mxu0 0
      %1265 = vmatprep.subr.bf16.mxu0 0
      %1266 = vmatpush1.bf16.xpose.msra.mxu0 0
      %1267 = vmatprep.subr.bf16.mxu0 0
      %1268 = vmatpush1.bf16.xpose.msra.mxu0 0
      %1269 = vmatprep.subr.bf16.mxu0 0
      %1270 = vmatpush1.bf16.xpose.msra.mxu0 0
      %1271 = vmatprep.subr.bf16.mxu0 0
      %1272 = vmatpush1.bf16.xpose.msra.mxu0 0
      %1273 = vmatprep.subr.bf16.mxu0 0
      %1274 = vmatpush1.bf16.xpose.msra.mxu0 0
      %1275 = vmatprep.subr.bf16.mxu0 0
      %1276 = vmatpush1.bf16.xpose.msra.mxu0 0
      %1277 = vmatprep.subr.bf16.mxu0 0
      %1278 = vmatpush1.bf16.xpose.msra.mxu0 0
      %1279 = vmatprep.subr.bf16.mxu0 0
      %1280 = vmatpush1.bf16.xpose.msra.mxu0 0
      %1281 = vmatprep.subr.bf16.mxu0 0
      %1282 = vmatpush1.bf16.xpose.msra.mxu0 0
      %1283 = vmatprep.mubr.bf16.mxu0 0
      %1284 = vmatmul.mubr.bf16.gmra.mrb[0].mxu0 %v1249
      %v1285 = vpop.f32.mrb[0].mxu0
      %v1286 = vadd.f32 0.0, %v1285
      %v1287 = vpop.f32.mrb[0].mxu0
      %v1288 = vpop.f32.mrb[0].mxu0
      %v1289 = vpop.f32.mrb[0].mxu0
      %1290 = vdwg.mxu0
      %v1291 = vsel %vm627, %v1286, -1e+30
      %v1292 = vsel %vm688, %v1291, -inf
      %1293 = vmax.xlane.f32.xlu0 %v1292
      %v1294 = vpop.xlane.xlu0 %1293
      %v1295 = vsub.f32 %v1291, %v1294
      %v1296 = vmul.f32 %v1295, 1.442695
      %v1297 = vpow.pop %v1296
      %v1298 = vsel %vm688, %v1297, 0.0
      %1299 = vadd.xlane.f32.xlu0 %v1298
      %v1300 = vpop.xlane.xlu0 %1299
      %v1301 = vrcp.pop %v1300
      %v1302 = vmul.f32 %v1297, %v1301
      %v1303 = vpack.c.bf16 %v1302, %v1302
      %v1305 = vsel %vm688, %v1303, 0
      %1307 = vmatprep.subr.bf16.mxu0 0
      %1308 = vmatpush1.bf16.msra.mxu0 %v1155
      %1309 = vmatprep.subr.bf16.mxu0 0
      %1310 = vmatpush1.bf16.msra.mxu0 0
      %1311 = vmatprep.subr.bf16.mxu0 0
      %1312 = vmatpush1.bf16.msra.mxu0 0
      %1313 = vmatprep.subr.bf16.mxu0 0
      %1314 = vmatpush1.bf16.msra.mxu0 0
      %1315 = vmatprep.subr.bf16.mxu0 0
      %1316 = vmatpush1.bf16.msra.mxu0 0
      %1317 = vmatprep.subr.bf16.mxu0 0
      %1318 = vmatpush1.bf16.msra.mxu0 0
      %1319 = vmatprep.subr.bf16.mxu0 0
      %1320 = vmatpush1.bf16.msra.mxu0 0
      %1321 = vmatprep.subr.bf16.mxu0 0
      %1322 = vmatpush1.bf16.msra.mxu0 0
      %1323 = vmatprep.subr.bf16.mxu0 0
      %1324 = vmatpush1.bf16.msra.mxu0 0
      %1325 = vmatprep.subr.bf16.mxu0 0
      %1326 = vmatpush1.bf16.msra.mxu0 0
      %1327 = vmatprep.subr.bf16.mxu0 0
      %1328 = vmatpush1.bf16.msra.mxu0 0
      %1329 = vmatprep.subr.bf16.mxu0 0
      %1330 = vmatpush1.bf16.msra.mxu0 0
      %1331 = vmatprep.subr.bf16.mxu0 0
      %1332 = vmatpush1.bf16.msra.mxu0 0
      %1333 = vmatprep.subr.bf16.mxu0 0
      %1334 = vmatpush1.bf16.msra.mxu0 0
      %1335 = vmatprep.subr.bf16.mxu0 0
      %1336 = vmatpush1.bf16.msra.mxu0 0
      %1337 = vmatprep.subr.bf16.mxu0 0
      %1338 = vmatpush1.bf16.msra.mxu0 0
      %1339 = vmatprep.mubr.bf16.mxu0 0
      %1340 = vmatmul.mubr.bf16.gmra.mrb[0].mxu0 %v1305
      %v1341 = vpop.f32.mrb[0].mxu0
      %v1342 = vadd.f32 0.0, %v1341
      %v1343 = vpop.f32.mrb[0].mxu0
      %v1344 = vpop.f32.mrb[0].mxu0
      %v1345 = vpop.f32.mrb[0].mxu0
      %1346 = vdwg.mxu0
      %1348 = vrot.lane.b32.xlu0 %v984, 16
      %v1349 = vpop.permute.xlu0 %1348
      %1352 = vrot.lane.b32.xlu0 %v1192, 32
      %v1353 = vpop.permute.xlu0 %1352
      %1356 = vrot.lane.b32.xlu0 %v1342, 48
      %v1357 = vpop.permute.xlu0 %1356
      %v1359 = vsel %vm633, %v834, %v1349
      %vm1360 = vcmask 261120
      %v1361 = vsel %vm1360, %v1359, %v1353
      %vm1362 = vcmask 392192
      %v1363 = vsel %vm1362, %v1361, %v1357
      %v1364 = vpack.c.bf16 %v1363, %v1363
      %v1373 = vunpack.c.l.b16 %v494
      %v1374 = vunpack.c.l.b16 %v495
      %v1375 = vunpack.c.l.b16 %v496
      %v1376 = vunpack.c.l.b16 %v497
      %v1377 = vunpack.c.l.b16 %v498
      %v1378 = vunpack.c.l.b16 %v499
      %v1379 = vunpack.c.l.b16 %v500
      %v1380 = vunpack.c.l.b16 %v501
      %v1381 = vpack.c.b16 %v1374, %v1373
      %v1382 = vpack.c.b16 %v1376, %v1375
      %v1383 = vpack.c.b16 %v1378, %v1377
      %v1384 = vpack.c.b16 %v1380, %v1379
      %v1390 = vsel %vm530, %v1364, 0
      %1392 = vmatprep.subr.bf16.mxu0 0
      %1393 = vmatpush1.bf16.msra.mxu0 %v1381
      %1394 = vmatprep.subr.bf16.mxu0 0
      %1395 = vmatpush1.bf16.msra.mxu0 %v1382
      %1396 = vmatprep.subr.bf16.mxu0 0
      %1397 = vmatpush1.bf16.msra.mxu0 %v1383
      %1398 = vmatprep.subr.bf16.mxu0 0
      %1399 = vmatpush1.bf16.msra.mxu0 %v1384
      %1400 = vmatprep.subr.bf16.mxu0 0
      %1401 = vmatpush1.bf16.msra.mxu0 0
      %1402 = vmatprep.subr.bf16.mxu0 0
      %1403 = vmatpush1.bf16.msra.mxu0 0
      %1404 = vmatprep.subr.bf16.mxu0 0
      %1405 = vmatpush1.bf16.msra.mxu0 0
      %1406 = vmatprep.subr.bf16.mxu0 0
      %1407 = vmatpush1.bf16.msra.mxu0 0
      %1408 = vmatprep.subr.bf16.mxu0 0
      %1409 = vmatpush1.bf16.msra.mxu0 0
      %1410 = vmatprep.subr.bf16.mxu0 0
      %1411 = vmatpush1.bf16.msra.mxu0 0
      %1412 = vmatprep.subr.bf16.mxu0 0
      %1413 = vmatpush1.bf16.msra.mxu0 0
      %1414 = vmatprep.subr.bf16.mxu0 0
      %1415 = vmatpush1.bf16.msra.mxu0 0
      %1416 = vmatprep.subr.bf16.mxu0 0
      %1417 = vmatpush1.bf16.msra.mxu0 0
      %1418 = vmatprep.subr.bf16.mxu0 0
      %1419 = vmatpush1.bf16.msra.mxu0 0
      %1420 = vmatprep.subr.bf16.mxu0 0
      %1421 = vmatpush1.bf16.msra.mxu0 0
      %1422 = vmatprep.subr.bf16.mxu0 0
      %1423 = vmatpush1.bf16.msra.mxu0 0
      %1424 = vmatprep.mubr.bf16.mxu0 0
      %1425 = vmatmul.mubr.bf16.gmra.mrb[0].mxu0 %v1390
      %v1426 = vpop.f32.mrb[0].mxu0
      %v1427 = vadd.f32 0.0, %v1426
      %v1428 = vpop.f32.mrb[0].mxu0
      %v1429 = vpop.f32.mrb[0].mxu0
      %v1430 = vpop.f32.mrb[0].mxu0
      %1431 = vdwg.mxu0
      %v1432 = vmul.f32 %v1427, %v1427
      %v1433 = vsel %vm530, %v1432, 0.0
      %1434 = vadd.xlane.f32.xlu0 %v1433
      %v1435 = vpop.xlane.xlu0 %1434
      %v1436 = vmul.f32 %v1435, %v534
      %v1437 = vadd.f32 %v1436, 1e-06
      %v1438 = vrsqrt.pop %v1437
      %v1439 = vmul.f32 %v1427, %v1438
      %v1440 = vadd.f32 %v502, 1.0
      %v1442 = vlaneseq
      %v1443 = vshrl.u32 %v1442, 7
      %v1444 = vsub.s32 0, %v1443
      %v1445 = vrot.slane %v1440, %v1444
      %v1447 = vmul.f32 %v1439, %v1445
      %v1448 = vadd.f32 %v479, %v1447
      %v1449 = vmul.f32 %v1448, %v1448
      %v1450 = vsel %vm530, %v1449, 0.0
      %1451 = vadd.xlane.f32.xlu0 %v1450
      %v1452 = vpop.xlane.xlu0 %1451
      %v1453 = vmul.f32 %v1452, %v534
      %v1454 = vadd.f32 %v1453, 1e-06
      %v1455 = vrsqrt.pop %v1454
      %v1456 = vmul.f32 %v1448, %v1455
      %v1457 = vadd.f32 %v503, 1.0
      %v1459 = vlaneseq
      %v1460 = vshrl.u32 %v1459, 7
      %v1461 = vsub.s32 0, %v1460
      %v1462 = vrot.slane %v1457, %v1461
      %v1464 = vmul.f32 %v1456, %v1462
      %v1465 = vpack.c.bf16 %v1464, %v1464
      %v1474 = vunpack.c.l.b16 %v504
      %v1475 = vunpack.c.h.b16 %v504
      %v1476 = vunpack.c.l.b16 %v505
      %v1477 = vunpack.c.h.b16 %v505
      %v1478 = vunpack.c.l.b16 %v506
      %v1479 = vunpack.c.h.b16 %v506
      %v1480 = vunpack.c.l.b16 %v507
      %v1481 = vunpack.c.h.b16 %v507
      %v1482 = vunpack.c.l.b16 %v508
      %v1483 = vunpack.c.h.b16 %v508
      %v1484 = vunpack.c.l.b16 %v509
      %v1485 = vunpack.c.h.b16 %v509
      %v1486 = vunpack.c.l.b16 %v510
      %v1487 = vunpack.c.h.b16 %v510
      %v1488 = vunpack.c.l.b16 %v511
      %v1489 = vunpack.c.h.b16 %v511
      %v1490 = vpack.c.b16 %v1476, %v1474
      %v1491 = vpack.c.b16 %v1477, %v1475
      %v1492 = vpack.c.b16 %v1480, %v1478
      %v1493 = vpack.c.b16 %v1481, %v1479
      %v1494 = vpack.c.b16 %v1484, %v1482
      %v1495 = vpack.c.b16 %v1485, %v1483
      %v1496 = vpack.c.b16 %v1488, %v1486
      %v1497 = vpack.c.b16 %v1489, %v1487
      %v1507 = vsel %vm530, %v1465, 0
      %1509 = vmatprep.subr.bf16.mxu0 %v1491
      %1510 = vmatpush1.bf16.msra.mxu0 %v1490
      %1511 = vmatprep.subr.bf16.mxu0 %v1493
      %1512 = vmatpush1.bf16.msra.mxu0 %v1492
      %1513 = vmatprep.subr.bf16.mxu0 %v1495
      %1514 = vmatpush1.bf16.msra.mxu0 %v1494
      %1515 = vmatprep.subr.bf16.mxu0 %v1497
      %1516 = vmatpush1.bf16.msra.mxu0 %v1496
      %1517 = vmatprep.subr.bf16.mxu0 0
      %1518 = vmatpush1.bf16.msra.mxu0 0
      %1519 = vmatprep.subr.bf16.mxu0 0
      %1520 = vmatpush1.bf16.msra.mxu0 0
      %1521 = vmatprep.subr.bf16.mxu0 0
      %1522 = vmatpush1.bf16.msra.mxu0 0
      %1523 = vmatprep.subr.bf16.mxu0 0
      %1524 = vmatpush1.bf16.msra.mxu0 0
      %1525 = vmatprep.subr.bf16.mxu0 0
      %1526 = vmatpush1.bf16.msra.mxu0 0
      %1527 = vmatprep.subr.bf16.mxu0 0
      %1528 = vmatpush1.bf16.msra.mxu0 0
      %1529 = vmatprep.subr.bf16.mxu0 0
      %1530 = vmatpush1.bf16.msra.mxu0 0
      %1531 = vmatprep.subr.bf16.mxu0 0
      %1532 = vmatpush1.bf16.msra.mxu0 0
      %1533 = vmatprep.subr.bf16.mxu0 0
      %1534 = vmatpush1.bf16.msra.mxu0 0
      %1535 = vmatprep.subr.bf16.mxu0 0
      %1536 = vmatpush1.bf16.msra.mxu0 0
      %1537 = vmatprep.subr.bf16.mxu0 0
      %1538 = vmatpush1.bf16.msra.mxu0 0
      %1539 = vmatprep.subr.bf16.mxu0 0
      %1540 = vmatpush1.bf16.msra.mxu0 0
      %1541 = vmatprep.mubr.bf16.mxu0 0
      %1542 = vmatmul.mubr.bf16.gmra.mrb[0].mxu0 %v1507
      %v1543 = vpop.f32.mrb[0].mxu0
      %v1544 = vadd.f32 0.0, %v1543
      %v1545 = vpop.f32.mrb[0].mxu0
      %v1546 = vadd.f32 0.0, %v1545
      %v1547 = vpop.f32.mrb[0].mxu0
      %v1548 = vpop.f32.mrb[0].mxu0
      %1549 = vdwg.mxu0
      %v1550 = vmul.f32 %v1544, %v1544
      %v1551 = vmul.f32 %v1544, %v1550
      %v1552 = vmul.f32 %v1551, 0.044715
      %v1553 = vadd.f32 %v1544, %v1552
      %v1554 = vmul.f32 %v1553, 0.7978846
      %v1555 = vtanh.pop %v1554
      %v1556 = vadd.f32 %v1555, 1.0
      %v1557 = vmul.f32 %v1556, 0.5
      %v1558 = vmul.f32 %v1544, %v1557
      %v1559 = vmul.f32 %v1558, %v1546
      %v1560 = vpack.c.bf16 %v1559, %v1559
      %v1577 = vunpack.c.l.b16 %v512
      %v1578 = vunpack.c.l.b16 %v513
      %v1579 = vunpack.c.l.b16 %v514
      %v1580 = vunpack.c.l.b16 %v515
      %v1581 = vunpack.c.l.b16 %v516
      %v1582 = vunpack.c.l.b16 %v517
      %v1583 = vunpack.c.l.b16 %v518
      %v1584 = vunpack.c.l.b16 %v519
      %v1585 = vunpack.c.l.b16 %v520
      %v1586 = vunpack.c.l.b16 %v521
      %v1587 = vunpack.c.l.b16 %v522
      %v1588 = vunpack.c.l.b16 %v523
      %v1589 = vunpack.c.l.b16 %v524
      %v1590 = vunpack.c.l.b16 %v525
      %v1591 = vunpack.c.l.b16 %v526
      %v1592 = vunpack.c.l.b16 %v527
      %v1593 = vpack.c.b16 %v1578, %v1577
      %v1594 = vpack.c.b16 %v1580, %v1579
      %v1595 = vpack.c.b16 %v1582, %v1581
      %v1596 = vpack.c.b16 %v1584, %v1583
      %v1597 = vpack.c.b16 %v1586, %v1585
      %v1598 = vpack.c.b16 %v1588, %v1587
      %v1599 = vpack.c.b16 %v1590, %v1589
      %v1600 = vpack.c.b16 %v1592, %v1591
      %1609 = vmatprep.subr.bf16.mxu0 0
      %1610 = vmatpush1.bf16.msra.mxu0 %v1593
      %1611 = vmatprep.subr.bf16.mxu0 0
      %1612 = vmatpush1.bf16.msra.mxu0 %v1594
      %1613 = vmatprep.subr.bf16.mxu0 0
      %1614 = vmatpush1.bf16.msra.mxu0 %v1595
      %1615 = vmatprep.subr.bf16.mxu0 0
      %1616 = vmatpush1.bf16.msra.mxu0 %v1596
      %1617 = vmatprep.subr.bf16.mxu0 0
      %1618 = vmatpush1.bf16.msra.mxu0 %v1597
      %1619 = vmatprep.subr.bf16.mxu0 0
      %1620 = vmatpush1.bf16.msra.mxu0 %v1598
      %1621 = vmatprep.subr.bf16.mxu0 0
      %1622 = vmatpush1.bf16.msra.mxu0 %v1599
      %1623 = vmatprep.subr.bf16.mxu0 0
      %1624 = vmatpush1.bf16.msra.mxu0 %v1600
      %1625 = vmatprep.subr.bf16.mxu0 0
      %1626 = vmatpush1.bf16.msra.mxu0 0
      %1627 = vmatprep.subr.bf16.mxu0 0
      %1628 = vmatpush1.bf16.msra.mxu0 0
      %1629 = vmatprep.subr.bf16.mxu0 0
      %1630 = vmatpush1.bf16.msra.mxu0 0
      %1631 = vmatprep.subr.bf16.mxu0 0
      %1632 = vmatpush1.bf16.msra.mxu0 0
      %1633 = vmatprep.subr.bf16.mxu0 0
      %1634 = vmatpush1.bf16.msra.mxu0 0
      %1635 = vmatprep.subr.bf16.mxu0 0
      %1636 = vmatpush1.bf16.msra.mxu0 0
      %1637 = vmatprep.subr.bf16.mxu0 0
      %1638 = vmatpush1.bf16.msra.mxu0 0
      %1639 = vmatprep.subr.bf16.mxu0 0
      %1640 = vmatpush1.bf16.msra.mxu0 0
      %1641 = vmatprep.mubr.bf16.mxu0 0
      %1642 = vmatmul.mubr.bf16.gmra.mrb[0].mxu0 %v1560
      %v1643 = vpop.f32.mrb[0].mxu0
      %v1644 = vadd.f32 0.0, %v1643
      %v1645 = vpop.f32.mrb[0].mxu0
      %v1646 = vpop.f32.mrb[0].mxu0
      %v1647 = vpop.f32.mrb[0].mxu0
      %1648 = vdwg.mxu0
      %v1649 = vmul.f32 %v1644, %v1644
      %v1650 = vsel %vm530, %v1649, 0.0
      %1651 = vadd.xlane.f32.xlu0 %v1650
      %v1652 = vpop.xlane.xlu0 %1651
      %v1653 = vmul.f32 %v1652, %v534
      %v1654 = vadd.f32 %v1653, 1e-06
      %v1655 = vrsqrt.pop %v1654
      %v1656 = vmul.f32 %v1644, %v1655
      %v1657 = vadd.f32 %v528, 1.0
      %v1659 = vlaneseq
      %v1660 = vshrl.u32 %v1659, 7
      %v1661 = vsub.s32 0, %v1660
      %v1662 = vrot.slane %v1657, %v1661
      %v1664 = vmul.f32 %v1656, %v1662
      %v1665 = vadd.f32 %v1448, %v1664
      %v1666 = vpack.c.bf16 %v1665, %v1665
      %vm1667 = vcmask 519168
      %1668 = vst.msk [vmem:[%s476] sm:$0xf] %vm1667, %v1666
      %p1669 = scmp.lt.s32.totalorder %s25, 1
      %s1670 = scalar_select %p1669, %s25, 1
      %s1671 = smul.addr %s1670, 4
      %s1672 = scalar_lea.vmem %s14, %s1671
      // Predicated region
      $region77: #{forward.2} parent=75 // pred_check
        %p1673 = pneg %p347
      $region78: #{forward.2} parent=75 // pred_check_branch
        %1675 = sbr.rel (%p1673) target = $region80
      $region79: #{forward.2} parent=75 // pred_region
        _
      $region80: #{forward.2} parent=75 // pred_fallthru
        _
    $region76: #{forward.2} parent=5 // pred_fallthru
      _
    %p1676 = scmp.le.s32.totalorder 2, %s20
    // Predicated region
    $region81: #{forward.2} parent=5 // pred_check
      %p1677 = pneg %p1676
    $region82: #{forward.2} parent=5 // pred_check_branch
      %1679 = sbr.rel (%p1677) target = $region84
    $region83: #{forward.2} parent=5 // pred_region
      %s1680 = ssub.s32 %s20, 2
      // Predicated region
      $region85: #{forward.2} parent=83 // pred_check
        %p1681 = pneg %p353
      $region86: #{forward.2} parent=83 // pred_check_branch
        %1683 = sbr.rel (%p1681) target = $region88
      $region87: #{forward.2} parent=83 // pred_region
        %p1684 = scmp.lt.s32.totalorder %s26, 1
        %s1685 = scalar_select %p1684, %s26, 1
        %s1686 = smul.addr %s1685, 4
        %s1687 = scalar_lea.vmem %s14, %s1686
      $region88: #{forward.2} parent=83 // pred_fallthru
        _
    $region84: #{forward.2} parent=5 // pred_fallthru
      _
  $region6: #{forward.2} parent=0 // loop_footer
    %s24 = sadd.s32 1, %s20
  $region7: #{forward.2} parent=0 // loop_footer_branch
    %19 = sbr.rel target = $region3
  $region8: #{forward.2} parent=0 // loop_exit
    _

// kernel: forward.3
$region0: #{forward.3}
  #allocation0 [shape = 'u32[]', space=smem, size = 0x4, offset = 0x4, fixed_abs, tag = 'smem constant byte address 0x4 - core index']
  #allocation1 [shape = 'u32[144,128]{1,0:T(1,128)}', space=vmem, size = 0x12000, scoped, tag = 'internal scratch']
  %s0 = inlined_call_operand.vmem [shape: bf16[2,8,64], index: 0, kind: input, shape index: {}]
  %s1 = inlined_call_operand.vmem [shape: s32[2,1,8], index: 1, kind: input, shape index: {}]
  %s2 = inlined_call_operand.vmem [shape: f32[8,8], index: 2, kind: input, shape index: {}]
  %s3 = inlined_call_operand.vmem [shape: f32[8,8], index: 3, kind: input, shape index: {}]
  %s4 = inlined_call_operand.vmem [shape: f32[1,64], index: 4, kind: input, shape index: {}]
  %s5 = inlined_call_operand.vmem [shape: bf16[64,128], index: 5, kind: input, shape index: {}]
  %s6 = inlined_call_operand.vmem [shape: f32[1,16], index: 6, kind: input, shape index: {}]
  %s7 = inlined_call_operand.vmem [shape: f32[1,16], index: 7, kind: input, shape index: {}]
  %s8 = inlined_call_operand.vmem [shape: bf16[64,64], index: 8, kind: input, shape index: {}]
  %s9 = inlined_call_operand.vmem [shape: f32[1,64], index: 9, kind: input, shape index: {}]
  %s10 = inlined_call_operand.vmem [shape: f32[1,64], index: 10, kind: input, shape index: {}]
  %s11 = inlined_call_operand.vmem [shape: bf16[64,256], index: 11, kind: input, shape index: {}]
  %s12 = inlined_call_operand.vmem [shape: bf16[128,64], index: 12, kind: input, shape index: {}]
  %s13 = inlined_call_operand.vmem [shape: f32[1,64], index: 13, kind: input, shape index: {}]
  %s14 = inlined_call_operand.vmem [shape: f32[1,64], index: 14, kind: input, shape index: {}]
  %s15 = inlined_call_operand.vmem [shape: f32[1,64], index: 15, kind: input, shape index: {}]
  %s16 = inlined_call_operand.hbm [shape: f32[2,1,8], index: 16, kind: output, shape index: {}]
  %s17 = sld [smem:[#allocation0]]
  $region97: #{forward.3} parent=0
    _
  %s19 = ssub.s32 1, %s17
  %s20 = scalar_select 0, %s19, %s17
  $region1: #{forward.3} parent=0
    #allocation2 [shape = 'u8[1024]{0}', space=vmem, size = 0x400, scoped, tag = 'output window, operand 0']
    #allocation3 [shape = 's32[2]{0}', space=sflag, size = 0x8, scoped, tag = 'scoped memory for forward.3']
    %21 = vsyncpa [#allocation3], 0
    %s22 = scalar_lea.sflag [#allocation3], 1
    %23 = vsyncpa %s22, 0
    loop: start=0, step=1, limit=4
    $region2: #{forward.3} parent=1 // loop_pre_header
      _
    $region3: #{forward.3} parent=1 // loop_header
      %s25 = sphi 0, %s29
      %p26 = scmp.ge.s32.totalorder %s25, 4
      %s35 = sphi 0, %s37
      %s38 = sphi 0, %s35
      %s39 = sphi 0, %s38
      %s55 = sphi 0, %s39
      %s61 = sphi 0, %s63
      %s64 = sphi 0, %s61
      %s65 = sphi 0, %s64
      %s81 = sphi 0, %s65
      %s85 = sphi 0, %s85
      %s87 = sphi 0, %s85
      %s88 = sphi 0, %s87
      %s102 = sphi 0, %s88
      %s106 = sphi 0, %s106
      %s108 = sphi 0, %s106
      %s109 = sphi 0, %s108
      %s123 = sphi 0, %s109
      %s127 = sphi 0, %s127
      %s129 = sphi 0, %s127
      %s130 = sphi 0, %s129
      %s144 = sphi 0, %s130
      %s148 = sphi 0, %s148
      %s150 = sphi 0, %s148
      %s151 = sphi 0, %s150
      %s165 = sphi 0, %s151
      %s169 = sphi 0, %s169
      %s171 = sphi 0, %s169
      %s172 = sphi 0, %s171
      %s186 = sphi 0, %s172
      %s190 = sphi 0, %s190
      %s192 = sphi 0, %s190
      %s193 = sphi 0, %s192
      %s207 = sphi 0, %s193
      %s211 = sphi 0, %s211
      %s213 = sphi 0, %s211
      %s214 = sphi 0, %s213
      %s228 = sphi 0, %s214
      %s232 = sphi 0, %s232
      %s234 = sphi 0, %s232
      %s235 = sphi 0, %s234
      %s249 = sphi 0, %s235
      %s253 = sphi 0, %s253
      %s255 = sphi 0, %s253
      %s256 = sphi 0, %s255
      %s270 = sphi 0, %s256
      %s274 = sphi 0, %s274
      %s276 = sphi 0, %s274
      %s277 = sphi 0, %s276
      %s291 = sphi 0, %s277
      %s295 = sphi 0, %s295
      %s297 = sphi 0, %s295
      %s298 = sphi 0, %s297
      %s312 = sphi 0, %s298
      %s316 = sphi 0, %s316
      %s318 = sphi 0, %s316
      %s319 = sphi 0, %s318
      %s333 = sphi 0, %s319
      %s337 = sphi 0, %s337
      %s339 = sphi 0, %s337
      %s340 = sphi 0, %s339
      %s354 = sphi 0, %s340
      %s358 = sphi 0, %s358
      %s360 = sphi 0, %s358
      %s361 = sphi 0, %s360
      %s375 = sphi 0, %s361
      %s381 = sphi 0, %s383
      %s384 = sphi 0, %s381
      %s385 = sphi 0, %s384
      %s401 = sphi 0, %s385
    $region4: #{forward.3} parent=1 // loop_header_branch
      %28 = sbr.rel (%p26) target = $region8
    $region5: #{forward.3} parent=1 // loop_body
      %s30 = ssub.s32 %s25, 1
      %s31 = ssub.s32 %s25, 2
      %s32 = sadd.s32 %s25, 1
      %s33 = ssub.s32 %s25, %s32
      %p34 = scmp.eq.s32.totalorder %s33, 0
      %s36 = sadd.s32 %s35, 1
      %s37 = scalar_select %p34, %s35, %s36
      %p40 = pneg %p34
      %p41 = scmp.eq.s32.totalorder %s25, 1
      %p42 = por %p40, %p41
      %p43 = scmp.ne.s32.totalorder %s35, %s38
      %p44 = scmp.eq.s32.totalorder %s25, 0
      %p45 = por %p43, %p44
      %p46 = scmp.ne.s32.totalorder %s35, %s38
      %p47 = scmp.eq.s32.totalorder %s30, 1
      %p48 = por %p46, %p47
      %p49 = scmp.ne.s32.totalorder %s38, %s39
      %p50 = scmp.eq.s32.totalorder %s30, 0
      %p51 = por %p49, %p50
      %p52 = scmp.ne.s32.totalorder %s38, %s39
      %p53 = scmp.eq.s32.totalorder %s31, 1
      %p54 = por %p52, %p53
      %p56 = scmp.ne.s32.totalorder %s39, %s55
      %p57 = scmp.eq.s32.totalorder %s31, 0
      %p58 = por %p56, %p57
      %s59 = ssub.s32 %s25, %s32
      %p60 = scmp.eq.s32.totalorder %s59, 0
      %s62 = sadd.s32 %s61, 1
      %s63 = scalar_select %p60, %s61, %s62
      %p66 = pneg %p60
      %p67 = scmp.eq.s32.totalorder %s25, 1
      %p68 = por %p66, %p67
      %p69 = scmp.ne.s32.totalorder %s61, %s64
      %p70 = scmp.eq.s32.totalorder %s25, 0
      %p71 = por %p69, %p70
      %p72 = scmp.ne.s32.totalorder %s61, %s64
      %p73 = scmp.eq.s32.totalorder %s30, 1
      %p74 = por %p72, %p73
      %p75 = scmp.ne.s32.totalorder %s64, %s65
      %p76 = scmp.eq.s32.totalorder %s30, 0
      %p77 = por %p75, %p76
      %p78 = scmp.ne.s32.totalorder %s64, %s65
      %p79 = scmp.eq.s32.totalorder %s31, 1
      %p80 = por %p78, %p79
      %p82 = scmp.ne.s32.totalorder %s65, %s81
      %p83 = scmp.eq.s32.totalorder %s31, 0
      %p84 = por %p82, %p83
      %s86 = sadd.s32 %s85, 1
      %p89 = scmp.eq.s32.totalorder %s25, 1
      %p90 = scmp.ne.s32.totalorder %s85, %s87
      %p91 = scmp.eq.s32.totalorder %s25, 0
      %p92 = por %p90, %p91
      %p93 = scmp.ne.s32.totalorder %s85, %s87
      %p94 = scmp.eq.s32.totalorder %s30, 1
      %p95 = por %p93, %p94
      %p96 = scmp.ne.s32.totalorder %s87, %s88
      %p97 = scmp.eq.s32.totalorder %s30, 0
      %p98 = por %p96, %p97
      %p99 = scmp.ne.s32.totalorder %s87, %s88
      %p100 = scmp.eq.s32.totalorder %s31, 1
      %p101 = por %p99, %p100
      %p103 = scmp.ne.s32.totalorder %s88, %s102
      %p104 = scmp.eq.s32.totalorder %s31, 0
      %p105 = por %p103, %p104
      %s107 = sadd.s32 %s106, 1
      %p110 = scmp.eq.s32.totalorder %s25, 1
      %p111 = scmp.ne.s32.totalorder %s106, %s108
      %p112 = scmp.eq.s32.totalorder %s25, 0
      %p113 = por %p111, %p112
      %p114 = scmp.ne.s32.totalorder %s106, %s108
      %p115 = scmp.eq.s32.totalorder %s30, 1
      %p116 = por %p114, %p115
      %p117 = scmp.ne.s32.totalorder %s108, %s109
      %p118 = scmp.eq.s32.totalorder %s30, 0
      %p119 = por %p117, %p118
      %p120 = scmp.ne.s32.totalorder %s108, %s109
      %p121 = scmp.eq.s32.totalorder %s31, 1
      %p122 = por %p120, %p121
      %p124 = scmp.ne.s32.totalorder %s109, %s123
      %p125 = scmp.eq.s32.totalorder %s31, 0
      %p126 = por %p124, %p125
      %s128 = sadd.s32 %s127, 1
      %p131 = scmp.eq.s32.totalorder %s25, 1
      %p132 = scmp.ne.s32.totalorder %s127, %s129
      %p133 = scmp.eq.s32.totalorder %s25, 0
      %p134 = por %p132, %p133
      %p135 = scmp.ne.s32.totalorder %s127, %s129
      %p136 = scmp.eq.s32.totalorder %s30, 1
      %p137 = por %p135, %p136
      %p138 = scmp.ne.s32.totalorder %s129, %s130
      %p139 = scmp.eq.s32.totalorder %s30, 0
      %p140 = por %p138, %p139
      %p141 = scmp.ne.s32.totalorder %s129, %s130
      %p142 = scmp.eq.s32.totalorder %s31, 1
      %p143 = por %p141, %p142
      %p145 = scmp.ne.s32.totalorder %s130, %s144
      %p146 = scmp.eq.s32.totalorder %s31, 0
      %p147 = por %p145, %p146
      %s149 = sadd.s32 %s148, 1
      %p152 = scmp.eq.s32.totalorder %s25, 1
      %p153 = scmp.ne.s32.totalorder %s148, %s150
      %p154 = scmp.eq.s32.totalorder %s25, 0
      %p155 = por %p153, %p154
      %p156 = scmp.ne.s32.totalorder %s148, %s150
      %p157 = scmp.eq.s32.totalorder %s30, 1
      %p158 = por %p156, %p157
      %p159 = scmp.ne.s32.totalorder %s150, %s151
      %p160 = scmp.eq.s32.totalorder %s30, 0
      %p161 = por %p159, %p160
      %p162 = scmp.ne.s32.totalorder %s150, %s151
      %p163 = scmp.eq.s32.totalorder %s31, 1
      %p164 = por %p162, %p163
      %p166 = scmp.ne.s32.totalorder %s151, %s165
      %p167 = scmp.eq.s32.totalorder %s31, 0
      %p168 = por %p166, %p167
      %s170 = sadd.s32 %s169, 1
      %p173 = scmp.eq.s32.totalorder %s25, 1
      %p174 = scmp.ne.s32.totalorder %s169, %s171
      %p175 = scmp.eq.s32.totalorder %s25, 0
      %p176 = por %p174, %p175
      %p177 = scmp.ne.s32.totalorder %s169, %s171
      %p178 = scmp.eq.s32.totalorder %s30, 1
      %p179 = por %p177, %p178
      %p180 = scmp.ne.s32.totalorder %s171, %s172
      %p181 = scmp.eq.s32.totalorder %s30, 0
      %p182 = por %p180, %p181
      %p183 = scmp.ne.s32.totalorder %s171, %s172
      %p184 = scmp.eq.s32.totalorder %s31, 1
      %p185 = por %p183, %p184
      %p187 = scmp.ne.s32.totalorder %s172, %s186
      %p188 = scmp.eq.s32.totalorder %s31, 0
      %p189 = por %p187, %p188
      %s191 = sadd.s32 %s190, 1
      %p194 = scmp.eq.s32.totalorder %s25, 1
      %p195 = scmp.ne.s32.totalorder %s190, %s192
      %p196 = scmp.eq.s32.totalorder %s25, 0
      %p197 = por %p195, %p196
      %p198 = scmp.ne.s32.totalorder %s190, %s192
      %p199 = scmp.eq.s32.totalorder %s30, 1
      %p200 = por %p198, %p199
      %p201 = scmp.ne.s32.totalorder %s192, %s193
      %p202 = scmp.eq.s32.totalorder %s30, 0
      %p203 = por %p201, %p202
      %p204 = scmp.ne.s32.totalorder %s192, %s193
      %p205 = scmp.eq.s32.totalorder %s31, 1
      %p206 = por %p204, %p205
      %p208 = scmp.ne.s32.totalorder %s193, %s207
      %p209 = scmp.eq.s32.totalorder %s31, 0
      %p210 = por %p208, %p209
      %s212 = sadd.s32 %s211, 1
      %p215 = scmp.eq.s32.totalorder %s25, 1
      %p216 = scmp.ne.s32.totalorder %s211, %s213
      %p217 = scmp.eq.s32.totalorder %s25, 0
      %p218 = por %p216, %p217
      %p219 = scmp.ne.s32.totalorder %s211, %s213
      %p220 = scmp.eq.s32.totalorder %s30, 1
      %p221 = por %p219, %p220
      %p222 = scmp.ne.s32.totalorder %s213, %s214
      %p223 = scmp.eq.s32.totalorder %s30, 0
      %p224 = por %p222, %p223
      %p225 = scmp.ne.s32.totalorder %s213, %s214
      %p226 = scmp.eq.s32.totalorder %s31, 1
      %p227 = por %p225, %p226
      %p229 = scmp.ne.s32.totalorder %s214, %s228
      %p230 = scmp.eq.s32.totalorder %s31, 0
      %p231 = por %p229, %p230
      %s233 = sadd.s32 %s232, 1
      %p236 = scmp.eq.s32.totalorder %s25, 1
      %p237 = scmp.ne.s32.totalorder %s232, %s234
      %p238 = scmp.eq.s32.totalorder %s25, 0
      %p239 = por %p237, %p238
      %p240 = scmp.ne.s32.totalorder %s232, %s234
      %p241 = scmp.eq.s32.totalorder %s30, 1
      %p242 = por %p240, %p241
      %p243 = scmp.ne.s32.totalorder %s234, %s235
      %p244 = scmp.eq.s32.totalorder %s30, 0
      %p245 = por %p243, %p244
      %p246 = scmp.ne.s32.totalorder %s234, %s235
      %p247 = scmp.eq.s32.totalorder %s31, 1
      %p248 = por %p246, %p247
      %p250 = scmp.ne.s32.totalorder %s235, %s249
      %p251 = scmp.eq.s32.totalorder %s31, 0
      %p252 = por %p250, %p251
      %s254 = sadd.s32 %s253, 1
      %p257 = scmp.eq.s32.totalorder %s25, 1
      %p258 = scmp.ne.s32.totalorder %s253, %s255
      %p259 = scmp.eq.s32.totalorder %s25, 0
      %p260 = por %p258, %p259
      %p261 = scmp.ne.s32.totalorder %s253, %s255
      %p262 = scmp.eq.s32.totalorder %s30, 1
      %p263 = por %p261, %p262
      %p264 = scmp.ne.s32.totalorder %s255, %s256
      %p265 = scmp.eq.s32.totalorder %s30, 0
      %p266 = por %p264, %p265
      %p267 = scmp.ne.s32.totalorder %s255, %s256
      %p268 = scmp.eq.s32.totalorder %s31, 1
      %p269 = por %p267, %p268
      %p271 = scmp.ne.s32.totalorder %s256, %s270
      %p272 = scmp.eq.s32.totalorder %s31, 0
      %p273 = por %p271, %p272
      %s275 = sadd.s32 %s274, 1
      %p278 = scmp.eq.s32.totalorder %s25, 1
      %p279 = scmp.ne.s32.totalorder %s274, %s276
      %p280 = scmp.eq.s32.totalorder %s25, 0
      %p281 = por %p279, %p280
      %p282 = scmp.ne.s32.totalorder %s274, %s276
      %p283 = scmp.eq.s32.totalorder %s30, 1
      %p284 = por %p282, %p283
      %p285 = scmp.ne.s32.totalorder %s276, %s277
      %p286 = scmp.eq.s32.totalorder %s30, 0
      %p287 = por %p285, %p286
      %p288 = scmp.ne.s32.totalorder %s276, %s277
      %p289 = scmp.eq.s32.totalorder %s31, 1
      %p290 = por %p288, %p289
      %p292 = scmp.ne.s32.totalorder %s277, %s291
      %p293 = scmp.eq.s32.totalorder %s31, 0
      %p294 = por %p292, %p293
      %s296 = sadd.s32 %s295, 1
      %p299 = scmp.eq.s32.totalorder %s25, 1
      %p300 = scmp.ne.s32.totalorder %s295, %s297
      %p301 = scmp.eq.s32.totalorder %s25, 0
      %p302 = por %p300, %p301
      %p303 = scmp.ne.s32.totalorder %s295, %s297
      %p304 = scmp.eq.s32.totalorder %s30, 1
      %p305 = por %p303, %p304
      %p306 = scmp.ne.s32.totalorder %s297, %s298
      %p307 = scmp.eq.s32.totalorder %s30, 0
      %p308 = por %p306, %p307
      %p309 = scmp.ne.s32.totalorder %s297, %s298
      %p310 = scmp.eq.s32.totalorder %s31, 1
      %p311 = por %p309, %p310
      %p313 = scmp.ne.s32.totalorder %s298, %s312
      %p314 = scmp.eq.s32.totalorder %s31, 0
      %p315 = por %p313, %p314
      %s317 = sadd.s32 %s316, 1
      %p320 = scmp.eq.s32.totalorder %s25, 1
      %p321 = scmp.ne.s32.totalorder %s316, %s318
      %p322 = scmp.eq.s32.totalorder %s25, 0
      %p323 = por %p321, %p322
      %p324 = scmp.ne.s32.totalorder %s316, %s318
      %p325 = scmp.eq.s32.totalorder %s30, 1
      %p326 = por %p324, %p325
      %p327 = scmp.ne.s32.totalorder %s318, %s319
      %p328 = scmp.eq.s32.totalorder %s30, 0
      %p329 = por %p327, %p328
      %p330 = scmp.ne.s32.totalorder %s318, %s319
      %p331 = scmp.eq.s32.totalorder %s31, 1
      %p332 = por %p330, %p331
      %p334 = scmp.ne.s32.totalorder %s319, %s333
      %p335 = scmp.eq.s32.totalorder %s31, 0
      %p336 = por %p334, %p335
      %s338 = sadd.s32 %s337, 1
      %p341 = scmp.eq.s32.totalorder %s25, 1
      %p342 = scmp.ne.s32.totalorder %s337, %s339
      %p343 = scmp.eq.s32.totalorder %s25, 0
      %p344 = por %p342, %p343
      %p345 = scmp.ne.s32.totalorder %s337, %s339
      %p346 = scmp.eq.s32.totalorder %s30, 1
      %p347 = por %p345, %p346
      %p348 = scmp.ne.s32.totalorder %s339, %s340
      %p349 = scmp.eq.s32.totalorder %s30, 0
      %p350 = por %p348, %p349
      %p351 = scmp.ne.s32.totalorder %s339, %s340
      %p352 = scmp.eq.s32.totalorder %s31, 1
      %p353 = por %p351, %p352
      %p355 = scmp.ne.s32.totalorder %s340, %s354
      %p356 = scmp.eq.s32.totalorder %s31, 0
      %p357 = por %p355, %p356
      %s359 = sadd.s32 %s358, 1
      %p362 = scmp.eq.s32.totalorder %s25, 1
      %p363 = scmp.ne.s32.totalorder %s358, %s360
      %p364 = scmp.eq.s32.totalorder %s25, 0
      %p365 = por %p363, %p364
      %p366 = scmp.ne.s32.totalorder %s358, %s360
      %p367 = scmp.eq.s32.totalorder %s30, 1
      %p368 = por %p366, %p367
      %p369 = scmp.ne.s32.totalorder %s360, %s361
      %p370 = scmp.eq.s32.totalorder %s30, 0
      %p371 = por %p369, %p370
      %p372 = scmp.ne.s32.totalorder %s360, %s361
      %p373 = scmp.eq.s32.totalorder %s31, 1
      %p374 = por %p372, %p373
      %p376 = scmp.ne.s32.totalorder %s361, %s375
      %p377 = scmp.eq.s32.totalorder %s31, 0
      %p378 = por %p376, %p377
      %s379 = ssub.s32 %s25, %s32
      %p380 = scmp.eq.s32.totalorder %s379, 0
      %s382 = sadd.s32 %s381, 1
      %s383 = scalar_select %p380, %s381, %s382
      %p386 = pneg %p380
      %p387 = scmp.eq.s32.totalorder %s25, 1
      %p388 = por %p386, %p387
      %p389 = scmp.ne.s32.totalorder %s381, %s384
      %p390 = scmp.eq.s32.totalorder %s25, 0
      %p391 = por %p389, %p390
      %p392 = scmp.ne.s32.totalorder %s381, %s384
      %p393 = scmp.eq.s32.totalorder %s30, 1
      %p394 = por %p392, %p393
      %p395 = scmp.ne.s32.totalorder %s384, %s385
      %p396 = scmp.eq.s32.totalorder %s30, 0
      %p397 = por %p395, %p396
      %p398 = scmp.ne.s32.totalorder %s384, %s385
      %p399 = scmp.eq.s32.totalorder %s31, 1
      %p400 = por %p398, %p399
      %p402 = scmp.ne.s32.totalorder %s385, %s401
      %p403 = scmp.eq.s32.totalorder %s31, 0
      %p404 = por %p402, %p403
      %p405 = scmp.le.s32.totalorder 1, %s25
      %p406 = scmp.lt.s32.totalorder %s25, 3
      %p407 = pnand %p405, %p406
      %p408 = pneg %p407
      // Predicated region
      $region9: #{forward.3} parent=5 // pred_check
        _
      $region10: #{forward.3} parent=5 // pred_check_branch
        %410 = sbr.rel (%p407) target = $region12
      $region11: #{forward.3} parent=5 // pred_region
        %s411 = ssub.s32 %s25, 1
        // Predicated region
        $region13: #{forward.3} parent=11 // pred_check
          %p412 = pneg %p98
        $region14: #{forward.3} parent=11 // pred_check_branch
          %414 = sbr.rel (%p412) target = $region16
        $region15: #{forward.3} parent=11 // pred_region
          _
        $region16: #{forward.3} parent=11 // pred_fallthru
          _
        // Predicated region
        $region17: #{forward.3} parent=11 // pred_check
          %p415 = pneg %p119
        $region18: #{forward.3} parent=11 // pred_check_branch
          %417 = sbr.rel (%p415) target = $region20
        $region19: #{forward.3} parent=11 // pred_region
          _
        $region20: #{forward.3} parent=11 // pred_fallthru
          _
        // Predicated region
        $region21: #{forward.3} parent=11 // pred_check
          %p418 = pneg %p140
        $region22: #{forward.3} parent=11 // pred_check_branch
          %420 = sbr.rel (%p418) target = $region24
        $region23: #{forward.3} parent=11 // pred_region
          _
        $region24: #{forward.3} parent=11 // pred_fallthru
          _
        // Predicated region
        $region25: #{forward.3} parent=11 // pred_check
          %p421 = pneg %p161
        $region26: #{forward.3} parent=11 // pred_check_branch
          %423 = sbr.rel (%p421) target = $region28
        $region27: #{forward.3} parent=11 // pred_region
          _
        $region28: #{forward.3} parent=11 // pred_fallthru
          _
        // Predicated region
        $region29: #{forward.3} parent=11 // pred_check
          %p424 = pneg %p182
        $region30: #{forward.3} parent=11 // pred_check_branch
          %426 = sbr.rel (%p424) target = $region32
        $region31: #{forward.3} parent=11 // pred_region
          _
        $region32: #{forward.3} parent=11 // pred_fallthru
          _
        // Predicated region
        $region33: #{forward.3} parent=11 // pred_check
          %p427 = pneg %p203
        $region34: #{forward.3} parent=11 // pred_check_branch
          %429 = sbr.rel (%p427) target = $region36
        $region35: #{forward.3} parent=11 // pred_region
          _
        $region36: #{forward.3} parent=11 // pred_fallthru
          _
        // Predicated region
        $region37: #{forward.3} parent=11 // pred_check
          %p430 = pneg %p224
        $region38: #{forward.3} parent=11 // pred_check_branch
          %432 = sbr.rel (%p430) target = $region40
        $region39: #{forward.3} parent=11 // pred_region
          _
        $region40: #{forward.3} parent=11 // pred_fallthru
          _
        // Predicated region
        $region41: #{forward.3} parent=11 // pred_check
          %p433 = pneg %p245
        $region42: #{forward.3} parent=11 // pred_check_branch
          %435 = sbr.rel (%p433) target = $region44
        $region43: #{forward.3} parent=11 // pred_region
          _
        $region44: #{forward.3} parent=11 // pred_fallthru
          _
        // Predicated region
        $region45: #{forward.3} parent=11 // pred_check
          %p436 = pneg %p266
        $region46: #{forward.3} parent=11 // pred_check_branch
          %438 = sbr.rel (%p436) target = $region48
        $region47: #{forward.3} parent=11 // pred_region
          _
        $region48: #{forward.3} parent=11 // pred_fallthru
          _
        // Predicated region
        $region49: #{forward.3} parent=11 // pred_check
          %p439 = pneg %p287
        $region50: #{forward.3} parent=11 // pred_check_branch
          %441 = sbr.rel (%p439) target = $region52
        $region51: #{forward.3} parent=11 // pred_region
          _
        $region52: #{forward.3} parent=11 // pred_fallthru
          _
        // Predicated region
        $region53: #{forward.3} parent=11 // pred_check
          %p442 = pneg %p308
        $region54: #{forward.3} parent=11 // pred_check_branch
          %444 = sbr.rel (%p442) target = $region56
        $region55: #{forward.3} parent=11 // pred_region
          _
        $region56: #{forward.3} parent=11 // pred_fallthru
          _
        // Predicated region
        $region57: #{forward.3} parent=11 // pred_check
          %p445 = pneg %p329
        $region58: #{forward.3} parent=11 // pred_check_branch
          %447 = sbr.rel (%p445) target = $region60
        $region59: #{forward.3} parent=11 // pred_region
          _
        $region60: #{forward.3} parent=11 // pred_fallthru
          _
        // Predicated region
        $region61: #{forward.3} parent=11 // pred_check
          %p448 = pneg %p350
        $region62: #{forward.3} parent=11 // pred_check_branch
          %450 = sbr.rel (%p448) target = $region64
        $region63: #{forward.3} parent=11 // pred_region
          _
        $region64: #{forward.3} parent=11 // pred_fallthru
          _
        // Predicated region
        $region65: #{forward.3} parent=11 // pred_check
          %p451 = pneg %p371
        $region66: #{forward.3} parent=11 // pred_check_branch
          %453 = sbr.rel (%p451) target = $region68
        $region67: #{forward.3} parent=11 // pred_region
          _
        $region68: #{forward.3} parent=11 // pred_fallthru
          _
      $region12: #{forward.3} parent=5 // pred_fallthru
        _
      %p454 = scmp.lt.s32.totalorder %s25, 2
      // Predicated region
      $region69: #{forward.3} parent=5 // pred_check
        %p455 = pneg %p454
      $region70: #{forward.3} parent=5 // pred_check_branch
        %457 = sbr.rel (%p455) target = $region72
      $region71: #{forward.3} parent=5 // pred_region
        // Predicated region
        $region73: #{forward.3} parent=71 // pred_check
          %p458 = pneg %p45
        $region74: #{forward.3} parent=71 // pred_check_branch
          %460 = sbr.rel (%p458) target = $region76
        $region75: #{forward.3} parent=71 // pred_region
          %p461 = scmp.lt.s32.totalorder %s25, 1
          %s462 = scalar_select %p461, %s25, 1
          %s463 = smul.addr %s462, 4
          %s464 = scalar_lea.vmem %s0, %s463
        $region76: #{forward.3} parent=71 // pred_fallthru
          _
        // Predicated region
        $region77: #{forward.3} parent=71 // pred_check
          %p465 = pneg %p71
        $region78: #{forward.3} parent=71 // pred_check_branch
          %467 = sbr.rel (%p465) target = $region80
        $region79: #{forward.3} parent=71 // pred_region
          %p468 = scmp.lt.s32.totalorder %s25, 1
          %s469 = scalar_select %p468, %s25, 1
          %s470 = scalar_lea.vmem %s1, %s469
        $region80: #{forward.3} parent=71 // pred_fallthru
          _
      $region72: #{forward.3} parent=5 // pred_fallthru
        _
      %p471 = scmp.le.s32.totalorder 1, %s25
      %p472 = scmp.lt.s32.totalorder %s25, 3
      %p473 = pnand %p471, %p472
      %p474 = pneg %p473
      // Predicated region
      $region81: #{forward.3} parent=5 // pred_check
        _
      $region82: #{forward.3} parent=5 // pred_check_branch
        %476 = sbr.rel (%p473) target = $region84
      $region83: #{forward.3} parent=5 // pred_region
        %s477 = ssub.s32 %s25, 1
        %p478 = scmp.lt.s32.totalorder %s30, 1
        %s479 = scalar_select %p478, %s30, 1
        %s480 = smul.addr %s479, 4
        %s481 = scalar_lea.vmem %s0, %s480
        %p482 = pneg %p51
        %p483 = pneg %p48
        %p484 = scmp.lt.s32.totalorder %s30, 1
        %s485 = scalar_select %p484, %s30, 1
        %s486 = scalar_lea.vmem %s1, %s485
        %p487 = pneg %p77
        %p488 = pneg %p74
        %p489 = pneg %p98
        %p490 = pneg %p95
        %p491 = pneg %p119
        %p492 = pneg %p116
        %p493 = pneg %p140
        %p494 = pneg %p137
        %p495 = pneg %p161
        %p496 = pneg %p158
        %p497 = pneg %p182
        %p498 = pneg %p179
        %p499 = pneg %p203
        %p500 = pneg %p200
        %p501 = pneg %p224
        %p502 = pneg %p221
        %p503 = pneg %p245
        %p504 = pneg %p242
        %p505 = pneg %p266
        %p506 = pneg %p263
        %p507 = pneg %p287
        %p508 = pneg %p284
        %p509 = pneg %p308
        %p510 = pneg %p305
        %p511 = pneg %p329
        %p512 = pneg %p326
        %p513 = pneg %p350
        %p514 = pneg %p347
        %p515 = pneg %p371
        %p516 = pneg %p368
        %p517 = pneg %p397
        %p518 = pneg %p394
        %s519 = sand.u32 %s384, 1
        %s520 = scalar_lea.sflag [#allocation3], %s519
        %s521 = sand.u32 %s384, 1
        %s522 = scalar_lea.vmem [#allocation2], %s521
        %p523 = scmp.lt.s32.totalorder %s30, 1
        %s524 = scalar_select %p523, %s30, 1
        %s525 = smul.addr %s524, 4
        %s526 = scalar_lea.vmem %s0, %s525
        %p527 = scmp.lt.s32.totalorder %s30, 1
        %s528 = scalar_select %p527, %s30, 1
        %s529 = scalar_lea.vmem %s1, %s528
        %v531 = vld [vmem:[%s526] sm:$0xf]
        %v532 = vunpack.c.l.bf16 %v531
        %v533 = vld [vmem:[%s529] sm:$0x1]
        %v534 = vld [vmem:[%s2] sm:$0xff]
        %v535 = vld [vmem:[%s3] sm:$0xff]
        %v536 = vld [vmem:[%s4] sm:$0x1]
        %v537 = vld [vmem:[%s5] sm:$0xf]
        %v538 = vld [vmem:[%s5 + $0x4] sm:$0xf]
        %v539 = vld [vmem:[%s5 + $0x8] sm:$0xf]
        %v540 = vld [vmem:[%s5 + $0xc] sm:$0xf]
        %v541 = vld [vmem:[%s5 + $0x10] sm:$0xf]
        %v542 = vld [vmem:[%s5 + $0x14] sm:$0xf]
        %v543 = vld [vmem:[%s5 + $0x18] sm:$0xf]
        %v544 = vld [vmem:[%s5 + $0x1c] sm:$0xf]
        %v545 = vld [vmem:[%s6] sm:$0x1]
        %v546 = vld [vmem:[%s7] sm:$0x1]
        %v547 = vld [vmem:[%s8] sm:$0xf]
        %v548 = vld [vmem:[%s8 + $0x4] sm:$0xf]
        %v549 = vld [vmem:[%s8 + $0x8] sm:$0xf]
        %v550 = vld [vmem:[%s8 + $0xc] sm:$0xf]
        %v551 = vld [vmem:[%s8 + $0x10] sm:$0xf]
        %v552 = vld [vmem:[%s8 + $0x14] sm:$0xf]
        %v553 = vld [vmem:[%s8 + $0x18] sm:$0xf]
        %v554 = vld [vmem:[%s8 + $0x1c] sm:$0xf]
        %v555 = vld [vmem:[%s9] sm:$0x1]
        %v556 = vld [vmem:[%s10] sm:$0x1]
        %v557 = vld [vmem:[%s11] sm:$0xff]
        %v558 = vld [vmem:[%s11 + $0x8] sm:$0xff]
        %v559 = vld [vmem:[%s11 + $0x10] sm:$0xff]
        %v560 = vld [vmem:[%s11 + $0x18] sm:$0xff]
        %v561 = vld [vmem:[%s11 + $0x20] sm:$0xff]
        %v562 = vld [vmem:[%s11 + $0x28] sm:$0xff]
        %v563 = vld [vmem:[%s11 + $0x30] sm:$0xff]
        %v564 = vld [vmem:[%s11 + $0x38] sm:$0xff]
        %v565 = vld [vmem:[%s12] sm:$0xf]
        %v566 = vld [vmem:[%s12 + $0x4] sm:$0xf]
        %v567 = vld [vmem:[%s12 + $0x8] sm:$0xf]
        %v568 = vld [vmem:[%s12 + $0xc] sm:$0xf]
        %v569 = vld [vmem:[%s12 + $0x10] sm:$0xf]
        %v570 = vld [vmem:[%s12 + $0x14] sm:$0xf]
        %v571 = vld [vmem:[%s12 + $0x18] sm:$0xf]
        %v572 = vld [vmem:[%s12 + $0x1c] sm:$0xf]
        %v573 = vld [vmem:[%s12 + $0x20] sm:$0xf]
        %v574 = vld [vmem:[%s12 + $0x24] sm:$0xf]
        %v575 = vld [vmem:[%s12 + $0x28] sm:$0xf]
        %v576 = vld [vmem:[%s12 + $0x2c] sm:$0xf]
        %v577 = vld [vmem:[%s12 + $0x30] sm:$0xf]
        %v578 = vld [vmem:[%s12 + $0x34] sm:$0xf]
        %v579 = vld [vmem:[%s12 + $0x38] sm:$0xf]
        %v580 = vld [vmem:[%s12 + $0x3c] sm:$0xf]
        %v581 = vld [vmem:[%s13] sm:$0x1]
        %v582 = vmul.f32 %v532, %v532
        %vm583 = vcmask 523264
        %v584 = vsel %vm583, %v582, 0.0
        %585 = vadd.xlane.f32.xlu0 %v584
        %v586 = vpop.xlane.xlu0 %585
        %v587 = vrcp.pop 64.0
        %v588 = vmul.f32 %v586, %v587
        %v589 = vadd.f32 %v588, 1e-06
        %v590 = vrsqrt.pop %v589
        %v591 = vmul.f32 %v532, %v590
        %v592 = vadd.f32 %v536, 1.0
        %v594 = vlaneseq
        %v595 = vshrl.u32 %v594, 7
        %v596 = vsub.s32 0, %v595
        %v597 = vrot.slane %v592, %v596
        %v599 = vmul.f32 %v591, %v597
        %v600 = vpack.c.bf16 %v599, %v599
        %v609 = vunpack.c.l.b16 %v537
        %v610 = vunpack.c.l.b16 %v538
        %v611 = vunpack.c.l.b16 %v539
        %v612 = vunpack.c.l.b16 %v540
        %v613 = vunpack.c.l.b16 %v541
        %v614 = vunpack.c.l.b16 %v542
        %v615 = vunpack.c.l.b16 %v543
        %v616 = vunpack.c.l.b16 %v544
        %v617 = vpack.c.b16 %v610, %v609
        %v618 = vpack.c.b16 %v612, %v611
        %v619 = vpack.c.b16 %v614, %v613
        %v620 = vpack.c.b16 %v616, %v615
        %v626 = vsel %vm583, %v600, 0
        %628 = vmatprep.subr.bf16.mxu0 0
        %629 = vmatpush1.bf16.msra.mxu0 %v617
        %630 = vmatprep.subr.bf16.mxu0 0
        %631 = vmatpush1.bf16.msra.mxu0 %v618
        %632 = vmatprep.subr.bf16.mxu0 0
        %633 = vmatpush1.bf16.msra.mxu0 %v619
        %634 = vmatprep.subr.bf16.mxu0 0
        %635 = vmatpush1.bf16.msra.mxu0 %v620
        %636 = vmatprep.subr.bf16.mxu0 0
        %637 = vmatpush1.bf16.msra.mxu0 0
        %638 = vmatprep.subr.bf16.mxu0 0
        %639 = vmatpush1.bf16.msra.mxu0 0
        %640 = vmatprep.subr.bf16.mxu0 0
        %641 = vmatpush1.bf16.msra.mxu0 0
        %642 = vmatprep.subr.bf16.mxu0 0
        %643 = vmatpush1.bf16.msra.mxu0 0
        %644 = vmatprep.subr.bf16.mxu0 0
        %645 = vmatpush1.bf16.msra.mxu0 0
        %646 = vmatprep.subr.bf16.mxu0 0
        %647 = vmatpush1.bf16.msra.mxu0 0
        %648 = vmatprep.subr.bf16.mxu0 0
        %649 = vmatpush1.bf16.msra.mxu0 0
        %650 = vmatprep.subr.bf16.mxu0 0
        %651 = vmatpush1.bf16.msra.mxu0 0
        %652 = vmatprep.subr.bf16.mxu0 0
        %653 = vmatpush1.bf16.msra.mxu0 0
        %654 = vmatprep.subr.bf16.mxu0 0
        %655 = vmatpush1.bf16.msra.mxu0 0
        %656 = vmatprep.subr.bf16.mxu0 0
        %657 = vmatpush1.bf16.msra.mxu0 0
        %658 = vmatprep.subr.bf16.mxu0 0
        %659 = vmatpush1.bf16.msra.mxu0 0
        %660 = vmatprep.mubr.bf16.mxu0 0
        %661 = vmatmul.mubr.bf16.gmra.mrb[0].mxu0 %v626
        %v662 = vpop.f32.mrb[0].mxu0
        %v663 = vadd.f32 0.0, %v662
        %v664 = vpop.f32.mrb[0].mxu0
        %v665 = vpop.f32.mrb[0].mxu0
        %v666 = vpop.f32.mrb[0].mxu0
        %667 = vdwg.mxu0
        %v668 = vlaneseq
        %v669 = vshrl.u32 %v668, 7
        %v670 = vlaneseq
        %v671 = vand.u32 %v670, 127
        %vm672 = vcmp.le.s32.totalorder %v671, %v669
        %vm673 = vcmp.gt.s32.totalorder %v533, 0
        %v674 = vsel %vm673, 1, 0
        %v675 = vlaneseq
        %v676 = vshrl.u32 %v675, 7
        %v677 = vsub.s32 0, %v676
        %v678 = vrot.slane %v674, %v677
        %vm679 = vcmp.eq.s32.totalorder %v678, 1
        %vm680 = vmand %vm672, %vm679
        %v681 = vmul.f32 %v663, %v663
        %683 = vrot.lane.b32.xlu0 %v681, 64
        %v684 = vpop.permute.xlu0 %683
        %vm686 = vcmask 130048
        %v687 = vsel %vm686, %v684, 0.0
        %688 = vadd.xlane.f32.xlu0 %v687
        %v689 = vpop.xlane.xlu0 %688
        %v690 = vrcp.pop 16.0
        %v691 = vmul.f32 %v689, %v690
        %v692 = vadd.f32 %v691, 1e-06
        %v693 = vrsqrt.pop %v692
        %v694 = vmul.f32 %v663, %v693
        %v695 = vadd.f32 %v546, 1.0
        %v697 = vlaneseq
        %v698 = vshrl.u32 %v697, 7
        %v699 = vsub.s32 0, %v698
        %v700 = vrot.slane %v695, %v699
        %701 = vrot.lane.b32.xlu0 %v700, 64
        %v702 = vpop.permute.xlu0 %701
        %v704 = vmul.f32 %v694, %v702
        %706 = vrot.lane.b32.xlu0 %v534, 64
        %v707 = vpop.permute.xlu0 %706
        %v709 = vmul.f32 %v704, %v707
        %711 = vrot.lane.b32.xlu0 %v535, 72
        %v712 = vpop.permute.xlu0 %711
        %v714 = vmul.f32 %v704, %v712
        %716 = vrot.lane.b32.xlu0 %v714, 120
        %v717 = vpop.permute.xlu0 %716
        %v719 = vsub.f32 %v709, %v717
        %720 = vrot.lane.b32.xlu0 %v534, 72
        %v721 = vpop.permute.xlu0 %720
        %v723 = vmul.f32 %v704, %v721
        %724 = vrot.lane.b32.xlu0 %v535, 64
        %v725 = vpop.permute.xlu0 %724
        %v727 = vmul.f32 %v704, %v725
        %729 = vrot.lane.b32.xlu0 %v727, 8
        %v730 = vpop.permute.xlu0 %729
        %v732 = vadd.f32 %v723, %v730
        %734 = vrot.lane.b32.xlu0 %v719, 64
        %v735 = vpop.permute.xlu0 %734
        %738 = vrot.lane.b32.xlu0 %v732, 64
        %v739 = vpop.permute.xlu0 %738
        %vm741 = vcmask 64512
        %v742 = vsel %vm741, %v735, %v739
        %v743 = vpack.c.bf16 %v742, %v742
        %v744 = vpack.c.bf16 %v663, %v663
        %v745 = vsel %vm686, %v681, 0.0
        %746 = vadd.xlane.f32.xlu0 %v745
        %v747 = vpop.xlane.xlu0 %746
        %v748 = vmul.f32 %v747, %v690
        %v749 = vadd.f32 %v748, 1e-06
        %v750 = vrsqrt.pop %v749
        %v751 = vmul.f32 %v663, %v750
        %v752 = vadd.f32 %v545, 1.0
        %v754 = vlaneseq
        %v755 = vshrl.u32 %v754, 7
        %v756 = vsub.s32 0, %v755
        %v757 = vrot.slane %v752, %v756
        %v759 = vmul.f32 %v751, %v757
        %v760 = vmul.f32 %v759, 0.25
        %v761 = vmul.f32 %v760, %v534
        %762 = vrot.lane.b32.xlu0 %v535, 8
        %v763 = vpop.permute.xlu0 %762
        %v765 = vmul.f32 %v760, %v763
        %767 = vrot.lane.b32.xlu0 %v765, 120
        %v768 = vpop.permute.xlu0 %767
        %v770 = vsub.f32 %v761, %v768
        %771 = vrot.lane.b32.xlu0 %v534, 8
        %v772 = vpop.permute.xlu0 %771
        %v774 = vmul.f32 %v760, %v772
        %v775 = vmul.f32 %v760, %v535
        %777 = vrot.lane.b32.xlu0 %v775, 8
        %v778 = vpop.permute.xlu0 %777
        %v780 = vadd.f32 %v774, %v778
        %v781 = vsel %vm741, %v770, %v780
        %v782 = vpack.c.bf16 %v781, %v781
        %v784 = vsel %vm686, %v782, 0
        %v787 = vsel %vm686, %v743, 0
        %789 = vmatprep.subr.bf16.mxu0 0
        %790 = vmatpush1.bf16.xpose.msra.mxu0 %v787
        %791 = vmatprep.subr.bf16.mxu0 0
        %792 = vmatpush1.bf16.xpose.msra.mxu0 0
        %793 = vmatprep.subr.bf16.mxu0 0
        %794 = vmatpush1.bf16.xpose.msra.mxu0 0
        %795 = vmatprep.subr.bf16.mxu0 0
        %796 = vmatpush1.bf16.xpose.msra.mxu0 0
        %797 = vmatprep.subr.bf16.mxu0 0
        %798 = vmatpush1.bf16.xpose.msra.mxu0 0
        %799 = vmatprep.subr.bf16.mxu0 0
        %800 = vmatpush1.bf16.xpose.msra.mxu0 0
        %801 = vmatprep.subr.bf16.mxu0 0
        %802 = vmatpush1.bf16.xpose.msra.mxu0 0
        %803 = vmatprep.subr.bf16.mxu0 0
        %804 = vmatpush1.bf16.xpose.msra.mxu0 0
        %805 = vmatprep.subr.bf16.mxu0 0
        %806 = vmatpush1.bf16.xpose.msra.mxu0 0
        %807 = vmatprep.subr.bf16.mxu0 0
        %808 = vmatpush1.bf16.xpose.msra.mxu0 0
        %809 = vmatprep.subr.bf16.mxu0 0
        %810 = vmatpush1.bf16.xpose.msra.mxu0 0
        %811 = vmatprep.subr.bf16.mxu0 0
        %812 = vmatpush1.bf16.xpose.msra.mxu0 0
        %813 = vmatprep.subr.bf16.mxu0 0
        %814 = vmatpush1.bf16.xpose.msra.mxu0 0
        %815 = vmatprep.subr.bf16.mxu0 0
        %816 = vmatpush1.bf16.xpose.msra.mxu0 0
        %817 = vmatprep.subr.bf16.mxu0 0
        %818 = vmatpush1.bf16.xpose.msra.mxu0 0
        %819 = vmatprep.subr.bf16.mxu0 0
        %820 = vmatpush1.bf16.xpose.msra.mxu0 0
        %821 = vmatprep.mubr.bf16.mxu0 0
        %822 = vmatmul.mubr.bf16.gmra.mrb[0].mxu0 %v784
        %v823 = vpop.f32.mrb[0].mxu0
        %v824 = vadd.f32 0.0, %v823
        %v825 = vpop.f32.mrb[0].mxu0
        %v826 = vpop.f32.mrb[0].mxu0
        %v827 = vpop.f32.mrb[0].mxu0
        %828 = vdwg.mxu0
        %v829 = vsel %vm680, %v824, -1e+30
        %v830 = vsel %vm741, %v829, -inf
        %831 = vmax.xlane.f32.xlu0 %v830
        %v832 = vpop.xlane.xlu0 %831
        %v833 = vsub.f32 %v829, %v832
        %v834 = vmul.f32 %v833, 1.442695
        %v835 = vpow.pop %v834
        %v836 = vsel %vm741, %v835, 0.0
        %837 = vadd.xlane.f32.xlu0 %v836
        %v838 = vpop.xlane.xlu0 %837
        %v839 = vrcp.pop %v838
        %v840 = vmul.f32 %v835, %v839
        %v841 = vpack.c.bf16 %v840, %v840
        %843 = vrot.lane.b32.xlu0 %v744, 32
        %v844 = vpop.permute.xlu0 %843
        %v846 = vsel %vm741, %v841, 0
        %vm848 = vcmask 1043456
        %v850 = vsel %vm848, %v844, 0
        %852 = vmatprep.subr.bf16.mxu0 0
        %853 = vmatpush1.bf16.msra.mxu0 %v850
        %854 = vmatprep.subr.bf16.mxu0 0
        %855 = vmatpush1.bf16.msra.mxu0 0
        %856 = vmatprep.subr.bf16.mxu0 0
        %857 = vmatpush1.bf16.msra.mxu0 0
        %858 = vmatprep.subr.bf16.mxu0 0
        %859 = vmatpush1.bf16.msra.mxu0 0
        %860 = vmatprep.subr.bf16.mxu0 0
        %861 = vmatpush1.bf16.msra.mxu0 0
        %862 = vmatprep.subr.bf16.mxu0 0
        %863 = vmatpush1.bf16.msra.mxu0 0
        %864 = vmatprep.subr.bf16.mxu0 0
        %865 = vmatpush1.bf16.msra.mxu0 0
        %866 = vmatprep.subr.bf16.mxu0 0
        %867 = vmatpush1.bf16.msra.mxu0 0
        %868 = vmatprep.subr.bf16.mxu0 0
        %869 = vmatpush1.bf16.msra.mxu0 0
        %870 = vmatprep.subr.bf16.mxu0 0
        %871 = vmatpush1.bf16.msra.mxu0 0
        %872 = vmatprep.subr.bf16.mxu0 0
        %873 = vmatpush1.bf16.msra.mxu0 0
        %874 = vmatprep.subr.bf16.mxu0 0
        %875 = vmatpush1.bf16.msra.mxu0 0
        %876 = vmatprep.subr.bf16.mxu0 0
        %877 = vmatpush1.bf16.msra.mxu0 0
        %878 = vmatprep.subr.bf16.mxu0 0
        %879 = vmatpush1.bf16.msra.mxu0 0
        %880 = vmatprep.subr.bf16.mxu0 0
        %881 = vmatpush1.bf16.msra.mxu0 0
        %882 = vmatprep.subr.bf16.mxu0 0
        %883 = vmatpush1.bf16.msra.mxu0 0
        %884 = vmatprep.mubr.bf16.mxu0 0
        %885 = vmatmul.mubr.bf16.gmra.mrb[0].mxu0 %v846
        %v886 = vpop.f32.mrb[0].mxu0
        %v887 = vadd.f32 0.0, %v886
        %v888 = vpop.f32.mrb[0].mxu0
        %v889 = vpop.f32.mrb[0].mxu0
        %v890 = vpop.f32.mrb[0].mxu0
        %891 = vdwg.mxu0
        %892 = vrot.lane.b32.xlu0 %v681, 112
        %v893 = vpop.permute.xlu0 %892
        %v895 = vsel %vm686, %v893, 0.0
        %896 = vadd.xlane.f32.xlu0 %v895
        %v897 = vpop.xlane.xlu0 %896
        %v898 = vmul.f32 %v897, %v690
        %v899 = vadd.f32 %v898, 1e-06
        %v900 = vrsqrt.pop %v899
        %v901 = vmul.f32 %v663, %v900
        %902 = vrot.lane.b32.xlu0 %v757, 16
        %v903 = vpop.permute.xlu0 %902
        %v905 = vmul.f32 %v901, %v903
        %v906 = vmul.f32 %v905, 0.25
        %907 = vrot.lane.b32.xlu0 %v534, 16
        %v908 = vpop.permute.xlu0 %907
        %v910 = vmul.f32 %v906, %v908
        %911 = vrot.lane.b32.xlu0 %v535, 24
        %v912 = vpop.permute.xlu0 %911
        %v914 = vmul.f32 %v906, %v912
        %916 = vrot.lane.b32.xlu0 %v914, 120
        %v917 = vpop.permute.xlu0 %916
        %v919 = vsub.f32 %v910, %v917
        %920 = vrot.lane.b32.xlu0 %v534, 24
        %v921 = vpop.permute.xlu0 %920
        %v923 = vmul.f32 %v906, %v921
        %924 = vrot.lane.b32.xlu0 %v535, 16
        %v925 = vpop.permute.xlu0 %924
        %v927 = vmul.f32 %v906, %v925
        %929 = vrot.lane.b32.xlu0 %v927, 8
        %v930 = vpop.permute.xlu0 %929
        %v932 = vadd.f32 %v923, %v930
        %934 = vrot.lane.b32.xlu0 %v919, 112
        %v935 = vpop.permute.xlu0 %934
        %938 = vrot.lane.b32.xlu0 %v932, 112
        %v939 = vpop.permute.xlu0 %938
        %v941 = vsel %vm741, %v935, %v939
        %v942 = vpack.c.bf16 %v941, %v941
        %v944 = vsel %vm686, %v942, 0
        %946 = vmatprep.subr.bf16.mxu0 0
        %947 = vmatpush1.bf16.xpose.msra.mxu0 %v787
        %948 = vmatprep.subr.bf16.mxu0 0
        %949 = vmatpush1.bf16.xpose.msra.mxu0 0
        %950 = vmatprep.subr.bf16.mxu0 0
        %951 = vmatpush1.bf16.xpose.msra.mxu0 0
        %952 = vmatprep.subr.bf16.mxu0 0
        %953 = vmatpush1.bf16.xpose.msra.mxu0 0
        %954 = vmatprep.subr.bf16.mxu0 0
        %955 = vmatpush1.bf16.xpose.msra.mxu0 0
        %956 = vmatprep.subr.bf16.mxu0 0
        %957 = vmatpush1.bf16.xpose.msra.mxu0 0
        %958 = vmatprep.subr.bf16.mxu0 0
        %959 = vmatpush1.bf16.xpose.msra.mxu0 0
        %960 = vmatprep.subr.bf16.mxu0 0
        %961 = vmatpush1.bf16.xpose.msra.mxu0 0
        %962 = vmatprep.subr.bf16.mxu0 0
        %963 = vmatpush1.bf16.xpose.msra.mxu0 0
        %964 = vmatprep.subr.bf16.mxu0 0
        %965 = vmatpush1.bf16.xpose.msra.mxu0 0
        %966 = vmatprep.subr.bf16.mxu0 0
        %967 = vmatpush1.bf16.xpose.msra.mxu0 0
        %968 = vmatprep.subr.bf16.mxu0 0
        %969 = vmatpush1.bf16.xpose.msra.mxu0 0
        %970 = vmatprep.subr.bf16.mxu0 0
        %971 = vmatpush1.bf16.xpose.msra.mxu0 0
        %972 = vmatprep.subr.bf16.mxu0 0
        %973 = vmatpush1.bf16.xpose.msra.mxu0 0
        %974 = vmatprep.subr.bf16.mxu0 0
        %975 = vmatpush1.bf16.xpose.msra.mxu0 0
        %976 = vmatprep.subr.bf16.mxu0 0
        %977 = vmatpush1.bf16.xpose.msra.mxu0 0
        %978 = vmatprep.mubr.bf16.mxu0 0
        %979 = vmatmul.mubr.bf16.gmra.mrb[0].mxu0 %v944
        %v980 = vpop.f32.mrb[0].mxu0
        %v981 = vadd.f32 0.0, %v980
        %v982 = vpop.f32.mrb[0].mxu0
        %v983 = vpop.f32.mrb[0].mxu0
        %v984 = vpop.f32.mrb[0].mxu0
        %985 = vdwg.mxu0
        %v986 = vsel %vm680, %v981, -1e+30
        %v987 = vsel %vm741, %v986, -inf
        %988 = vmax.xlane.f32.xlu0 %v987
        %v989 = vpop.xlane.xlu0 %988
        %v990 = vsub.f32 %v986, %v989
        %v991 = vmul.f32 %v990, 1.442695
        %v992 = vpow.pop %v991
        %v993 = vsel %vm741, %v992, 0.0
        %994 = vadd.xlane.f32.xlu0 %v993
        %v995 = vpop.xlane.xlu0 %994
        %v996 = vrcp.pop %v995
        %v997 = vmul.f32 %v992, %v996
        %v998 = vpack.c.bf16 %v997, %v997
        %v1000 = vsel %vm741, %v998, 0
        %1002 = vmatprep.subr.bf16.mxu0 0
        %1003 = vmatpush1.bf16.msra.mxu0 %v850
        %1004 = vmatprep.subr.bf16.mxu0 0
        %1005 = vmatpush1.bf16.msra.mxu0 0
        %1006 = vmatprep.subr.bf16.mxu0 0
        %1007 = vmatpush1.bf16.msra.mxu0 0
        %1008 = vmatprep.subr.bf16.mxu0 0
        %1009 = vmatpush1.bf16.msra.mxu0 0
        %1010 = vmatprep.subr.bf16.mxu0 0
        %1011 = vmatpush1.bf16.msra.mxu0 0
        %1012 = vmatprep.subr.bf16.mxu0 0
        %1013 = vmatpush1.bf16.msra.mxu0 0
        %1014 = vmatprep.subr.bf16.mxu0 0
        %1015 = vmatpush1.bf16.msra.mxu0 0
        %1016 = vmatprep.subr.bf16.mxu0 0
        %1017 = vmatpush1.bf16.msra.mxu0 0
        %1018 = vmatprep.subr.bf16.mxu0 0
        %1019 = vmatpush1.bf16.msra.mxu0 0
        %1020 = vmatprep.subr.bf16.mxu0 0
        %1021 = vmatpush1.bf16.msra.mxu0 0
        %1022 = vmatprep.subr.bf16.mxu0 0
        %1023 = vmatpush1.bf16.msra.mxu0 0
        %1024 = vmatprep.subr.bf16.mxu0 0
        %1025 = vmatpush1.bf16.msra.mxu0 0
        %1026 = vmatprep.subr.bf16.mxu0 0
        %1027 = vmatpush1.bf16.msra.mxu0 0
        %1028 = vmatprep.subr.bf16.mxu0 0
        %1029 = vmatpush1.bf16.msra.mxu0 0
        %1030 = vmatprep.subr.bf16.mxu0 0
        %1031 = vmatpush1.bf16.msra.mxu0 0
        %1032 = vmatprep.subr.bf16.mxu0 0
        %1033 = vmatpush1.bf16.msra.mxu0 0
        %1034 = vmatprep.mubr.bf16.mxu0 0
        %1035 = vmatmul.mubr.bf16.gmra.mrb[0].mxu0 %v1000
        %v1036 = vpop.f32.mrb[0].mxu0
        %v1037 = vadd.f32 0.0, %v1036
        %v1038 = vpop.f32.mrb[0].mxu0
        %v1039 = vpop.f32.mrb[0].mxu0
        %v1040 = vpop.f32.mrb[0].mxu0
        %1041 = vdwg.mxu0
        %1042 = vrot.lane.b32.xlu0 %v681, 48
        %v1043 = vpop.permute.xlu0 %1042
        %v1045 = vsel %vm686, %v1043, 0.0
        %1046 = vadd.xlane.f32.xlu0 %v1045
        %v1047 = vpop.xlane.xlu0 %1046
        %v1048 = vmul.f32 %v1047, %v690
        %v1049 = vadd.f32 %v1048, 1e-06
        %v1050 = vrsqrt.pop %v1049
        %v1051 = vmul.f32 %v663, %v1050
        %1052 = vrot.lane.b32.xlu0 %v700, 80
        %v1053 = vpop.permute.xlu0 %1052
        %v1055 = vmul.f32 %v1051, %v1053
        %1056 = vrot.lane.b32.xlu0 %v534, 80
        %v1057 = vpop.permute.xlu0 %1056
        %v1059 = vmul.f32 %v1055, %v1057
        %1060 = vrot.lane.b32.xlu0 %v535, 88
        %v1061 = vpop.permute.xlu0 %1060
        %v1063 = vmul.f32 %v1055, %v1061
        %1065 = vrot.lane.b32.xlu0 %v1063, 120
        %v1066 = vpop.permute.xlu0 %1065
        %v1068 = vsub.f32 %v1059, %v1066
        %1069 = vrot.lane.b32.xlu0 %v534, 88
        %v1070 = vpop.permute.xlu0 %1069
        %v1072 = vmul.f32 %v1055, %v1070
        %1073 = vrot.lane.b32.xlu0 %v535, 80
        %v1074 = vpop.permute.xlu0 %1073
        %v1076 = vmul.f32 %v1055, %v1074
        %1078 = vrot.lane.b32.xlu0 %v1076, 8
        %v1079 = vpop.permute.xlu0 %1078
        %v1081 = vadd.f32 %v1072, %v1079
        %1083 = vrot.lane.b32.xlu0 %v1068, 48
        %v1084 = vpop.permute.xlu0 %1083
        %1087 = vrot.lane.b32.xlu0 %v1081, 48
        %v1088 = vpop.permute.xlu0 %1087
        %v1090 = vsel %vm741, %v1084, %v1088
        %v1091 = vpack.c.bf16 %v1090, %v1090
        %1092 = vrot.lane.b32.xlu0 %v681, 96
        %v1093 = vpop.permute.xlu0 %1092
        %v1095 = vsel %vm686, %v1093, 0.0
        %1096 = vadd.xlane.f32.xlu0 %v1095
        %v1097 = vpop.xlane.xlu0 %1096
        %v1098 = vmul.f32 %v1097, %v690
        %v1099 = vadd.f32 %v1098, 1e-06
        %v1100 = vrsqrt.pop %v1099
        %v1101 = vmul.f32 %v663, %v1100
        %1102 = vrot.lane.b32.xlu0 %v757, 32
        %v1103 = vpop.permute.xlu0 %1102
        %v1105 = vmul.f32 %v1101, %v1103
        %v1106 = vmul.f32 %v1105, 0.25
        %1107 = vrot.lane.b32.xlu0 %v534, 32
        %v1108 = vpop.permute.xlu0 %1107
        %v1110 = vmul.f32 %v1106, %v1108
        %1111 = vrot.lane.b32.xlu0 %v535, 40
        %v1112 = vpop.permute.xlu0 %1111
        %v1114 = vmul.f32 %v1106, %v1112
        %1116 = vrot.lane.b32.xlu0 %v1114, 120
        %v1117 = vpop.permute.xlu0 %1116
        %v1119 = vsub.f32 %v1110, %v1117
        %1120 = vrot.lane.b32.xlu0 %v534, 40
        %v1121 = vpop.permute.xlu0 %1120
        %v1123 = vmul.f32 %v1106, %v1121
        %1124 = vrot.lane.b32.xlu0 %v535, 32
        %v1125 = vpop.permute.xlu0 %1124
        %v1127 = vmul.f32 %v1106, %v1125
        %1129 = vrot.lane.b32.xlu0 %v1127, 8
        %v1130 = vpop.permute.xlu0 %1129
        %v1132 = vadd.f32 %v1123, %v1130
        %1134 = vrot.lane.b32.xlu0 %v1119, 96
        %v1135 = vpop.permute.xlu0 %1134
        %1138 = vrot.lane.b32.xlu0 %v1132, 96
        %v1139 = vpop.permute.xlu0 %1138
        %v1141 = vsel %vm741, %v1135, %v1139
        %v1142 = vpack.c.bf16 %v1141, %v1141
        %v1144 = vsel %vm686, %v1142, 0
        %v1147 = vsel %vm686, %v1091, 0
        %1149 = vmatprep.subr.bf16.mxu0 0
        %1150 = vmatpush1.bf16.xpose.msra.mxu0 %v1147
        %1151 = vmatprep.subr.bf16.mxu0 0
        %1152 = vmatpush1.bf16.xpose.msra.mxu0 0
        %1153 = vmatprep.subr.bf16.mxu0 0
        %1154 = vmatpush1.bf16.xpose.msra.mxu0 0
        %1155 = vmatprep.subr.bf16.mxu0 0
        %1156 = vmatpush1.bf16.xpose.msra.mxu0 0
        %1157 = vmatprep.subr.bf16.mxu0 0
        %1158 = vmatpush1.bf16.xpose.msra.mxu0 0
        %1159 = vmatprep.subr.bf16.mxu0 0
        %1160 = vmatpush1.bf16.xpose.msra.mxu0 0
        %1161 = vmatprep.subr.bf16.mxu0 0
        %1162 = vmatpush1.bf16.xpose.msra.mxu0 0
        %1163 = vmatprep.subr.bf16.mxu0 0
        %1164 = vmatpush1.bf16.xpose.msra.mxu0 0
        %1165 = vmatprep.subr.bf16.mxu0 0
        %1166 = vmatpush1.bf16.xpose.msra.mxu0 0
        %1167 = vmatprep.subr.bf16.mxu0 0
        %1168 = vmatpush1.bf16.xpose.msra.mxu0 0
        %1169 = vmatprep.subr.bf16.mxu0 0
        %1170 = vmatpush1.bf16.xpose.msra.mxu0 0
        %1171 = vmatprep.subr.bf16.mxu0 0
        %1172 = vmatpush1.bf16.xpose.msra.mxu0 0
        %1173 = vmatprep.subr.bf16.mxu0 0
        %1174 = vmatpush1.bf16.xpose.msra.mxu0 0
        %1175 = vmatprep.subr.bf16.mxu0 0
        %1176 = vmatpush1.bf16.xpose.msra.mxu0 0
        %1177 = vmatprep.subr.bf16.mxu0 0
        %1178 = vmatpush1.bf16.xpose.msra.mxu0 0
        %1179 = vmatprep.subr.bf16.mxu0 0
        %1180 = vmatpush1.bf16.xpose.msra.mxu0 0
        %1181 = vmatprep.mubr.bf16.mxu0 0
        %1182 = vmatmul.mubr.bf16.gmra.mrb[0].mxu0 %v1144
        %v1183 = vpop.f32.mrb[0].mxu0
        %v1184 = vadd.f32 0.0, %v1183
        %v1185 = vpop.f32.mrb[0].mxu0
        %v1186 = vpop.f32.mrb[0].mxu0
        %v1187 = vpop.f32.mrb[0].mxu0
        %1188 = vdwg.mxu0
        %v1189 = vsel %vm680, %v1184, -1e+30
        %v1190 = vsel %vm741, %v1189, -inf
        %1191 = vmax.xlane.f32.xlu0 %v1190
        %v1192 = vpop.xlane.xlu0 %1191
        %v1193 = vsub.f32 %v1189, %v1192
        %v1194 = vmul.f32 %v1193, 1.442695
        %v1195 = vpow.pop %v1194
        %v1196 = vsel %vm741, %v1195, 0.0
        %1197 = vadd.xlane.f32.xlu0 %v1196
        %v1198 = vpop.xlane.xlu0 %1197
        %v1199 = vrcp.pop %v1198
        %v1200 = vmul.f32 %v1195, %v1199
        %v1201 = vpack.c.bf16 %v1200, %v1200
        %1202 = vrot.lane.b32.xlu0 %v744, 16
        %v1203 = vpop.permute.xlu0 %1202
        %v1205 = vsel %vm741, %v1201, 0
        %v1208 = vsel %vm848, %v1203, 0
        %1210 = vmatprep.subr.bf16.mxu0 0
        %1211 = vmatpush1.bf16.msra.mxu0 %v1208
        %1212 = vmatprep.subr.bf16.mxu0 0
        %1213 = vmatpush1.bf16.msra.mxu0 0
        %1214 = vmatprep.subr.bf16.mxu0 0
        %1215 = vmatpush1.bf16.msra.mxu0 0
        %1216 = vmatprep.subr.bf16.mxu0 0
        %1217 = vmatpush1.bf16.msra.mxu0 0
        %1218 = vmatprep.subr.bf16.mxu0 0
        %1219 = vmatpush1.bf16.msra.mxu0 0
        %1220 = vmatprep.subr.bf16.mxu0 0
        %1221 = vmatpush1.bf16.msra.mxu0 0
        %1222 = vmatprep.subr.bf16.mxu0 0
        %1223 = vmatpush1.bf16.msra.mxu0 0
        %1224 = vmatprep.subr.bf16.mxu0 0
        %1225 = vmatpush1.bf16.msra.mxu0 0
        %1226 = vmatprep.subr.bf16.mxu0 0
        %1227 = vmatpush1.bf16.msra.mxu0 0
        %1228 = vmatprep.subr.bf16.mxu0 0
        %1229 = vmatpush1.bf16.msra.mxu0 0
        %1230 = vmatprep.subr.bf16.mxu0 0
        %1231 = vmatpush1.bf16.msra.mxu0 0
        %1232 = vmatprep.subr.bf16.mxu0 0
        %1233 = vmatpush1.bf16.msra.mxu0 0
        %1234 = vmatprep.subr.bf16.mxu0 0
        %1235 = vmatpush1.bf16.msra.mxu0 0
        %1236 = vmatprep.subr.bf16.mxu0 0
        %1237 = vmatpush1.bf16.msra.mxu0 0
        %1238 = vmatprep.subr.bf16.mxu0 0
        %1239 = vmatpush1.bf16.msra.mxu0 0
        %1240 = vmatprep.subr.bf16.mxu0 0
        %1241 = vmatpush1.bf16.msra.mxu0 0
        %1242 = vmatprep.mubr.bf16.mxu0 0
        %1243 = vmatmul.mubr.bf16.gmra.mrb[0].mxu0 %v1205
        %v1244 = vpop.f32.mrb[0].mxu0
        %v1245 = vadd.f32 0.0, %v1244
        %v1246 = vpop.f32.mrb[0].mxu0
        %v1247 = vpop.f32.mrb[0].mxu0
        %v1248 = vpop.f32.mrb[0].mxu0
        %1249 = vdwg.mxu0
        %1250 = vrot.lane.b32.xlu0 %v681, 80
        %v1251 = vpop.permute.xlu0 %1250
        %v1253 = vsel %vm686, %v1251, 0.0
        %1254 = vadd.xlane.f32.xlu0 %v1253
        %v1255 = vpop.xlane.xlu0 %1254
        %v1256 = vmul.f32 %v1255, %v690
        %v1257 = vadd.f32 %v1256, 1e-06
        %v1258 = vrsqrt.pop %v1257
        %v1259 = vmul.f32 %v663, %v1258
        %1260 = vrot.lane.b32.xlu0 %v757, 48
        %v1261 = vpop.permute.xlu0 %1260
        %v1263 = vmul.f32 %v1259, %v1261
        %v1264 = vmul.f32 %v1263, 0.25
        %1265 = vrot.lane.b32.xlu0 %v534, 48
        %v1266 = vpop.permute.xlu0 %1265
        %v1268 = vmul.f32 %v1264, %v1266
        %1269 = vrot.lane.b32.xlu0 %v535, 56
        %v1270 = vpop.permute.xlu0 %1269
        %v1272 = vmul.f32 %v1264, %v1270
        %1274 = vrot.lane.b32.xlu0 %v1272, 120
        %v1275 = vpop.permute.xlu0 %1274
        %v1277 = vsub.f32 %v1268, %v1275
        %1278 = vrot.lane.b32.xlu0 %v534, 56
        %v1279 = vpop.permute.xlu0 %1278
        %v1281 = vmul.f32 %v1264, %v1279
        %1282 = vrot.lane.b32.xlu0 %v535, 48
        %v1283 = vpop.permute.xlu0 %1282
        %v1285 = vmul.f32 %v1264, %v1283
        %1287 = vrot.lane.b32.xlu0 %v1285, 8
        %v1288 = vpop.permute.xlu0 %1287
        %v1290 = vadd.f32 %v1281, %v1288
        %1292 = vrot.lane.b32.xlu0 %v1277, 80
        %v1293 = vpop.permute.xlu0 %1292
        %1296 = vrot.lane.b32.xlu0 %v1290, 80
        %v1297 = vpop.permute.xlu0 %1296
        %v1299 = vsel %vm741, %v1293, %v1297
        %v1300 = vpack.c.bf16 %v1299, %v1299
        %v1302 = vsel %vm686, %v1300, 0
        %1304 = vmatprep.subr.bf16.mxu0 0
        %1305 = vmatpush1.bf16.xpose.msra.mxu0 %v1147
        %1306 = vmatprep.subr.bf16.mxu0 0
        %1307 = vmatpush1.bf16.xpose.msra.mxu0 0
        %1308 = vmatprep.subr.bf16.mxu0 0
        %1309 = vmatpush1.bf16.xpose.msra.mxu0 0
        %1310 = vmatprep.subr.bf16.mxu0 0
        %1311 = vmatpush1.bf16.xpose.msra.mxu0 0
        %1312 = vmatprep.subr.bf16.mxu0 0
        %1313 = vmatpush1.bf16.xpose.msra.mxu0 0
        %1314 = vmatprep.subr.bf16.mxu0 0
        %1315 = vmatpush1.bf16.xpose.msra.mxu0 0
        %1316 = vmatprep.subr.bf16.mxu0 0
        %1317 = vmatpush1.bf16.xpose.msra.mxu0 0
        %1318 = vmatprep.subr.bf16.mxu0 0
        %1319 = vmatpush1.bf16.xpose.msra.mxu0 0
        %1320 = vmatprep.subr.bf16.mxu0 0
        %1321 = vmatpush1.bf16.xpose.msra.mxu0 0
        %1322 = vmatprep.subr.bf16.mxu0 0
        %1323 = vmatpush1.bf16.xpose.msra.mxu0 0
        %1324 = vmatprep.subr.bf16.mxu0 0
        %1325 = vmatpush1.bf16.xpose.msra.mxu0 0
        %1326 = vmatprep.subr.bf16.mxu0 0
        %1327 = vmatpush1.bf16.xpose.msra.mxu0 0
        %1328 = vmatprep.subr.bf16.mxu0 0
        %1329 = vmatpush1.bf16.xpose.msra.mxu0 0
        %1330 = vmatprep.subr.bf16.mxu0 0
        %1331 = vmatpush1.bf16.xpose.msra.mxu0 0
        %1332 = vmatprep.subr.bf16.mxu0 0
        %1333 = vmatpush1.bf16.xpose.msra.mxu0 0
        %1334 = vmatprep.subr.bf16.mxu0 0
        %1335 = vmatpush1.bf16.xpose.msra.mxu0 0
        %1336 = vmatprep.mubr.bf16.mxu0 0
        %1337 = vmatmul.mubr.bf16.gmra.mrb[0].mxu0 %v1302
        %v1338 = vpop.f32.mrb[0].mxu0
        %v1339 = vadd.f32 0.0, %v1338
        %v1340 = vpop.f32.mrb[0].mxu0
        %v1341 = vpop.f32.mrb[0].mxu0
        %v1342 = vpop.f32.mrb[0].mxu0
        %1343 = vdwg.mxu0
        %v1344 = vsel %vm680, %v1339, -1e+30
        %v1345 = vsel %vm741, %v1344, -inf
        %1346 = vmax.xlane.f32.xlu0 %v1345
        %v1347 = vpop.xlane.xlu0 %1346
        %v1348 = vsub.f32 %v1344, %v1347
        %v1349 = vmul.f32 %v1348, 1.442695
        %v1350 = vpow.pop %v1349
        %v1351 = vsel %vm741, %v1350, 0.0
        %1352 = vadd.xlane.f32.xlu0 %v1351
        %v1353 = vpop.xlane.xlu0 %1352
        %v1354 = vrcp.pop %v1353
        %v1355 = vmul.f32 %v1350, %v1354
        %v1356 = vpack.c.bf16 %v1355, %v1355
        %v1358 = vsel %vm741, %v1356, 0
        %1360 = vmatprep.subr.bf16.mxu0 0
        %1361 = vmatpush1.bf16.msra.mxu0 %v1208
        %1362 = vmatprep.subr.bf16.mxu0 0
        %1363 = vmatpush1.bf16.msra.mxu0 0
        %1364 = vmatprep.subr.bf16.mxu0 0
        %1365 = vmatpush1.bf16.msra.mxu0 0
        %1366 = vmatprep.subr.bf16.mxu0 0
        %1367 = vmatpush1.bf16.msra.mxu0 0
        %1368 = vmatprep.subr.bf16.mxu0 0
        %1369 = vmatpush1.bf16.msra.mxu0 0
        %1370 = vmatprep.subr.bf16.mxu0 0
        %1371 = vmatpush1.bf16.msra.mxu0 0
        %1372 = vmatprep.subr.bf16.mxu0 0
        %1373 = vmatpush1.bf16.msra.mxu0 0
        %1374 = vmatprep.subr.bf16.mxu0 0
        %1375 = vmatpush1.bf16.msra.mxu0 0
        %1376 = vmatprep.subr.bf16.mxu0 0
        %1377 = vmatpush1.bf16.msra.mxu0 0
        %1378 = vmatprep.subr.bf16.mxu0 0
        %1379 = vmatpush1.bf16.msra.mxu0 0
        %1380 = vmatprep.subr.bf16.mxu0 0
        %1381 = vmatpush1.bf16.msra.mxu0 0
        %1382 = vmatprep.subr.bf16.mxu0 0
        %1383 = vmatpush1.bf16.msra.mxu0 0
        %1384 = vmatprep.subr.bf16.mxu0 0
        %1385 = vmatpush1.bf16.msra.mxu0 0
        %1386 = vmatprep.subr.bf16.mxu0 0
        %1387 = vmatpush1.bf16.msra.mxu0 0
        %1388 = vmatprep.subr.bf16.mxu0 0
        %1389 = vmatpush1.bf16.msra.mxu0 0
        %1390 = vmatprep.subr.bf16.mxu0 0
        %1391 = vmatpush1.bf16.msra.mxu0 0
        %1392 = vmatprep.mubr.bf16.mxu0 0
        %1393 = vmatmul.mubr.bf16.gmra.mrb[0].mxu0 %v1358
        %v1394 = vpop.f32.mrb[0].mxu0
        %v1395 = vadd.f32 0.0, %v1394
        %v1396 = vpop.f32.mrb[0].mxu0
        %v1397 = vpop.f32.mrb[0].mxu0
        %v1398 = vpop.f32.mrb[0].mxu0
        %1399 = vdwg.mxu0
        %1401 = vrot.lane.b32.xlu0 %v1037, 16
        %v1402 = vpop.permute.xlu0 %1401
        %1405 = vrot.lane.b32.xlu0 %v1245, 32
        %v1406 = vpop.permute.xlu0 %1405
        %1409 = vrot.lane.b32.xlu0 %v1395, 48
        %v1410 = vpop.permute.xlu0 %1409
        %v1412 = vsel %vm686, %v887, %v1402
        %vm1413 = vcmask 261120
        %v1414 = vsel %vm1413, %v1412, %v1406
        %vm1415 = vcmask 392192
        %v1416 = vsel %vm1415, %v1414, %v1410
        %v1417 = vpack.c.bf16 %v1416, %v1416
        %v1426 = vunpack.c.l.b16 %v547
        %v1427 = vunpack.c.l.b16 %v548
        %v1428 = vunpack.c.l.b16 %v549
        %v1429 = vunpack.c.l.b16 %v550
        %v1430 = vunpack.c.l.b16 %v551
        %v1431 = vunpack.c.l.b16 %v552
        %v1432 = vunpack.c.l.b16 %v553
        %v1433 = vunpack.c.l.b16 %v554
        %v1434 = vpack.c.b16 %v1427, %v1426
        %v1435 = vpack.c.b16 %v1429, %v1428
        %v1436 = vpack.c.b16 %v1431, %v1430
        %v1437 = vpack.c.b16 %v1433, %v1432
        %v1443 = vsel %vm583, %v1417, 0
        %1445 = vmatprep.subr.bf16.mxu0 0
        %1446 = vmatpush1.bf16.msra.mxu0 %v1434
        %1447 = vmatprep.subr.bf16.mxu0 0
        %1448 = vmatpush1.bf16.msra.mxu0 %v1435
        %1449 = vmatprep.subr.bf16.mxu0 0
        %1450 = vmatpush1.bf16.msra.mxu0 %v1436
        %1451 = vmatprep.subr.bf16.mxu0 0
        %1452 = vmatpush1.bf16.msra.mxu0 %v1437
        %1453 = vmatprep.subr.bf16.mxu0 0
        %1454 = vmatpush1.bf16.msra.mxu0 0
        %1455 = vmatprep.subr.bf16.mxu0 0
        %1456 = vmatpush1.bf16.msra.mxu0 0
        %1457 = vmatprep.subr.bf16.mxu0 0
        %1458 = vmatpush1.bf16.msra.mxu0 0
        %1459 = vmatprep.subr.bf16.mxu0 0
        %1460 = vmatpush1.bf16.msra.mxu0 0
        %1461 = vmatprep.subr.bf16.mxu0 0
        %1462 = vmatpush1.bf16.msra.mxu0 0
        %1463 = vmatprep.subr.bf16.mxu0 0
        %1464 = vmatpush1.bf16.msra.mxu0 0
        %1465 = vmatprep.subr.bf16.mxu0 0
        %1466 = vmatpush1.bf16.msra.mxu0 0
        %1467 = vmatprep.subr.bf16.mxu0 0
        %1468 = vmatpush1.bf16.msra.mxu0 0
        %1469 = vmatprep.subr.bf16.mxu0 0
        %1470 = vmatpush1.bf16.msra.mxu0 0
        %1471 = vmatprep.subr.bf16.mxu0 0
        %1472 = vmatpush1.bf16.msra.mxu0 0
        %1473 = vmatprep.subr.bf16.mxu0 0
        %1474 = vmatpush1.bf16.msra.mxu0 0
        %1475 = vmatprep.subr.bf16.mxu0 0
        %1476 = vmatpush1.bf16.msra.mxu0 0
        %1477 = vmatprep.mubr.bf16.mxu0 0
        %1478 = vmatmul.mubr.bf16.gmra.mrb[0].mxu0 %v1443
        %v1479 = vpop.f32.mrb[0].mxu0
        %v1480 = vadd.f32 0.0, %v1479
        %v1481 = vpop.f32.mrb[0].mxu0
        %v1482 = vpop.f32.mrb[0].mxu0
        %v1483 = vpop.f32.mrb[0].mxu0
        %1484 = vdwg.mxu0
        %v1485 = vmul.f32 %v1480, %v1480
        %v1486 = vsel %vm583, %v1485, 0.0
        %1487 = vadd.xlane.f32.xlu0 %v1486
        %v1488 = vpop.xlane.xlu0 %1487
        %v1489 = vmul.f32 %v1488, %v587
        %v1490 = vadd.f32 %v1489, 1e-06
        %v1491 = vrsqrt.pop %v1490
        %v1492 = vmul.f32 %v1480, %v1491
        %v1493 = vadd.f32 %v555, 1.0
        %v1495 = vlaneseq
        %v1496 = vshrl.u32 %v1495, 7
        %v1497 = vsub.s32 0, %v1496
        %v1498 = vrot.slane %v1493, %v1497
        %v1500 = vmul.f32 %v1492, %v1498
        %v1501 = vadd.f32 %v532, %v1500
        %v1502 = vmul.f32 %v1501, %v1501
        %v1503 = vsel %vm583, %v1502, 0.0
        %1504 = vadd.xlane.f32.xlu0 %v1503
        %v1505 = vpop.xlane.xlu0 %1504
        %v1506 = vmul.f32 %v1505, %v587
        %v1507 = vadd.f32 %v1506, 1e-06
        %v1508 = vrsqrt.pop %v1507
        %v1509 = vmul.f32 %v1501, %v1508
        %v1510 = vadd.f32 %v556, 1.0
        %v1512 = vlaneseq
        %v1513 = vshrl.u32 %v1512, 7
        %v1514 = vsub.s32 0, %v1513
        %v1515 = vrot.slane %v1510, %v1514
        %v1517 = vmul.f32 %v1509, %v1515
        %v1518 = vpack.c.bf16 %v1517, %v1517
        %v1527 = vunpack.c.l.b16 %v557
        %v1528 = vunpack.c.h.b16 %v557
        %v1529 = vunpack.c.l.b16 %v558
        %v1530 = vunpack.c.h.b16 %v558
        %v1531 = vunpack.c.l.b16 %v559
        %v1532 = vunpack.c.h.b16 %v559
        %v1533 = vunpack.c.l.b16 %v560
        %v1534 = vunpack.c.h.b16 %v560
        %v1535 = vunpack.c.l.b16 %v561
        %v1536 = vunpack.c.h.b16 %v561
        %v1537 = vunpack.c.l.b16 %v562
        %v1538 = vunpack.c.h.b16 %v562
        %v1539 = vunpack.c.l.b16 %v563
        %v1540 = vunpack.c.h.b16 %v563
        %v1541 = vunpack.c.l.b16 %v564
        %v1542 = vunpack.c.h.b16 %v564
        %v1543 = vpack.c.b16 %v1529, %v1527
        %v1544 = vpack.c.b16 %v1530, %v1528
        %v1545 = vpack.c.b16 %v1533, %v1531
        %v1546 = vpack.c.b16 %v1534, %v1532
        %v1547 = vpack.c.b16 %v1537, %v1535
        %v1548 = vpack.c.b16 %v1538, %v1536
        %v1549 = vpack.c.b16 %v1541, %v1539
        %v1550 = vpack.c.b16 %v1542, %v1540
        %v1560 = vsel %vm583, %v1518, 0
        %1562 = vmatprep.subr.bf16.mxu0 %v1544
        %1563 = vmatpush1.bf16.msra.mxu0 %v1543
        %1564 = vmatprep.subr.bf16.mxu0 %v1546
        %1565 = vmatpush1.bf16.msra.mxu0 %v1545
        %1566 = vmatprep.subr.bf16.mxu0 %v1548
        %1567 = vmatpush1.bf16.msra.mxu0 %v1547
        %1568 = vmatprep.subr.bf16.mxu0 %v1550
        %1569 = vmatpush1.bf16.msra.mxu0 %v1549
        %1570 = vmatprep.subr.bf16.mxu0 0
        %1571 = vmatpush1.bf16.msra.mxu0 0
        %1572 = vmatprep.subr.bf16.mxu0 0
        %1573 = vmatpush1.bf16.msra.mxu0 0
        %1574 = vmatprep.subr.bf16.mxu0 0
        %1575 = vmatpush1.bf16.msra.mxu0 0
        %1576 = vmatprep.subr.bf16.mxu0 0
        %1577 = vmatpush1.bf16.msra.mxu0 0
        %1578 = vmatprep.subr.bf16.mxu0 0
        %1579 = vmatpush1.bf16.msra.mxu0 0
        %1580 = vmatprep.subr.bf16.mxu0 0
        %1581 = vmatpush1.bf16.msra.mxu0 0
        %1582 = vmatprep.subr.bf16.mxu0 0
        %1583 = vmatpush1.bf16.msra.mxu0 0
        %1584 = vmatprep.subr.bf16.mxu0 0
        %1585 = vmatpush1.bf16.msra.mxu0 0
        %1586 = vmatprep.subr.bf16.mxu0 0
        %1587 = vmatpush1.bf16.msra.mxu0 0
        %1588 = vmatprep.subr.bf16.mxu0 0
        %1589 = vmatpush1.bf16.msra.mxu0 0
        %1590 = vmatprep.subr.bf16.mxu0 0
        %1591 = vmatpush1.bf16.msra.mxu0 0
        %1592 = vmatprep.subr.bf16.mxu0 0
        %1593 = vmatpush1.bf16.msra.mxu0 0
        %1594 = vmatprep.mubr.bf16.mxu0 0
        %1595 = vmatmul.mubr.bf16.gmra.mrb[0].mxu0 %v1560
        %v1596 = vpop.f32.mrb[0].mxu0
        %v1597 = vadd.f32 0.0, %v1596
        %v1598 = vpop.f32.mrb[0].mxu0
        %v1599 = vadd.f32 0.0, %v1598
        %v1600 = vpop.f32.mrb[0].mxu0
        %v1601 = vpop.f32.mrb[0].mxu0
        %1602 = vdwg.mxu0
        %v1603 = vmul.f32 %v1597, %v1597
        %v1604 = vmul.f32 %v1597, %v1603
        %v1605 = vmul.f32 %v1604, 0.044715
        %v1606 = vadd.f32 %v1597, %v1605
        %v1607 = vmul.f32 %v1606, 0.7978846
        %v1608 = vtanh.pop %v1607
        %v1609 = vadd.f32 %v1608, 1.0
        %v1610 = vmul.f32 %v1609, 0.5
        %v1611 = vmul.f32 %v1597, %v1610
        %v1612 = vmul.f32 %v1611, %v1599
        %v1613 = vpack.c.bf16 %v1612, %v1612
        %v1630 = vunpack.c.l.b16 %v565
        %v1631 = vunpack.c.l.b16 %v566
        %v1632 = vunpack.c.l.b16 %v567
        %v1633 = vunpack.c.l.b16 %v568
        %v1634 = vunpack.c.l.b16 %v569
        %v1635 = vunpack.c.l.b16 %v570
        %v1636 = vunpack.c.l.b16 %v571
        %v1637 = vunpack.c.l.b16 %v572
        %v1638 = vunpack.c.l.b16 %v573
        %v1639 = vunpack.c.l.b16 %v574
        %v1640 = vunpack.c.l.b16 %v575
        %v1641 = vunpack.c.l.b16 %v576
        %v1642 = vunpack.c.l.b16 %v577
        %v1643 = vunpack.c.l.b16 %v578
        %v1644 = vunpack.c.l.b16 %v579
        %v1645 = vunpack.c.l.b16 %v580
        %v1646 = vpack.c.b16 %v1631, %v1630
        %v1647 = vpack.c.b16 %v1633, %v1632
        %v1648 = vpack.c.b16 %v1635, %v1634
        %v1649 = vpack.c.b16 %v1637, %v1636
        %v1650 = vpack.c.b16 %v1639, %v1638
        %v1651 = vpack.c.b16 %v1641, %v1640
        %v1652 = vpack.c.b16 %v1643, %v1642
        %v1653 = vpack.c.b16 %v1645, %v1644
        %1662 = vmatprep.subr.bf16.mxu0 0
        %1663 = vmatpush1.bf16.msra.mxu0 %v1646
        %1664 = vmatprep.subr.bf16.mxu0 0
        %1665 = vmatpush1.bf16.msra.mxu0 %v1647
        %1666 = vmatprep.subr.bf16.mxu0 0
        %1667 = vmatpush1.bf16.msra.mxu0 %v1648
        %1668 = vmatprep.subr.bf16.mxu0 0
        %1669 = vmatpush1.bf16.msra.mxu0 %v1649
        %1670 = vmatprep.subr.bf16.mxu0 0
        %1671 = vmatpush1.bf16.msra.mxu0 %v1650
        %1672 = vmatprep.subr.bf16.mxu0 0
        %1673 = vmatpush1.bf16.msra.mxu0 %v1651
        %1674 = vmatprep.subr.bf16.mxu0 0
        %1675 = vmatpush1.bf16.msra.mxu0 %v1652
        %1676 = vmatprep.subr.bf16.mxu0 0
        %1677 = vmatpush1.bf16.msra.mxu0 %v1653
        %1678 = vmatprep.subr.bf16.mxu0 0
        %1679 = vmatpush1.bf16.msra.mxu0 0
        %1680 = vmatprep.subr.bf16.mxu0 0
        %1681 = vmatpush1.bf16.msra.mxu0 0
        %1682 = vmatprep.subr.bf16.mxu0 0
        %1683 = vmatpush1.bf16.msra.mxu0 0
        %1684 = vmatprep.subr.bf16.mxu0 0
        %1685 = vmatpush1.bf16.msra.mxu0 0
        %1686 = vmatprep.subr.bf16.mxu0 0
        %1687 = vmatpush1.bf16.msra.mxu0 0
        %1688 = vmatprep.subr.bf16.mxu0 0
        %1689 = vmatpush1.bf16.msra.mxu0 0
        %1690 = vmatprep.subr.bf16.mxu0 0
        %1691 = vmatpush1.bf16.msra.mxu0 0
        %1692 = vmatprep.subr.bf16.mxu0 0
        %1693 = vmatpush1.bf16.msra.mxu0 0
        %1694 = vmatprep.mubr.bf16.mxu0 0
        %1695 = vmatmul.mubr.bf16.gmra.mrb[0].mxu0 %v1613
        %v1696 = vpop.f32.mrb[0].mxu0
        %v1697 = vadd.f32 0.0, %v1696
        %v1698 = vpop.f32.mrb[0].mxu0
        %v1699 = vpop.f32.mrb[0].mxu0
        %v1700 = vpop.f32.mrb[0].mxu0
        %1701 = vdwg.mxu0
        %v1702 = vmul.f32 %v1697, %v1697
        %v1703 = vsel %vm583, %v1702, 0.0
        %1704 = vadd.xlane.f32.xlu0 %v1703
        %v1705 = vpop.xlane.xlu0 %1704
        %v1706 = vmul.f32 %v1705, %v587
        %v1707 = vadd.f32 %v1706, 1e-06
        %v1708 = vrsqrt.pop %v1707
        %v1709 = vmul.f32 %v1697, %v1708
        %v1710 = vadd.f32 %v581, 1.0
        %v1712 = vlaneseq
        %v1713 = vshrl.u32 %v1712, 7
        %v1714 = vsub.s32 0, %v1713
        %v1715 = vrot.slane %v1710, %v1714
        %v1717 = vmul.f32 %v1709, %v1715
        %v1718 = vadd.f32 %v1501, %v1717
        %v1719 = vld [vmem:[%s14] sm:$0x1]
        %v1720 = vmul.f32 %v1718, %v1718
        %v1721 = vsel %vm583, %v1720, 0.0
        %1722 = vadd.xlane.f32.xlu0 %v1721
        %v1723 = vpop.xlane.xlu0 %1722
        %v1724 = vmul.f32 %v1723, %v587
        %v1725 = vadd.f32 %v1724, 1e-06
        %v1726 = vrsqrt.pop %v1725
        %v1727 = vmul.f32 %v1718, %v1726
        %v1728 = vadd.f32 %v1719, 1.0
        %v1730 = vlaneseq
        %v1731 = vshrl.u32 %v1730, 7
        %v1732 = vsub.s32 0, %v1731
        %v1733 = vrot.slane %v1728, %v1732
        %v1735 = vmul.f32 %v1727, %v1733
        %v1736 = vpack.c.bf16 %v1735, %v1735
        %v1737 = vld [vmem:[%s15] sm:$0x1]
        %v1738 = vpack.c.bf16 %v1737, %v1737
        %v1740 = vsel %vm583, %v1738, 0
        %v1743 = vsel %vm583, %v1736, 0
        %1745 = vmatprep.subr.bf16.mxu0 0
        %1746 = vmatpush1.bf16.xpose.msra.mxu0 %v1743
        %1747 = vmatprep.subr.bf16.mxu0 0
        %1748 = vmatpush1.bf16.xpose.msra.mxu0 0
        %1749 = vmatprep.subr.bf16.mxu0 0
        %1750 = vmatpush1.bf16.xpose.msra.mxu0 0
        %1751 = vmatprep.subr.bf16.mxu0 0
        %1752 = vmatpush1.bf16.xpose.msra.mxu0 0
        %1753 = vmatprep.subr.bf16.mxu0 0
        %1754 = vmatpush1.bf16.xpose.msra.mxu0 0
        %1755 = vmatprep.subr.bf16.mxu0 0
        %1756 = vmatpush1.bf16.xpose.msra.mxu0 0
        %1757 = vmatprep.subr.bf16.mxu0 0
        %1758 = vmatpush1.bf16.xpose.msra.mxu0 0
        %1759 = vmatprep.subr.bf16.mxu0 0
        %1760 = vmatpush1.bf16.xpose.msra.mxu0 0
        %1761 = vmatprep.subr.bf16.mxu0 0
        %1762 = vmatpush1.bf16.xpose.msra.mxu0 0
        %1763 = vmatprep.subr.bf16.mxu0 0
        %1764 = vmatpush1.bf16.xpose.msra.mxu0 0
        %1765 = vmatprep.subr.bf16.mxu0 0
        %1766 = vmatpush1.bf16.xpose.msra.mxu0 0
        %1767 = vmatprep.subr.bf16.mxu0 0
        %1768 = vmatpush1.bf16.xpose.msra.mxu0 0
        %1769 = vmatprep.subr.bf16.mxu0 0
        %1770 = vmatpush1.bf16.xpose.msra.mxu0 0
        %1771 = vmatprep.subr.bf16.mxu0 0
        %1772 = vmatpush1.bf16.xpose.msra.mxu0 0
        %1773 = vmatprep.subr.bf16.mxu0 0
        %1774 = vmatpush1.bf16.xpose.msra.mxu0 0
        %1775 = vmatprep.subr.bf16.mxu0 0
        %1776 = vmatpush1.bf16.xpose.msra.mxu0 0
        %1777 = vmatprep.mubr.bf16.mxu0 0
        %1778 = vmatmul.mubr.bf16.gmra.mrb[0].mxu0 %v1740
        %v1779 = vpop.f32.mrb[0].mxu0
        %v1780 = vadd.f32 0.0, %v1779
        %v1781 = vpop.f32.mrb[0].mxu0
        %v1782 = vpop.f32.mrb[0].mxu0
        %v1783 = vpop.f32.mrb[0].mxu0
        %1784 = vdwg.mxu0
        %vm1785 = vcmask 57344
        %1786 = vst.msk [vmem:[%s522] sm:$0x1] %vm1785, %v1780
        %s1787 = sand.u32 %s384, 1
        %s1788 = scalar_lea.sflag [#allocation3], %s1787
        %s1789 = sand.u32 %s384, 1
        %s1790 = scalar_lea.vmem [#allocation2], %s1789
        // Predicated region
        $region85: #{forward.3} parent=83 // pred_check
          %p1791 = pneg %p394
        $region86: #{forward.3} parent=83 // pred_check_branch
          %1793 = sbr.rel (%p1791) target = $region88
        $region87: #{forward.3} parent=83 // pred_region
          %s1795 = ssub.s32 16, 16
          %1796 = vsyncadd %s1788, %s1795
          %s1797 = smul.addr %s30, 16
          %s1798 = scalar_lea.hbm %s16, %s1797
          %s1800 = sshll.u32 %s1790, 4
          %s1801 = int_to_ptr.vmem [resolvable:$true] %s1800
          %1803 = dma.vmem_to_hbm [thread:$0]  %s1801, 16, %s1798, %s1788
        $region88: #{forward.3} parent=83 // pred_fallthru
          _
      $region84: #{forward.3} parent=5 // pred_fallthru
        _
      %p1804 = scmp.le.s32.totalorder 2, %s25
      // Predicated region
      $region89: #{forward.3} parent=5 // pred_check
        %p1805 = pneg %p1804
      $region90: #{forward.3} parent=5 // pred_check_branch
        %1807 = sbr.rel (%p1805) target = $region92
      $region91: #{forward.3} parent=5 // pred_region
        %s1808 = ssub.s32 %s25, 2
        // Predicated region
        $region93: #{forward.3} parent=91 // pred_check
          %p1809 = pneg %p400
        $region94: #{forward.3} parent=91 // pred_check_branch
          %1811 = sbr.rel (%p1809) target = $region96
        $region95: #{forward.3} parent=91 // pred_region
          %s1812 = sand.u32 %s385, 1
          %s1813 = scalar_lea.sflag [#allocation3], %s1812
          %s1814 = sand.u32 %s385, 1
          %s1815 = scalar_lea.vmem [#allocation2], %s1814
          %1816 = dma.done %s1813, 16
        $region96: #{forward.3} parent=91 // pred_fallthru
          _
      $region92: #{forward.3} parent=5 // pred_fallthru
        _
    $region6: #{forward.3} parent=1 // loop_footer
      %s29 = sadd.s32 1, %s25
    $region7: #{forward.3} parent=1 // loop_footer_branch
      %24 = sbr.rel target = $region3
    $region8: #{forward.3} parent=1 // loop_exit
      _
    %1817 = vsyncpa [#allocation3], 1
    %s1818 = scalar_lea.sflag [#allocation3], 1
    %1819 = vsyncpa %s1818, 1

</llo_original>
